<compile_context>
chip_gen: v6e
topology: v6e:2x2x1
jax: 0.10.0
libtpu: 0.0.40
codegen_flags: <defaults>
</compile_context>

<pallas_src>
import math
from functools import partial

import jax
import jax.numpy as jnp
from jax.experimental import pallas as pl
from jax.experimental.pallas import tpu as pltpu

# hyper-parameters mirroring the PyTorch module
BLOCK_SIZE = 128     # max_len of positional encoding
N_EMBD = 128
N_HEAD = 4
N_LAYER = 1          # single encoder layer
VOCAB_SIZE = 32000
DIM_FF = 256
LN_EPS = 1e-5

# packed f32 constants row: lane offsets (all multiples of 128)
_C_IN_B = 0                       # (3E,) in_proj bias (q third pre-scaled)
_C_B1 = 3 * N_EMBD                # (F,)  linear1 bias
_C_OP_B = _C_B1 + DIM_FF          # (E,)  out_proj bias
_C_LN1_G = _C_OP_B + N_EMBD
_C_LN1_B = _C_LN1_G + N_EMBD
_C_B2 = _C_LN1_B + N_EMBD
_C_LN2_G = _C_B2 + N_EMBD
_C_LN2_B = _C_LN2_G + N_EMBD
_C_OUT_W = _C_LN2_B + N_EMBD
_C_TOTAL = _C_OUT_W + N_EMBD      # 1536

# packed bf16 weight blob (128 rows): column offsets  [in_w | op_w | w1]
_W_IN = 0
_W_OP = 3 * N_EMBD                # 384
_W_W1 = 4 * N_EMBD                # 512
_W_TOTAL = 4 * N_EMBD + DIM_FF    # 768


def _layer_norm(x, g, b):
    mu = jnp.mean(x, axis=-1, keepdims=True)
    xc = x - mu
    var = jnp.mean(xc * xc, axis=-1, keepdims=True)
    inv = jax.lax.rsqrt(var + LN_EPS)
    return xc * inv * g + b


def _encoder_block_kernel(
    x_ref,       # (S, L, E) f32   S token slots, L (padded) user-batch rows
    pool_ref,    # (S, 1, 1) f32   pooling weight per slot
    wa_ref,      # (E, 768)  bf16  packed [in_proj.T | out_proj.T | w1.T]
    w2_ref,      # (F, E)    bf16  linear2.weight.T
    c_ref,       # (1, 1536) f32   packed biases / LN params / out_w
    o_ref,       # (L, 1)    f32   per-step pooled+projected contribution
    *, n_head, l_real,
):
    S, L, E = x_ref.shape
    hd = E // n_head
    M = S * L

    x3 = x_ref[...]                                    # (S, L, E) f32
    xf = x3.reshape(M, E)                              # tile-aligned (L % 8 == 0)
    xb = xf.astype(jnp.bfloat16)

    # ---- QKV projection: one matmul for all S*L rows ----
    qkv = jnp.dot(xb, wa_ref[:, _W_IN:_W_IN + 3 * E],
                  preferred_element_type=jnp.float32) \
        + c_ref[:, _C_IN_B:_C_IN_B + 3 * E]            # (M, 3E) f32
    qkv3 = qkv.reshape(S, L, 3 * E)

    # key bias only when the user batch was padded up to the sublane tile
    if l_real < L:
        col = jax.lax.broadcasted_iota(jnp.int32, (1, L), 1)
        key_bias = jnp.where(col < l_real, 0.0, -1e9)
    else:
        key_bias = None

    # ---- multi-head self-attention, slot axis batched (no per-slot loop) ----
    attn = None
    for h in range(n_head):
        lo = h * hd
        qh = qkv3[:, :, lo:lo + hd].astype(jnp.bfloat16)              # (S, L, hd)
        kh = qkv3[:, :, E + lo:E + lo + hd].astype(jnp.bfloat16)
        vh = qkv3[:, :, 2 * E + lo:2 * E + lo + hd].astype(jnp.bfloat16)

        s = jnp.einsum("sid,sjd->sij", qh, kh,
                       preferred_element_type=jnp.float32)            # (S, L, L)
        if key_bias is not None:
            s = s + key_bias
        m = jnp.max(s, axis=-1, keepdims=True)
        p = jnp.exp(s - m)
        p = p * pl.reciprocal(jnp.sum(p, axis=-1, keepdims=True), approx=True)
        oh = jnp.einsum("sij,sjd->sid", p.astype(jnp.bfloat16), vh,
                        preferred_element_type=jnp.float32)           # (S, L, hd)

        # out_proj fused per head: accumulate (M, hd) @ (hd, E) -- no scratch slab,
        # no 32-lane masked stores.
        term = jnp.dot(oh.reshape(M, hd).astype(jnp.bfloat16),
                       wa_ref[lo:lo + hd, _W_OP:_W_OP + E],
                       preferred_element_type=jnp.float32)
        attn = term if attn is None else attn + term
    attn = attn + c_ref[:, _C_OP_B:_C_OP_B + E]

    # ---- residual + post-LayerNorm 1 (f32) ----
    x1 = _layer_norm(xf + attn,
                     c_ref[:, _C_LN1_G:_C_LN1_G + E],
                     c_ref[:, _C_LN1_B:_C_LN1_B + E])

    # ---- feed-forward + residual + post-LayerNorm 2 ----
    h1 = jnp.dot(x1.astype(jnp.bfloat16), wa_ref[:, _W_W1:_W_W1 + DIM_FF],
                 preferred_element_type=jnp.float32) + c_ref[:, _C_B1:_C_B1 + DIM_FF]
    h1 = jnp.maximum(h1, 0.0)                                         # relu (f32)
    ff = jnp.dot(h1.astype(jnp.bfloat16), w2_ref[...],
                 preferred_element_type=jnp.float32) + c_ref[:, _C_B2:_C_B2 + E]
    x2 = _layer_norm(x1 + ff,
                     c_ref[:, _C_LN2_G:_C_LN2_G + E],
                     c_ref[:, _C_LN2_B:_C_LN2_B + E])

    # ---- pooling (Linear(T,1)) + output head (Linear(E,1)) contribution,
    #      reduced over this step's S slots on-chip ----
    contrib = jnp.sum(x2.reshape(S, L, E) * c_ref[:, _C_OUT_W:_C_OUT_W + E],
                      axis=-1, keepdims=True)                         # (S, L, 1)
    o_ref[...] = jnp.sum(contrib * pool_ref[...], axis=0)             # (L, 1)


def _choose_slots_per_step(n_slots, rows_per_slot, target_rows=256, max_rows=512):
    """Pick S | n_slots so that S*rows_per_slot targets 256-512 MXU rows.
    Picking the *smallest* S that reaches the target keeps >=2 parallel grid
    steps whenever possible (v7x megacore) while still filling the MXU."""
    divisors = [s for s in range(1, n_slots + 1) if n_slots % s == 0]
    fitting = [s for s in divisors if s * rows_per_slot <= max_rows] or [1]
    preferred = [s for s in fitting if s * rows_per_slot >= target_rows]
    return min(preferred) if preferred else max(fitting)


def make_positional_encoding(max_len, d_model):
    position = jnp.arange(max_len, dtype=jnp.float32)[:, None]
    div_term = jnp.exp(
        jnp.arange(0, d_model, 2, dtype=jnp.float32) * (-math.log(10000.0) / d_model)
    )
    pe = jnp.zeros((max_len, d_model), jnp.float32)
    pe = pe.at[:, 0::2].set(jnp.sin(position * div_term))
    pe = pe.at[:, 1::2].set(jnp.cos(position * div_term))
    return pe


def init_params(key, n_tokens):
    ks = jax.random.split(key, 13)

    def dense(k, shape, scale=0.02):
        return (scale * jax.random.normal(k, shape)).astype(jnp.float32)

    return dict(
        embedding=dense(ks[0], (VOCAB_SIZE, N_EMBD)),
        in_proj_w=dense(ks[1], (3 * N_EMBD, N_EMBD)),
        in_proj_b=dense(ks[2], (3 * N_EMBD,)),
        out_proj_w=dense(ks[3], (N_EMBD, N_EMBD)),
        out_proj_b=dense(ks[4], (N_EMBD,)),
        ln1_g=jnp.ones((N_EMBD,), jnp.float32),
        ln1_b=jnp.zeros((N_EMBD,), jnp.float32),
        w1=dense(ks[5], (DIM_FF, N_EMBD)),
        b1=dense(ks[6], (DIM_FF,)),
        w2=dense(ks[7], (N_EMBD, DIM_FF)),
        b2=dense(ks[8], (N_EMBD,)),
        ln2_g=jnp.ones((N_EMBD,), jnp.float32),
        ln2_b=jnp.zeros((N_EMBD,), jnp.float32),
        pool_w=dense(ks[9], (n_tokens,)),
        pool_b=dense(ks[10], (1,)),
        out_w=dense(ks[11], (N_EMBD,)),
        out_b=dense(ks[12], (1,)),
        pe=make_positional_encoding(BLOCK_SIZE, N_EMBD),
    )


def prepare_params(params):
    """One-time prep: transpose weights, fold 1/sqrt(hd) into the q projection,
    fold pooling/output biases into a constant, pack constants into one f32 row
    and the 128-row bf16 weights into one blob."""
    E = N_EMBD
    hd = E // N_HEAD
    scale = 1.0 / math.sqrt(hd)

    qkv_scale = jnp.concatenate(
        [jnp.full((E,), scale, jnp.float32), jnp.ones((2 * E,), jnp.float32)]
    )
    in_w = (params["in_proj_w"] * qkv_scale[:, None]).T       # (E, 3E), q cols scaled
    in_b = params["in_proj_b"] * qkv_scale                    # (3E,)
    out_w = params["out_w"]                                   # (E,)

    wa = jnp.concatenate(
        [in_w, params["out_proj_w"].T, params["w1"].T], axis=1
    ).astype(jnp.bfloat16)                                    # (E, 768)

    consts = jnp.concatenate([
        in_b,                                   # [0, 384)
        params["b1"],                           # [384, 640)
        params["out_proj_b"],                   # [640, 768)
        params["ln1_g"], params["ln1_b"],       # [768, 1024)
        params["b2"],                           # [1024, 1152)
        params["ln2_g"], params["ln2_b"],       # [1152, 1408)
        out_w,                                  # [1408, 1536)
    ])[None, :].astype(jnp.float32)
    assert consts.shape == (1, _C_TOTAL)
    assert wa.shape == (N_EMBD, _W_TOTAL)

    return dict(
        embedding=params["embedding"].astype(jnp.float32),
        pe=params["pe"].astype(jnp.float32),
        pool3=params["pool_w"].reshape(-1, 1, 1).astype(jnp.float32),   # (T, 1, 1)
        wa=wa,
        w2=params["w2"].T.astype(jnp.bfloat16),                         # (F, E)
        consts=consts,
        out_const=(params["pool_b"][0] * jnp.sum(out_w)
                   + params["out_b"][0]).astype(jnp.float32),           # scalar
    )


@jax.jit
def mat_att_encoder_forward(tokens, prep):
    B, T = tokens.shape            # B = user batch (PyTorch seq axis), T = n_tokens
    E = N_EMBD
    assert B <= BLOCK_SIZE, "positional encoding covers at most BLOCK_SIZE rows"

    # round the attention axis up to the sublane tile so in-kernel reshapes are
    # tile-aligned; padded rows are masked out of the softmax and sliced off here.
    L_pad = max(8, ((B + 7) // 8) * 8)

    # plain-JAX glue: embedding gather directly in token-major order (no separate
    # transpose pass over the activations) + positional encoding indexed by the
    # user-batch axis (seq-first PyTorch semantics).
    x_tok = prep["embedding"][tokens.T] + prep["pe"][:B][None, :, :]     # (T, B, E)
    if L_pad > B:
        x_tok = jnp.pad(x_tok, ((0, 0), (0, L_pad - B), (0, 0)))         # (T, L_pad, E)

    S = _choose_slots_per_step(T, L_pad)     # slots per grid step (S | T)
    G = T // S

    kernel = partial(_encoder_block_kernel, n_head=N_HEAD, l_real=B)

    partial_out = pl.pallas_call(
        kernel,
        out_shape=jax.ShapeDtypeStruct((G, L_pad, 1), jnp.float32),
        grid=(G,),
        in_specs=[
            pl.BlockSpec((S, L_pad, E), lambda g: (g, 0, 0)),            # x slot block
            pl.BlockSpec((S, 1, 1), lambda g: (g, 0, 0)),                # pool weights
            pl.BlockSpec((N_EMBD, _W_TOTAL), lambda g: (0, 0)),          # bf16 weight blob
            pl.BlockSpec((DIM_FF, N_EMBD), lambda g: (0, 0)),            # w2
            pl.BlockSpec((1, _C_TOTAL), lambda g: (0, 0)),               # packed f32 consts
        ],
        out_specs=pl.BlockSpec((None, L_pad, 1), lambda g: (g, 0, 0)),
        compiler_params=pltpu.CompilerParams(
            dimension_semantics=("parallel",),        # steps independent (v7x: 2 TCs)
            vmem_limit_bytes=32 * 1024 * 1024,        # safe on v5e/v6e/v7x
        ),
    )(x_tok, prep["pool3"], prep["wa"], prep["w2"], prep["consts"])

    # tiny final reduction over the G partial blocks + folded bias constant.
    out = jnp.sum(partial_out, axis=0)[:B] + prep["out_const"]           # (B, 1)
    return out


if __name__ == "__main__":
    key = jax.random.PRNGKey(0)
    pkey, dkey = jax.random.split(key)

    B, T = 2, 8                               # batch=2, n_tokens=8
    params = init_params(pkey, n_tokens=T)
    prep = prepare_params(params)
    tokens = jax.random.randint(dkey, (B, T), 0, VOCAB_SIZE, dtype=jnp.int32)

    out = mat_att_encoder_forward(tokens, prep)
    out = jax.block_until_ready(out)
    assert out.shape == (B, 1) and out.dtype == jnp.float32
    assert bool(jnp.isfinite(out).all())
    print("KERNEL_OK")
</pallas_src>

<mosaic_0001>
module attributes {stable_mosaic.version = 11 : i64} {
  func.func @_encoder_block_kernel(%arg0: i32, %arg1: memref<8x8x128xf32, #tpu.memory_space<vmem>>, %arg2: memref<8x1x1xf32, #tpu.memory_space<vmem>>, %arg3: memref<128x768xbf16, #tpu.memory_space<vmem>>, %arg4: memref<256x128xbf16, #tpu.memory_space<vmem>>, %arg5: memref<1x1536xf32, #tpu.memory_space<vmem>>, %arg6: memref<1x8x1xf32, #tpu.memory_space<vmem>>) attributes {dimension_semantics = [#tpu.dimension_semantics<parallel>], iteration_bounds = array<i64: 1>, scalar_prefetch = 0 : i64, scratch_operands = 0 : i64, tpu.core_type = #tpu.core_type<tc>, window_params = [{transform_indices = @transform_0, window_bounds = array<i64: 8, 8, 128>}, {transform_indices = @transform_1, window_bounds = array<i64: 8, 1, 1>}, {pipeline_mode = #tpu.pipeline_mode<synchronous>, transform_indices = @transform_2, window_bounds = array<i64: 128, 768>}, {pipeline_mode = #tpu.pipeline_mode<synchronous>, transform_indices = @transform_3, window_bounds = array<i64: 256, 128>}, {pipeline_mode = #tpu.pipeline_mode<synchronous>, transform_indices = @transform_4, window_bounds = array<i64: 1, 1536>}, {transform_indices = @transform_5, window_bounds = array<i64: 1, 8, 1>}]} {
    %c0 = arith.constant 0 : index
    %c0_0 = arith.constant 0 : index
    %c0_1 = arith.constant 0 : index
    %0 = vector.load %arg1[%c0, %c0_0, %c0_1] : memref<8x8x128xf32, #tpu.memory_space<vmem>>, vector<8x8x128xf32>
    %1 = vector.shape_cast %0 : vector<8x8x128xf32> to vector<64x128xf32>
    %2 = arith.truncf %1 : vector<64x128xf32> to vector<64x128xbf16>
    %c0_2 = arith.constant 0 : index
    %c0_3 = arith.constant 0 : index
    %3 = vector.load %arg3[%c0_2, %c0_3] : memref<128x768xbf16, #tpu.memory_space<vmem>>, vector<128x384xbf16>
    %cst = arith.constant dense<0.000000e+00> : vector<64x384xf32>
    %4 = tpu.matmul %2, %3, %cst {dimension_numbers = #tpu.dot_dimension_numbers<[1], [0], [0], [1], [0, 0, 1, 1], [], []>} : vector<64x128xbf16>, vector<128x384xbf16>, vector<64x384xf32> -> vector<64x384xf32>
    %c0_4 = arith.constant 0 : index
    %c0_5 = arith.constant 0 : index
    %5 = vector.load %arg5[%c0_4, %c0_5] : memref<1x1536xf32, #tpu.memory_space<vmem>>, vector<1x384xf32>
    %6 = vector.broadcast %5 : vector<1x384xf32> to vector<64x384xf32>
    %7 = arith.addf %4, %6 : vector<64x384xf32>
    %8 = vector.shape_cast %7 : vector<64x384xf32> to vector<8x8x384xf32>
    %9 = tpu.iota {dimensions = array<i32: 1>} : vector<1x8xi32>
    %c2_i32 = arith.constant 2 : i32
    %10 = vector.broadcast %c2_i32 : i32 to vector<1x8xi32>
    %11 = arith.cmpi slt, %9, %10 : vector<1x8xi32>
    %cst_6 = arith.constant 0.000000e+00 : f32
    %cst_7 = arith.constant -1.000000e+09 : f32
    %12 = vector.broadcast %cst_6 : f32 to vector<1x8xf32>
    %13 = vector.broadcast %cst_7 : f32 to vector<1x8xf32>
    %14 = arith.select %11, %12, %13 : vector<1x8xi1>, vector<1x8xf32>
    %15 = vector.extract_strided_slice %8 {offsets = [0, 0, 0], sizes = [8, 8, 32], strides = [1, 1, 1]} : vector<8x8x384xf32> to vector<8x8x32xf32>
    %16 = arith.truncf %15 : vector<8x8x32xf32> to vector<8x8x32xbf16>
    %17 = vector.extract_strided_slice %8 {offsets = [0, 0, 128], sizes = [8, 8, 32], strides = [1, 1, 1]} : vector<8x8x384xf32> to vector<8x8x32xf32>
    %18 = arith.truncf %17 : vector<8x8x32xf32> to vector<8x8x32xbf16>
    %19 = vector.extract_strided_slice %8 {offsets = [0, 0, 256], sizes = [8, 8, 32], strides = [1, 1, 1]} : vector<8x8x384xf32> to vector<8x8x32xf32>
    %20 = arith.truncf %19 : vector<8x8x32xf32> to vector<8x8x32xbf16>
    "tpu.trace_start"() <{level = 10 : i32, message = "sid,sjd->sij"}> : () -> ()
    %cst_8 = arith.constant dense<0.000000e+00> : vector<8x8x8xf32>
    %21 = tpu.matmul %16, %18, %cst_8 {dimension_numbers = #tpu.dot_dimension_numbers<[2], [2], [1], [1], [0, 0, 0, 1, 1, 1], [0], [0]>} : vector<8x8x32xbf16>, vector<8x8x32xbf16>, vector<8x8x8xf32> -> vector<8x8x8xf32>
    "tpu.trace_stop"() : () -> ()
    %22 = vector.shape_cast %14 : vector<1x8xf32> to vector<1x1x8xf32>
    %23 = vector.broadcast %22 : vector<1x1x8xf32> to vector<8x8x8xf32>
    %24 = arith.addf %21, %23 : vector<8x8x8xf32>
    %cst_9 = arith.constant dense<0xFF800000> : vector<8x8xf32>
    %25 = vector.multi_reduction <maximumf>, %24, %cst_9 [2] : vector<8x8x8xf32> to vector<8x8xf32>
    %26 = vector.shape_cast %25 : vector<8x8xf32> to vector<8x8x1xf32>
    %27 = vector.broadcast %26 : vector<8x8x1xf32> to vector<8x8x8xf32>
    %28 = arith.subf %24, %27 : vector<8x8x8xf32>
    %29 = math.exp %28 : vector<8x8x8xf32>
    %cst_10 = arith.constant dense<0.000000e+00> : vector<8x8xf32>
    %30 = vector.multi_reduction <add>, %29, %cst_10 [2] : vector<8x8x8xf32> to vector<8x8xf32>
    %31 = vector.shape_cast %30 : vector<8x8xf32> to vector<8x8x1xf32>
    %32 = tpu.reciprocal %31 {approx = true} : vector<8x8x1xf32> -> vector<8x8x1xf32>
    %33 = vector.broadcast %32 : vector<8x8x1xf32> to vector<8x8x8xf32>
    %34 = arith.mulf %29, %33 : vector<8x8x8xf32>
    %35 = arith.truncf %34 : vector<8x8x8xf32> to vector<8x8x8xbf16>
    "tpu.trace_start"() <{level = 10 : i32, message = "sij,sjd->sid"}> : () -> ()
    %cst_11 = arith.constant dense<0.000000e+00> : vector<8x8x32xf32>
    %36 = tpu.matmul %35, %20, %cst_11 {dimension_numbers = #tpu.dot_dimension_numbers<[2], [1], [1], [2], [0, 0, 0, 1, 1, 2], [0], [0]>} : vector<8x8x8xbf16>, vector<8x8x32xbf16>, vector<8x8x32xf32> -> vector<8x8x32xf32>
    "tpu.trace_stop"() : () -> ()
    %37 = vector.shape_cast %36 : vector<8x8x32xf32> to vector<64x32xf32>
    %38 = arith.truncf %37 : vector<64x32xf32> to vector<64x32xbf16>
    %c0_12 = arith.constant 0 : index
    %c384 = arith.constant 384 : index
    %39 = vector.load %arg3[%c0_12, %c384] : memref<128x768xbf16, #tpu.memory_space<vmem>>, vector<32x128xbf16>
    %cst_13 = arith.constant dense<0.000000e+00> : vector<64x128xf32>
    %40 = tpu.matmul %38, %39, %cst_13 {dimension_numbers = #tpu.dot_dimension_numbers<[1], [0], [0], [1], [0, 0, 1, 1], [], []>} : vector<64x32xbf16>, vector<32x128xbf16>, vector<64x128xf32> -> vector<64x128xf32>
    %41 = vector.extract_strided_slice %8 {offsets = [0, 0, 32], sizes = [8, 8, 32], strides = [1, 1, 1]} : vector<8x8x384xf32> to vector<8x8x32xf32>
    %42 = arith.truncf %41 : vector<8x8x32xf32> to vector<8x8x32xbf16>
    %43 = vector.extract_strided_slice %8 {offsets = [0, 0, 160], sizes = [8, 8, 32], strides = [1, 1, 1]} : vector<8x8x384xf32> to vector<8x8x32xf32>
    %44 = arith.truncf %43 : vector<8x8x32xf32> to vector<8x8x32xbf16>
    %45 = vector.extract_strided_slice %8 {offsets = [0, 0, 288], sizes = [8, 8, 32], strides = [1, 1, 1]} : vector<8x8x384xf32> to vector<8x8x32xf32>
    %46 = arith.truncf %45 : vector<8x8x32xf32> to vector<8x8x32xbf16>
    "tpu.trace_start"() <{level = 10 : i32, message = "sid,sjd->sij"}> : () -> ()
    %cst_14 = arith.constant dense<0.000000e+00> : vector<8x8x8xf32>
    %47 = tpu.matmul %42, %44, %cst_14 {dimension_numbers = #tpu.dot_dimension_numbers<[2], [2], [1], [1], [0, 0, 0, 1, 1, 1], [0], [0]>} : vector<8x8x32xbf16>, vector<8x8x32xbf16>, vector<8x8x8xf32> -> vector<8x8x8xf32>
    "tpu.trace_stop"() : () -> ()
    %48 = vector.shape_cast %14 : vector<1x8xf32> to vector<1x1x8xf32>
    %49 = vector.broadcast %48 : vector<1x1x8xf32> to vector<8x8x8xf32>
    %50 = arith.addf %47, %49 : vector<8x8x8xf32>
    %cst_15 = arith.constant dense<0xFF800000> : vector<8x8xf32>
    %51 = vector.multi_reduction <maximumf>, %50, %cst_15 [2] : vector<8x8x8xf32> to vector<8x8xf32>
    %52 = vector.shape_cast %51 : vector<8x8xf32> to vector<8x8x1xf32>
    %53 = vector.broadcast %52 : vector<8x8x1xf32> to vector<8x8x8xf32>
    %54 = arith.subf %50, %53 : vector<8x8x8xf32>
    %55 = math.exp %54 : vector<8x8x8xf32>
    %cst_16 = arith.constant dense<0.000000e+00> : vector<8x8xf32>
    %56 = vector.multi_reduction <add>, %55, %cst_16 [2] : vector<8x8x8xf32> to vector<8x8xf32>
    %57 = vector.shape_cast %56 : vector<8x8xf32> to vector<8x8x1xf32>
    %58 = tpu.reciprocal %57 {approx = true} : vector<8x8x1xf32> -> vector<8x8x1xf32>
    %59 = vector.broadcast %58 : vector<8x8x1xf32> to vector<8x8x8xf32>
    %60 = arith.mulf %55, %59 : vector<8x8x8xf32>
    %61 = arith.truncf %60 : vector<8x8x8xf32> to vector<8x8x8xbf16>
    "tpu.trace_start"() <{level = 10 : i32, message = "sij,sjd->sid"}> : () -> ()
    %cst_17 = arith.constant dense<0.000000e+00> : vector<8x8x32xf32>
    %62 = tpu.matmul %61, %46, %cst_17 {dimension_numbers = #tpu.dot_dimension_numbers<[2], [1], [1], [2], [0, 0, 0, 1, 1, 2], [0], [0]>} : vector<8x8x8xbf16>, vector<8x8x32xbf16>, vector<8x8x32xf32> -> vector<8x8x32xf32>
    "tpu.trace_stop"() : () -> ()
    %63 = vector.shape_cast %62 : vector<8x8x32xf32> to vector<64x32xf32>
    %64 = arith.truncf %63 : vector<64x32xf32> to vector<64x32xbf16>
    %c32 = arith.constant 32 : index
    %c384_18 = arith.constant 384 : index
    %65 = vector.load %arg3[%c32, %c384_18] : memref<128x768xbf16, #tpu.memory_space<vmem>>, vector<32x128xbf16>
    %cst_19 = arith.constant dense<0.000000e+00> : vector<64x128xf32>
    %66 = tpu.matmul %64, %65, %cst_19 {dimension_numbers = #tpu.dot_dimension_numbers<[1], [0], [0], [1], [0, 0, 1, 1], [], []>} : vector<64x32xbf16>, vector<32x128xbf16>, vector<64x128xf32> -> vector<64x128xf32>
    %67 = arith.addf %40, %66 : vector<64x128xf32>
    %68 = vector.extract_strided_slice %8 {offsets = [0, 0, 64], sizes = [8, 8, 32], strides = [1, 1, 1]} : vector<8x8x384xf32> to vector<8x8x32xf32>
    %69 = arith.truncf %68 : vector<8x8x32xf32> to vector<8x8x32xbf16>
    %70 = vector.extract_strided_slice %8 {offsets = [0, 0, 192], sizes = [8, 8, 32], strides = [1, 1, 1]} : vector<8x8x384xf32> to vector<8x8x32xf32>
    %71 = arith.truncf %70 : vector<8x8x32xf32> to vector<8x8x32xbf16>
    %72 = vector.extract_strided_slice %8 {offsets = [0, 0, 320], sizes = [8, 8, 32], strides = [1, 1, 1]} : vector<8x8x384xf32> to vector<8x8x32xf32>
    %73 = arith.truncf %72 : vector<8x8x32xf32> to vector<8x8x32xbf16>
    "tpu.trace_start"() <{level = 10 : i32, message = "sid,sjd->sij"}> : () -> ()
    %cst_20 = arith.constant dense<0.000000e+00> : vector<8x8x8xf32>
    %74 = tpu.matmul %69, %71, %cst_20 {dimension_numbers = #tpu.dot_dimension_numbers<[2], [2], [1], [1], [0, 0, 0, 1, 1, 1], [0], [0]>} : vector<8x8x32xbf16>, vector<8x8x32xbf16>, vector<8x8x8xf32> -> vector<8x8x8xf32>
    "tpu.trace_stop"() : () -> ()
    %75 = vector.shape_cast %14 : vector<1x8xf32> to vector<1x1x8xf32>
    %76 = vector.broadcast %75 : vector<1x1x8xf32> to vector<8x8x8xf32>
    %77 = arith.addf %74, %76 : vector<8x8x8xf32>
    %cst_21 = arith.constant dense<0xFF800000> : vector<8x8xf32>
    %78 = vector.multi_reduction <maximumf>, %77, %cst_21 [2] : vector<8x8x8xf32> to vector<8x8xf32>
    %79 = vector.shape_cast %78 : vector<8x8xf32> to vector<8x8x1xf32>
    %80 = vector.broadcast %79 : vector<8x8x1xf32> to vector<8x8x8xf32>
    %81 = arith.subf %77, %80 : vector<8x8x8xf32>
    %82 = math.exp %81 : vector<8x8x8xf32>
    %cst_22 = arith.constant dense<0.000000e+00> : vector<8x8xf32>
    %83 = vector.multi_reduction <add>, %82, %cst_22 [2] : vector<8x8x8xf32> to vector<8x8xf32>
    %84 = vector.shape_cast %83 : vector<8x8xf32> to vector<8x8x1xf32>
    %85 = tpu.reciprocal %84 {approx = true} : vector<8x8x1xf32> -> vector<8x8x1xf32>
    %86 = vector.broadcast %85 : vector<8x8x1xf32> to vector<8x8x8xf32>
    %87 = arith.mulf %82, %86 : vector<8x8x8xf32>
    %88 = arith.truncf %87 : vector<8x8x8xf32> to vector<8x8x8xbf16>
    "tpu.trace_start"() <{level = 10 : i32, message = "sij,sjd->sid"}> : () -> ()
    %cst_23 = arith.constant dense<0.000000e+00> : vector<8x8x32xf32>
    %89 = tpu.matmul %88, %73, %cst_23 {dimension_numbers = #tpu.dot_dimension_numbers<[2], [1], [1], [2], [0, 0, 0, 1, 1, 2], [0], [0]>} : vector<8x8x8xbf16>, vector<8x8x32xbf16>, vector<8x8x32xf32> -> vector<8x8x32xf32>
    "tpu.trace_stop"() : () -> ()
    %90 = vector.shape_cast %89 : vector<8x8x32xf32> to vector<64x32xf32>
    %91 = arith.truncf %90 : vector<64x32xf32> to vector<64x32xbf16>
    %c64 = arith.constant 64 : index
    %c384_24 = arith.constant 384 : index
    %92 = vector.load %arg3[%c64, %c384_24] : memref<128x768xbf16, #tpu.memory_space<vmem>>, vector<32x128xbf16>
    %cst_25 = arith.constant dense<0.000000e+00> : vector<64x128xf32>
    %93 = tpu.matmul %91, %92, %cst_25 {dimension_numbers = #tpu.dot_dimension_numbers<[1], [0], [0], [1], [0, 0, 1, 1], [], []>} : vector<64x32xbf16>, vector<32x128xbf16>, vector<64x128xf32> -> vector<64x128xf32>
    %94 = arith.addf %67, %93 : vector<64x128xf32>
    %95 = vector.extract_strided_slice %8 {offsets = [0, 0, 96], sizes = [8, 8, 32], strides = [1, 1, 1]} : vector<8x8x384xf32> to vector<8x8x32xf32>
    %96 = arith.truncf %95 : vector<8x8x32xf32> to vector<8x8x32xbf16>
    %97 = vector.extract_strided_slice %8 {offsets = [0, 0, 224], sizes = [8, 8, 32], strides = [1, 1, 1]} : vector<8x8x384xf32> to vector<8x8x32xf32>
    %98 = arith.truncf %97 : vector<8x8x32xf32> to vector<8x8x32xbf16>
    %99 = vector.extract_strided_slice %8 {offsets = [0, 0, 352], sizes = [8, 8, 32], strides = [1, 1, 1]} : vector<8x8x384xf32> to vector<8x8x32xf32>
    %100 = arith.truncf %99 : vector<8x8x32xf32> to vector<8x8x32xbf16>
    "tpu.trace_start"() <{level = 10 : i32, message = "sid,sjd->sij"}> : () -> ()
    %cst_26 = arith.constant dense<0.000000e+00> : vector<8x8x8xf32>
    %101 = tpu.matmul %96, %98, %cst_26 {dimension_numbers = #tpu.dot_dimension_numbers<[2], [2], [1], [1], [0, 0, 0, 1, 1, 1], [0], [0]>} : vector<8x8x32xbf16>, vector<8x8x32xbf16>, vector<8x8x8xf32> -> vector<8x8x8xf32>
    "tpu.trace_stop"() : () -> ()
    %102 = vector.shape_cast %14 : vector<1x8xf32> to vector<1x1x8xf32>
    %103 = vector.broadcast %102 : vector<1x1x8xf32> to vector<8x8x8xf32>
    %104 = arith.addf %101, %103 : vector<8x8x8xf32>
    %cst_27 = arith.constant dense<0xFF800000> : vector<8x8xf32>
    %105 = vector.multi_reduction <maximumf>, %104, %cst_27 [2] : vector<8x8x8xf32> to vector<8x8xf32>
    %106 = vector.shape_cast %105 : vector<8x8xf32> to vector<8x8x1xf32>
    %107 = vector.broadcast %106 : vector<8x8x1xf32> to vector<8x8x8xf32>
    %108 = arith.subf %104, %107 : vector<8x8x8xf32>
    %109 = math.exp %108 : vector<8x8x8xf32>
    %cst_28 = arith.constant dense<0.000000e+00> : vector<8x8xf32>
    %110 = vector.multi_reduction <add>, %109, %cst_28 [2] : vector<8x8x8xf32> to vector<8x8xf32>
    %111 = vector.shape_cast %110 : vector<8x8xf32> to vector<8x8x1xf32>
    %112 = tpu.reciprocal %111 {approx = true} : vector<8x8x1xf32> -> vector<8x8x1xf32>
    %113 = vector.broadcast %112 : vector<8x8x1xf32> to vector<8x8x8xf32>
    %114 = arith.mulf %109, %113 : vector<8x8x8xf32>
    %115 = arith.truncf %114 : vector<8x8x8xf32> to vector<8x8x8xbf16>
    "tpu.trace_start"() <{level = 10 : i32, message = "sij,sjd->sid"}> : () -> ()
    %cst_29 = arith.constant dense<0.000000e+00> : vector<8x8x32xf32>
    %116 = tpu.matmul %115, %100, %cst_29 {dimension_numbers = #tpu.dot_dimension_numbers<[2], [1], [1], [2], [0, 0, 0, 1, 1, 2], [0], [0]>} : vector<8x8x8xbf16>, vector<8x8x32xbf16>, vector<8x8x32xf32> -> vector<8x8x32xf32>
    "tpu.trace_stop"() : () -> ()
    %117 = vector.shape_cast %116 : vector<8x8x32xf32> to vector<64x32xf32>
    %118 = arith.truncf %117 : vector<64x32xf32> to vector<64x32xbf16>
    %c96 = arith.constant 96 : index
    %c384_30 = arith.constant 384 : index
    %119 = vector.load %arg3[%c96, %c384_30] : memref<128x768xbf16, #tpu.memory_space<vmem>>, vector<32x128xbf16>
    %cst_31 = arith.constant dense<0.000000e+00> : vector<64x128xf32>
    %120 = tpu.matmul %118, %119, %cst_31 {dimension_numbers = #tpu.dot_dimension_numbers<[1], [0], [0], [1], [0, 0, 1, 1], [], []>} : vector<64x32xbf16>, vector<32x128xbf16>, vector<64x128xf32> -> vector<64x128xf32>
    %121 = arith.addf %94, %120 : vector<64x128xf32>
    %c0_32 = arith.constant 0 : index
    %c640 = arith.constant 640 : index
    %122 = vector.load %arg5[%c0_32, %c640] : memref<1x1536xf32, #tpu.memory_space<vmem>>, vector<1x128xf32>
    %123 = vector.broadcast %122 : vector<1x128xf32> to vector<64x128xf32>
    %124 = arith.addf %121, %123 : vector<64x128xf32>
    %125 = arith.addf %1, %124 : vector<64x128xf32>
    %c0_33 = arith.constant 0 : index
    %c768 = arith.constant 768 : index
    %126 = vector.load %arg5[%c0_33, %c768] : memref<1x1536xf32, #tpu.memory_space<vmem>>, vector<1x128xf32>
    %c0_34 = arith.constant 0 : index
    %c896 = arith.constant 896 : index
    %127 = vector.load %arg5[%c0_34, %c896] : memref<1x1536xf32, #tpu.memory_space<vmem>>, vector<1x128xf32>
    %cst_35 = arith.constant dense<0.000000e+00> : vector<64xf32>
    %128 = vector.multi_reduction <add>, %125, %cst_35 [1] : vector<64x128xf32> to vector<64xf32>
    %129 = vector.shape_cast %128 : vector<64xf32> to vector<64x1xf32>
    %cst_36 = arith.constant 1.280000e+02 : f32
    %130 = vector.broadcast %cst_36 : f32 to vector<64x1xf32>
    %131 = arith.divf %129, %130 : vector<64x1xf32>
    %132 = vector.broadcast %131 : vector<64x1xf32> to vector<64x128xf32>
    %133 = arith.subf %125, %132 : vector<64x128xf32>
    %134 = arith.mulf %133, %133 : vector<64x128xf32>
    %cst_37 = arith.constant dense<0.000000e+00> : vector<64xf32>
    %135 = vector.multi_reduction <add>, %134, %cst_37 [1] : vector<64x128xf32> to vector<64xf32>
    %136 = vector.shape_cast %135 : vector<64xf32> to vector<64x1xf32>
    %cst_38 = arith.constant 1.280000e+02 : f32
    %137 = vector.broadcast %cst_38 : f32 to vector<64x1xf32>
    %138 = arith.divf %136, %137 : vector<64x1xf32>
    %cst_39 = arith.constant 9.99999974E-6 : f32
    %139 = vector.broadcast %cst_39 : f32 to vector<64x1xf32>
    %140 = arith.addf %138, %139 : vector<64x1xf32>
    %141 = math.rsqrt %140 : vector<64x1xf32>
    %142 = vector.broadcast %141 : vector<64x1xf32> to vector<64x128xf32>
    %143 = arith.mulf %133, %142 : vector<64x128xf32>
    %144 = vector.broadcast %126 : vector<1x128xf32> to vector<64x128xf32>
    %145 = arith.mulf %143, %144 : vector<64x128xf32>
    %146 = vector.broadcast %127 : vector<1x128xf32> to vector<64x128xf32>
    %147 = arith.addf %145, %146 : vector<64x128xf32>
    %148 = arith.truncf %147 : vector<64x128xf32> to vector<64x128xbf16>
    %c0_40 = arith.constant 0 : index
    %c512 = arith.constant 512 : index
    %149 = vector.load %arg3[%c0_40, %c512] : memref<128x768xbf16, #tpu.memory_space<vmem>>, vector<128x256xbf16>
    %cst_41 = arith.constant dense<0.000000e+00> : vector<64x256xf32>
    %150 = tpu.matmul %148, %149, %cst_41 {dimension_numbers = #tpu.dot_dimension_numbers<[1], [0], [0], [1], [0, 0, 1, 1], [], []>} : vector<64x128xbf16>, vector<128x256xbf16>, vector<64x256xf32> -> vector<64x256xf32>
    %c0_42 = arith.constant 0 : index
    %c384_43 = arith.constant 384 : index
    %151 = vector.load %arg5[%c0_42, %c384_43] : memref<1x1536xf32, #tpu.memory_space<vmem>>, vector<1x256xf32>
    %152 = vector.broadcast %151 : vector<1x256xf32> to vector<64x256xf32>
    %153 = arith.addf %150, %152 : vector<64x256xf32>
    %cst_44 = arith.constant 0.000000e+00 : f32
    %154 = vector.broadcast %cst_44 : f32 to vector<64x256xf32>
    %155 = arith.maximumf %153, %154 : vector<64x256xf32>
    %156 = arith.truncf %155 : vector<64x256xf32> to vector<64x256xbf16>
    %c0_45 = arith.constant 0 : index
    %c0_46 = arith.constant 0 : index
    %157 = vector.load %arg4[%c0_45, %c0_46] : memref<256x128xbf16, #tpu.memory_space<vmem>>, vector<256x128xbf16>
    %cst_47 = arith.constant dense<0.000000e+00> : vector<64x128xf32>
    %158 = tpu.matmul %156, %157, %cst_47 {dimension_numbers = #tpu.dot_dimension_numbers<[1], [0], [0], [1], [0, 0, 1, 1], [], []>} : vector<64x256xbf16>, vector<256x128xbf16>, vector<64x128xf32> -> vector<64x128xf32>
    %c0_48 = arith.constant 0 : index
    %c1024 = arith.constant 1024 : index
    %159 = vector.load %arg5[%c0_48, %c1024] : memref<1x1536xf32, #tpu.memory_space<vmem>>, vector<1x128xf32>
    %160 = vector.broadcast %159 : vector<1x128xf32> to vector<64x128xf32>
    %161 = arith.addf %158, %160 : vector<64x128xf32>
    %162 = arith.addf %147, %161 : vector<64x128xf32>
    %c0_49 = arith.constant 0 : index
    %c1152 = arith.constant 1152 : index
    %163 = vector.load %arg5[%c0_49, %c1152] : memref<1x1536xf32, #tpu.memory_space<vmem>>, vector<1x128xf32>
    %c0_50 = arith.constant 0 : index
    %c1280 = arith.constant 1280 : index
    %164 = vector.load %arg5[%c0_50, %c1280] : memref<1x1536xf32, #tpu.memory_space<vmem>>, vector<1x128xf32>
    %cst_51 = arith.constant dense<0.000000e+00> : vector<64xf32>
    %165 = vector.multi_reduction <add>, %162, %cst_51 [1] : vector<64x128xf32> to vector<64xf32>
    %166 = vector.shape_cast %165 : vector<64xf32> to vector<64x1xf32>
    %cst_52 = arith.constant 1.280000e+02 : f32
    %167 = vector.broadcast %cst_52 : f32 to vector<64x1xf32>
    %168 = arith.divf %166, %167 : vector<64x1xf32>
    %169 = vector.broadcast %168 : vector<64x1xf32> to vector<64x128xf32>
    %170 = arith.subf %162, %169 : vector<64x128xf32>
    %171 = arith.mulf %170, %170 : vector<64x128xf32>
    %cst_53 = arith.constant dense<0.000000e+00> : vector<64xf32>
    %172 = vector.multi_reduction <add>, %171, %cst_53 [1] : vector<64x128xf32> to vector<64xf32>
    %173 = vector.shape_cast %172 : vector<64xf32> to vector<64x1xf32>
    %cst_54 = arith.constant 1.280000e+02 : f32
    %174 = vector.broadcast %cst_54 : f32 to vector<64x1xf32>
    %175 = arith.divf %173, %174 : vector<64x1xf32>
    %cst_55 = arith.constant 9.99999974E-6 : f32
    %176 = vector.broadcast %cst_55 : f32 to vector<64x1xf32>
    %177 = arith.addf %175, %176 : vector<64x1xf32>
    %178 = math.rsqrt %177 : vector<64x1xf32>
    %179 = vector.broadcast %178 : vector<64x1xf32> to vector<64x128xf32>
    %180 = arith.mulf %170, %179 : vector<64x128xf32>
    %181 = vector.broadcast %163 : vector<1x128xf32> to vector<64x128xf32>
    %182 = arith.mulf %180, %181 : vector<64x128xf32>
    %183 = vector.broadcast %164 : vector<1x128xf32> to vector<64x128xf32>
    %184 = arith.addf %182, %183 : vector<64x128xf32>
    %185 = vector.shape_cast %184 : vector<64x128xf32> to vector<8x8x128xf32>
    %c0_56 = arith.constant 0 : index
    %c1408 = arith.constant 1408 : index
    %186 = vector.load %arg5[%c0_56, %c1408] : memref<1x1536xf32, #tpu.memory_space<vmem>>, vector<1x128xf32>
    %187 = vector.shape_cast %186 : vector<1x128xf32> to vector<1x1x128xf32>
    %188 = vector.broadcast %187 : vector<1x1x128xf32> to vector<8x8x128xf32>
    %189 = arith.mulf %185, %188 : vector<8x8x128xf32>
    %cst_57 = arith.constant dense<0.000000e+00> : vector<8x8xf32>
    %190 = vector.multi_reduction <add>, %189, %cst_57 [2] : vector<8x8x128xf32> to vector<8x8xf32>
    %191 = vector.shape_cast %190 : vector<8x8xf32> to vector<8x8x1xf32>
    %c0_58 = arith.constant 0 : index
    %c0_59 = arith.constant 0 : index
    %c0_60 = arith.constant 0 : index
    %192 = vector.load %arg2[%c0_58, %c0_59, %c0_60] : memref<8x1x1xf32, #tpu.memory_space<vmem>>, vector<8x1x1xf32>
    %193 = vector.broadcast %192 : vector<8x1x1xf32> to vector<8x8x1xf32>
    %194 = arith.mulf %191, %193 : vector<8x8x1xf32>
    %cst_61 = arith.constant dense<0.000000e+00> : vector<8x1xf32>
    %195 = vector.multi_reduction <add>, %194, %cst_61 [0] : vector<8x8x1xf32> to vector<8x1xf32>
    %c0_62 = arith.constant 0 : index
    %c0_63 = arith.constant 0 : index
    %c0_64 = arith.constant 0 : index
    %196 = vector.load %arg6[%c0_62, %c0_63, %c0_64] : memref<1x8x1xf32, #tpu.memory_space<vmem>>, vector<1x8x1xf32>
    %197 = vector.shape_cast %196 : vector<1x8x1xf32> to vector<8x1xf32>
    %198 = vector.shape_cast %195 : vector<8x1xf32> to vector<1x8x1xf32>
    tpu.vector_store %arg6[%c0_62, %c0_63, %c0_64], %198 {strides = array<i32>} : memref<1x8x1xf32, #tpu.memory_space<vmem>>, vector<1x8x1xf32>,
    return
  }
  func.func @transform_0(%arg0: i32) -> (i32, i32, i32) {
    %c0_i32 = arith.constant 0 : i32
    %c0_i32_0 = arith.constant 0 : i32
    %c0_i32_1 = arith.constant 0 : i32
    return %arg0, %c0_i32, %c0_i32_0 : i32, i32, i32
  }
  func.func @transform_1(%arg0: i32) -> (i32, i32, i32) {
    %c0_i32 = arith.constant 0 : i32
    %c0_i32_0 = arith.constant 0 : i32
    %c0_i32_1 = arith.constant 0 : i32
    return %arg0, %c0_i32, %c0_i32_0 : i32, i32, i32
  }
  func.func @transform_2(%arg0: i32) -> (i32, i32) {
    %c0_i32 = arith.constant 0 : i32
    %c0_i32_0 = arith.constant 0 : i32
    %c0_i32_1 = arith.constant 0 : i32
    return %c0_i32, %c0_i32_0 : i32, i32
  }
  func.func @transform_3(%arg0: i32) -> (i32, i32) {
    %c0_i32 = arith.constant 0 : i32
    %c0_i32_0 = arith.constant 0 : i32
    %c0_i32_1 = arith.constant 0 : i32
    return %c0_i32, %c0_i32_0 : i32, i32
  }
  func.func @transform_4(%arg0: i32) -> (i32, i32) {
    %c0_i32 = arith.constant 0 : i32
    %c0_i32_0 = arith.constant 0 : i32
    %c0_i32_1 = arith.constant 0 : i32
    return %c0_i32, %c0_i32_0 : i32, i32
  }
  func.func @transform_5(%arg0: i32) -> (i32, i32, i32) {
    %c0_i32 = arith.constant 0 : i32
    %c0_i32_0 = arith.constant 0 : i32
    %c0_i32_1 = arith.constant 0 : i32
    return %arg0, %c0_i32, %c0_i32_0 : i32, i32, i32
  }
}

</mosaic_0001>

<llo_original>
// kernel: mat_att_encoder_forward.1
$region0: #{mat_att_encoder_forward.1}
  #allocation0 [shape = 'u32[]', space=smem, size = 0x4, offset = 0x4, fixed_abs, tag = 'smem constant byte address 0x4 - core index']
  #allocation1 [shape = 'u32[144,128]{1,0:T(1,128)}', space=vmem, size = 0x12000, scoped, tag = 'internal scratch']
  %s0 = inlined_call_operand.vmem [shape: f32[8,8,128], index: 0, kind: input, shape index: {}]
  %s1 = inlined_call_operand.vmem [shape: f32[8,1,1], index: 1, kind: input, shape index: {}]
  %s2 = inlined_call_operand.hbm [shape: bf16[128,768], index: 2, kind: input, shape index: {}]
  %s3 = inlined_call_operand.hbm [shape: bf16[256,128], index: 3, kind: input, shape index: {}]
  %s4 = inlined_call_operand.hbm [shape: f32[1,1536], index: 4, kind: input, shape index: {}]
  %s5 = inlined_call_operand.vmem [shape: f32[1,8,1], index: 5, kind: output, shape index: {}]
  %s6 = sld [smem:[#allocation0]]
  $region42: #{mat_att_encoder_forward.1} parent=0
    _
  %s8 = ssub.s32 1, %s6
  %s9 = scalar_select 0, %s8, %s6
  $region1: #{mat_att_encoder_forward.1} parent=0
    #allocation2 [shape = 'u8[196608]{0}', space=vmem, size = 0x30000, scoped, tag = 'input window, operand 2, single buffered']
    #allocation3 [shape = 's32[1]{0}', space=sflag, size = 0x4, scoped, tag = 'scoped memory for mat_att_encoder_forward.1']
    #allocation4 [shape = 'u8[65536]{0}', space=vmem, size = 0x10000, scoped, tag = 'input window, operand 3, single buffered']
    #allocation5 [shape = 's32[1]{0}', space=sflag, size = 0x4, scoped, tag = 'scoped memory for mat_att_encoder_forward.1']
    #allocation6 [shape = 'u8[6144]{0}', space=vmem, size = 0x1800, scoped, tag = 'input window, operand 4, single buffered']
    %10 = vsyncpa [#allocation3], 0
    %11 = vsyncpa [#allocation5], 0
    // Predicated region
    $region2: #{mat_att_encoder_forward.1} parent=1 // pred_check
      _
    $region3: #{mat_att_encoder_forward.1} parent=1 // pred_check_branch
      %13 = sbr.rel (0) target = $region5
    $region4: #{mat_att_encoder_forward.1} parent=1 // pred_region
      _
    $region5: #{mat_att_encoder_forward.1} parent=1 // pred_fallthru
      _
    // Predicated region
    $region6: #{mat_att_encoder_forward.1} parent=1 // pred_check
      _
    $region7: #{mat_att_encoder_forward.1} parent=1 // pred_check_branch
      %15 = sbr.rel (0) target = $region9
    $region8: #{mat_att_encoder_forward.1} parent=1 // pred_region
      _
    $region9: #{mat_att_encoder_forward.1} parent=1 // pred_fallthru
      _
    // Predicated region
    $region10: #{mat_att_encoder_forward.1} parent=1 // pred_check
      _
    $region11: #{mat_att_encoder_forward.1} parent=1 // pred_check_branch
      %17 = sbr.rel (0) target = $region13
    $region12: #{mat_att_encoder_forward.1} parent=1 // pred_region
      %s19 = ssub.s32 6144, 6144
      %20 = vsyncadd [#allocation3], %s19
      %s21 = sshll.u32 [#allocation2], 4
      %s22 = int_to_ptr.vmem [resolvable:$true] %s21
      %27 = dma.hbm_to_vmem [thread:$0]  %s2, 6144, %s22, [#allocation3], 384, 384, 24
    $region13: #{mat_att_encoder_forward.1} parent=1 // pred_fallthru
      _
    // Predicated region
    $region14: #{mat_att_encoder_forward.1} parent=1 // pred_check
      _
    $region15: #{mat_att_encoder_forward.1} parent=1 // pred_check_branch
      %29 = sbr.rel (0) target = $region17
    $region16: #{mat_att_encoder_forward.1} parent=1 // pred_region
      %s31 = ssub.s32 2048, 2048
      %32 = vsyncadd [#allocation5], %s31
      %s33 = sshll.u32 [#allocation4], 4
      %s34 = int_to_ptr.vmem [resolvable:$true] %s33
      %39 = dma.hbm_to_vmem [thread:$0]  %s3, 2048, %s34, [#allocation5], 64, 64, 4
    $region17: #{mat_att_encoder_forward.1} parent=1 // pred_fallthru
      _
    // Predicated region
    $region18: #{mat_att_encoder_forward.1} parent=1 // pred_check
      _
    $region19: #{mat_att_encoder_forward.1} parent=1 // pred_check_branch
      %41 = sbr.rel (0) target = $region21
    $region20: #{mat_att_encoder_forward.1} parent=1 // pred_region
      %s43 = ssub.s32 192, 192
      %44 = vsyncadd [#allocation5], %s43
      %s46 = sshll.u32 [#allocation6], 4
      %s47 = int_to_ptr.vmem [resolvable:$true] %s46
      %49 = dma.hbm_to_vmem [thread:$0]  %s4, 192, %s47, [#allocation5]
    $region21: #{mat_att_encoder_forward.1} parent=1 // pred_fallthru
      _
    // Predicated region
    $region22: #{mat_att_encoder_forward.1} parent=1 // pred_check
      _
    $region23: #{mat_att_encoder_forward.1} parent=1 // pred_check_branch
      %51 = sbr.rel (0) target = $region25
    $region24: #{mat_att_encoder_forward.1} parent=1 // pred_region
      %52 = dma.done [#allocation3], 6144
    $region25: #{mat_att_encoder_forward.1} parent=1 // pred_fallthru
      _
    // Predicated region
    $region26: #{mat_att_encoder_forward.1} parent=1 // pred_check
      _
    $region27: #{mat_att_encoder_forward.1} parent=1 // pred_check_branch
      %54 = sbr.rel (0) target = $region29
    $region28: #{mat_att_encoder_forward.1} parent=1 // pred_region
      %55 = dma.done [#allocation5], 2048
    $region29: #{mat_att_encoder_forward.1} parent=1 // pred_fallthru
      _
    // Predicated region
    $region30: #{mat_att_encoder_forward.1} parent=1 // pred_check
      _
    $region31: #{mat_att_encoder_forward.1} parent=1 // pred_check_branch
      %57 = sbr.rel (0) target = $region33
    $region32: #{mat_att_encoder_forward.1} parent=1 // pred_region
      %58 = dma.done [#allocation5], 192
    $region33: #{mat_att_encoder_forward.1} parent=1 // pred_fallthru
      _
    %v60 = vld [vmem:[%s0] sm:$0xff]
    %v61 = vld [vmem:[%s0 + $0x8] sm:$0xff]
    %v62 = vld [vmem:[%s0 + $0x10] sm:$0xff]
    %v63 = vld [vmem:[%s0 + $0x18] sm:$0xff]
    %v64 = vld [vmem:[%s0 + $0x20] sm:$0xff]
    %v65 = vld [vmem:[%s0 + $0x28] sm:$0xff]
    %v66 = vld [vmem:[%s0 + $0x30] sm:$0xff]
    %v67 = vld [vmem:[%s0 + $0x38] sm:$0xff]
    %v68 = vpack.c.bf16 %v61, %v60
    %v69 = vpack.c.bf16 %v63, %v62
    %v70 = vpack.c.bf16 %v65, %v64
    %v71 = vpack.c.bf16 %v67, %v66
    %v72 = vld [vmem:[#allocation2] sm:$0xff]
    %v73 = vld [vmem:[#allocation2 + $0x8] sm:$0xf]
    %v74 = vld [vmem:[#allocation2 + $0x18] sm:$0xff]
    %v75 = vld [vmem:[#allocation2 + $0x20] sm:$0xf]
    %v76 = vld [vmem:[#allocation2 + $0x30] sm:$0xff]
    %v77 = vld [vmem:[#allocation2 + $0x38] sm:$0xf]
    %v78 = vld [vmem:[#allocation2 + $0x48] sm:$0xff]
    %v79 = vld [vmem:[#allocation2 + $0x50] sm:$0xf]
    %v80 = vld [vmem:[#allocation2 + $0x60] sm:$0xff]
    %v81 = vld [vmem:[#allocation2 + $0x68] sm:$0xf]
    %v82 = vld [vmem:[#allocation2 + $0x78] sm:$0xff]
    %v83 = vld [vmem:[#allocation2 + $0x80] sm:$0xf]
    %v84 = vld [vmem:[#allocation2 + $0x90] sm:$0xff]
    %v85 = vld [vmem:[#allocation2 + $0x98] sm:$0xf]
    %v86 = vld [vmem:[#allocation2 + $0xa8] sm:$0xff]
    %v87 = vld [vmem:[#allocation2 + $0xb0] sm:$0xf]
    %v88 = vld [vmem:[#allocation2 + $0xc0] sm:$0xff]
    %v89 = vld [vmem:[#allocation2 + $0xc8] sm:$0xf]
    %v90 = vld [vmem:[#allocation2 + $0xd8] sm:$0xff]
    %v91 = vld [vmem:[#allocation2 + $0xe0] sm:$0xf]
    %v92 = vld [vmem:[#allocation2 + $0xf0] sm:$0xff]
    %v93 = vld [vmem:[#allocation2 + $0xf8] sm:$0xf]
    %v94 = vld [vmem:[#allocation2 + $0x108] sm:$0xff]
    %v95 = vld [vmem:[#allocation2 + $0x110] sm:$0xf]
    %v96 = vld [vmem:[#allocation2 + $0x120] sm:$0xff]
    %v97 = vld [vmem:[#allocation2 + $0x128] sm:$0xf]
    %v98 = vld [vmem:[#allocation2 + $0x138] sm:$0xff]
    %v99 = vld [vmem:[#allocation2 + $0x140] sm:$0xf]
    %v100 = vld [vmem:[#allocation2 + $0x150] sm:$0xff]
    %v101 = vld [vmem:[#allocation2 + $0x158] sm:$0xf]
    %v102 = vld [vmem:[#allocation2 + $0x168] sm:$0xff]
    %v103 = vld [vmem:[#allocation2 + $0x170] sm:$0xf]
    %v104 = vld [vmem:[#allocation6] sm:$0x7]
    %v106 = vlaneseq
    %v107 = vshrl.u32 %v106, 7
    %v108 = vsub.s32 0, %v107
    %v109 = vrot.slane %v104, %v108
    %v110 = vlaneseq
    %v111 = vshrl.u32 %v110, 7
    %v112 = vsub.s32 1, %v111
    %v113 = vrot.slane %v104, %v112
    %v114 = vlaneseq
    %v115 = vshrl.u32 %v114, 7
    %v116 = vsub.s32 2, %v115
    %v117 = vrot.slane %v104, %v116
    %v153 = vunpack.c.l.b16 %v72
    %v154 = vunpack.c.h.b16 %v72
    %v155 = vunpack.c.l.b16 %v73
    %v156 = vunpack.c.l.b16 %v74
    %v157 = vunpack.c.h.b16 %v74
    %v158 = vunpack.c.l.b16 %v75
    %v159 = vunpack.c.l.b16 %v76
    %v160 = vunpack.c.h.b16 %v76
    %v161 = vunpack.c.l.b16 %v77
    %v162 = vunpack.c.l.b16 %v78
    %v163 = vunpack.c.h.b16 %v78
    %v164 = vunpack.c.l.b16 %v79
    %v165 = vunpack.c.l.b16 %v80
    %v166 = vunpack.c.h.b16 %v80
    %v167 = vunpack.c.l.b16 %v81
    %v168 = vunpack.c.l.b16 %v82
    %v169 = vunpack.c.h.b16 %v82
    %v170 = vunpack.c.l.b16 %v83
    %v171 = vunpack.c.l.b16 %v84
    %v172 = vunpack.c.h.b16 %v84
    %v173 = vunpack.c.l.b16 %v85
    %v174 = vunpack.c.l.b16 %v86
    %v175 = vunpack.c.h.b16 %v86
    %v176 = vunpack.c.l.b16 %v87
    %v177 = vunpack.c.l.b16 %v88
    %v178 = vunpack.c.h.b16 %v88
    %v179 = vunpack.c.l.b16 %v89
    %v180 = vunpack.c.l.b16 %v90
    %v181 = vunpack.c.h.b16 %v90
    %v182 = vunpack.c.l.b16 %v91
    %v183 = vunpack.c.l.b16 %v92
    %v184 = vunpack.c.h.b16 %v92
    %v185 = vunpack.c.l.b16 %v93
    %v186 = vunpack.c.l.b16 %v94
    %v187 = vunpack.c.h.b16 %v94
    %v188 = vunpack.c.l.b16 %v95
    %v189 = vunpack.c.l.b16 %v96
    %v190 = vunpack.c.h.b16 %v96
    %v191 = vunpack.c.l.b16 %v97
    %v192 = vunpack.c.l.b16 %v98
    %v193 = vunpack.c.h.b16 %v98
    %v194 = vunpack.c.l.b16 %v99
    %v195 = vunpack.c.l.b16 %v100
    %v196 = vunpack.c.h.b16 %v100
    %v197 = vunpack.c.l.b16 %v101
    %v198 = vunpack.c.l.b16 %v102
    %v199 = vunpack.c.h.b16 %v102
    %v200 = vunpack.c.l.b16 %v103
    %v201 = vpack.c.b16 %v156, %v153
    %v202 = vpack.c.b16 %v157, %v154
    %v203 = vpack.c.b16 %v158, %v155
    %v204 = vpack.c.b16 %v162, %v159
    %v205 = vpack.c.b16 %v163, %v160
    %v206 = vpack.c.b16 %v164, %v161
    %v207 = vpack.c.b16 %v168, %v165
    %v208 = vpack.c.b16 %v169, %v166
    %v209 = vpack.c.b16 %v170, %v167
    %v210 = vpack.c.b16 %v174, %v171
    %v211 = vpack.c.b16 %v175, %v172
    %v212 = vpack.c.b16 %v176, %v173
    %v213 = vpack.c.b16 %v180, %v177
    %v214 = vpack.c.b16 %v181, %v178
    %v215 = vpack.c.b16 %v182, %v179
    %v216 = vpack.c.b16 %v186, %v183
    %v217 = vpack.c.b16 %v187, %v184
    %v218 = vpack.c.b16 %v188, %v185
    %v219 = vpack.c.b16 %v192, %v189
    %v220 = vpack.c.b16 %v193, %v190
    %v221 = vpack.c.b16 %v194, %v191
    %v222 = vpack.c.b16 %v198, %v195
    %v223 = vpack.c.b16 %v199, %v196
    %v224 = vpack.c.b16 %v200, %v197
    %249 = vmatprep.subr.bf16.mxu0 %v223
    %250 = vmatpush1.bf16.msra.mxu0 %v222
    %251 = vmatprep.subr.bf16.mxu0 %v220
    %252 = vmatpush1.bf16.msra.mxu0 %v219
    %253 = vmatprep.subr.bf16.mxu0 %v217
    %254 = vmatpush1.bf16.msra.mxu0 %v216
    %255 = vmatprep.subr.bf16.mxu0 %v214
    %256 = vmatpush1.bf16.msra.mxu0 %v213
    %257 = vmatprep.subr.bf16.mxu0 %v211
    %258 = vmatpush1.bf16.msra.mxu0 %v210
    %259 = vmatprep.subr.bf16.mxu0 %v208
    %260 = vmatpush1.bf16.msra.mxu0 %v207
    %261 = vmatprep.subr.bf16.mxu0 %v205
    %262 = vmatpush1.bf16.msra.mxu0 %v204
    %263 = vmatprep.subr.bf16.mxu0 %v202
    %264 = vmatpush1.bf16.msra.mxu0 %v201
    %265 = vmatprep.subr.bf16.mxu0 0
    %266 = vmatpush2.bf16.msra.mxu0 0
    %267 = vmatprep.subr.bf16.mxu0 0
    %268 = vmatpush2.bf16.msra.mxu0 0
    %269 = vmatprep.subr.bf16.mxu0 0
    %270 = vmatpush2.bf16.msra.mxu0 0
    %271 = vmatprep.subr.bf16.mxu0 0
    %272 = vmatpush2.bf16.msra.mxu0 0
    %273 = vmatprep.subr.bf16.mxu0 0
    %274 = vmatpush2.bf16.msra.mxu0 0
    %275 = vmatprep.subr.bf16.mxu0 0
    %276 = vmatpush2.bf16.msra.mxu0 0
    %277 = vmatprep.subr.bf16.mxu0 0
    %278 = vmatpush2.bf16.msra.mxu0 0
    %279 = vmatprep.subr.bf16.mxu0 0
    %280 = vmatpush2.bf16.msra.mxu0 0
    %281 = vmatprep.mubr.bf16.mxu0 0
    %282 = vmatmul.mubr.bf16.gmra.mxu0 %v68
    %v283 = vpop.f32.mrf.mxu0
    %v284 = vadd.f32 %v109, %v283
    %v285 = vpop.f32.mrf.mxu0
    %v286 = vadd.f32 %v113, %v285
    %v287 = vpop.f32.mrf.mxu0
    %v288 = vadd.f32 %v109, %v287
    %v289 = vpop.f32.mrf.mxu0
    %v290 = vadd.f32 %v113, %v289
    %291 = vmatprep.mubr.bf16.mxu0 0
    %292 = vmatmul.mubr.bf16.gmra.mxu0 %v69
    %v293 = vpop.f32.mrf.mxu0
    %v294 = vadd.f32 %v109, %v293
    %v295 = vpop.f32.mrf.mxu0
    %v296 = vadd.f32 %v113, %v295
    %v297 = vpop.f32.mrf.mxu0
    %v298 = vadd.f32 %v109, %v297
    %v299 = vpop.f32.mrf.mxu0
    %v300 = vadd.f32 %v113, %v299
    %301 = vmatprep.mubr.bf16.mxu0 0
    %302 = vmatmul.mubr.bf16.gmra.mxu0 %v70
    %v303 = vpop.f32.mrf.mxu0
    %v304 = vadd.f32 %v109, %v303
    %v305 = vpop.f32.mrf.mxu0
    %v306 = vadd.f32 %v113, %v305
    %v307 = vpop.f32.mrf.mxu0
    %v308 = vadd.f32 %v109, %v307
    %v309 = vpop.f32.mrf.mxu0
    %v310 = vadd.f32 %v113, %v309
    %311 = vmatprep.mubr.bf16.mxu0 0
    %312 = vmatmul.mubr.bf16.gmra.mxu0 %v71
    %v313 = vpop.f32.mrf.mxu0
    %v314 = vadd.f32 %v109, %v313
    %v315 = vpop.f32.mrf.mxu0
    %v316 = vadd.f32 %v113, %v315
    %v317 = vpop.f32.mrf.mxu0
    %v318 = vadd.f32 %v109, %v317
    %v319 = vpop.f32.mrf.mxu0
    %v320 = vadd.f32 %v113, %v319
    %321 = vdwg.mxu0
    %322 = vmatprep.subr.bf16.mxu0 0
    %323 = vmatpush1.bf16.msra.mxu0 %v224
    %324 = vmatprep.subr.bf16.mxu0 0
    %325 = vmatpush1.bf16.msra.mxu0 %v221
    %326 = vmatprep.subr.bf16.mxu0 0
    %327 = vmatpush1.bf16.msra.mxu0 %v218
    %328 = vmatprep.subr.bf16.mxu0 0
    %329 = vmatpush1.bf16.msra.mxu0 %v215
    %330 = vmatprep.subr.bf16.mxu0 0
    %331 = vmatpush1.bf16.msra.mxu0 %v212
    %332 = vmatprep.subr.bf16.mxu0 0
    %333 = vmatpush1.bf16.msra.mxu0 %v209
    %334 = vmatprep.subr.bf16.mxu0 0
    %335 = vmatpush1.bf16.msra.mxu0 %v206
    %336 = vmatprep.subr.bf16.mxu0 0
    %337 = vmatpush1.bf16.msra.mxu0 %v203
    %338 = vmatprep.subr.bf16.mxu0 0
    %339 = vmatpush2.bf16.msra.mxu0 0
    %340 = vmatprep.subr.bf16.mxu0 0
    %341 = vmatpush2.bf16.msra.mxu0 0
    %342 = vmatprep.subr.bf16.mxu0 0
    %343 = vmatpush2.bf16.msra.mxu0 0
    %344 = vmatprep.subr.bf16.mxu0 0
    %345 = vmatpush2.bf16.msra.mxu0 0
    %346 = vmatprep.subr.bf16.mxu0 0
    %347 = vmatpush2.bf16.msra.mxu0 0
    %348 = vmatprep.subr.bf16.mxu0 0
    %349 = vmatpush2.bf16.msra.mxu0 0
    %350 = vmatprep.subr.bf16.mxu0 0
    %351 = vmatpush2.bf16.msra.mxu0 0
    %352 = vmatprep.subr.bf16.mxu0 0
    %353 = vmatpush2.bf16.msra.mxu0 0
    %354 = vmatprep.mubr.bf16.mxu0 0
    %355 = vmatmul.mubr.bf16.gmra.mxu0 %v68
    %v356 = vpop.f32.mrf.mxu0
    %v357 = vadd.f32 %v117, %v356
    %v358 = vpop.f32.mrf.mxu0
    %v359 = vpop.f32.mrf.mxu0
    %v360 = vadd.f32 %v117, %v359
    %v361 = vpop.f32.mrf.mxu0
    %362 = vmatprep.mubr.bf16.mxu0 0
    %363 = vmatmul.mubr.bf16.gmra.mxu0 %v69
    %v364 = vpop.f32.mrf.mxu0
    %v365 = vadd.f32 %v117, %v364
    %v366 = vpop.f32.mrf.mxu0
    %v367 = vpop.f32.mrf.mxu0
    %v368 = vadd.f32 %v117, %v367
    %v369 = vpop.f32.mrf.mxu0
    %370 = vmatprep.mubr.bf16.mxu0 0
    %371 = vmatmul.mubr.bf16.gmra.mxu0 %v70
    %v372 = vpop.f32.mrf.mxu0
    %v373 = vadd.f32 %v117, %v372
    %v374 = vpop.f32.mrf.mxu0
    %v375 = vpop.f32.mrf.mxu0
    %v376 = vadd.f32 %v117, %v375
    %v377 = vpop.f32.mrf.mxu0
    %378 = vmatprep.mubr.bf16.mxu0 0
    %379 = vmatmul.mubr.bf16.gmra.mxu0 %v71
    %v380 = vpop.f32.mrf.mxu0
    %v381 = vadd.f32 %v117, %v380
    %v382 = vpop.f32.mrf.mxu0
    %v383 = vpop.f32.mrf.mxu0
    %v384 = vadd.f32 %v117, %v383
    %v385 = vpop.f32.mrf.mxu0
    %386 = vdwg.mxu0
    %v387 = vlaneseq
    %v388 = vand.u32 %v387, 127
    %vm389 = vcmp.lt.s32.totalorder %v388, 2
    %v390 = vsel %vm389, 0.0, -1e+09
    %v391 = vpack.c.bf16 %v284, %v284
    %v392 = vpack.c.bf16 %v288, %v288
    %v393 = vpack.c.bf16 %v294, %v294
    %v394 = vpack.c.bf16 %v298, %v298
    %v395 = vpack.c.bf16 %v304, %v304
    %v396 = vpack.c.bf16 %v308, %v308
    %v397 = vpack.c.bf16 %v314, %v314
    %v398 = vpack.c.bf16 %v318, %v318
    %v399 = vpack.c.bf16 %v286, %v286
    %v400 = vpack.c.bf16 %v290, %v290
    %v401 = vpack.c.bf16 %v296, %v296
    %v402 = vpack.c.bf16 %v300, %v300
    %v403 = vpack.c.bf16 %v306, %v306
    %v404 = vpack.c.bf16 %v310, %v310
    %v405 = vpack.c.bf16 %v316, %v316
    %v406 = vpack.c.bf16 %v320, %v320
    %v407 = vpack.c.bf16 %v357, %v357
    %v408 = vpack.c.bf16 %v360, %v360
    %v409 = vpack.c.bf16 %v365, %v365
    %v410 = vpack.c.bf16 %v368, %v368
    %v411 = vpack.c.bf16 %v373, %v373
    %v412 = vpack.c.bf16 %v376, %v376
    %v413 = vpack.c.bf16 %v381, %v381
    %v414 = vpack.c.bf16 %v384, %v384
    %vm415 = vcmask 261120
    %v417 = vsel %vm415, %v391, 0
    %v420 = vsel %vm415, %v399, 0
    %422 = vmatprep.subr.bf16.mxu0 0
    %423 = vmatpush1.bf16.xpose.msra.mxu0 0
    %424 = vmatprep.subr.bf16.mxu0 0
    %425 = vmatpush1.bf16.xpose.msra.mxu0 0
    %426 = vmatprep.subr.bf16.mxu0 0
    %427 = vmatpush1.bf16.xpose.msra.mxu0 0
    %428 = vmatprep.subr.bf16.mxu0 0
    %429 = vmatpush1.bf16.xpose.msra.mxu0 0
    %430 = vmatprep.subr.bf16.mxu0 0
    %431 = vmatpush1.bf16.xpose.msra.mxu0 0
    %432 = vmatprep.subr.bf16.mxu0 0
    %433 = vmatpush1.bf16.xpose.msra.mxu0 0
    %434 = vmatprep.subr.bf16.mxu0 0
    %435 = vmatpush1.bf16.xpose.msra.mxu0 0
    %436 = vmatprep.subr.bf16.mxu0 0
    %437 = vmatpush1.bf16.xpose.msra.mxu0 %v420
    %438 = vmatprep.subr.bf16.mxu0 0
    %439 = vmatpush2.bf16.xpose.msra.mxu0 0
    %440 = vmatprep.subr.bf16.mxu0 0
    %441 = vmatpush2.bf16.xpose.msra.mxu0 0
    %442 = vmatprep.subr.bf16.mxu0 0
    %443 = vmatpush2.bf16.xpose.msra.mxu0 0
    %444 = vmatprep.subr.bf16.mxu0 0
    %445 = vmatpush2.bf16.xpose.msra.mxu0 0
    %446 = vmatprep.subr.bf16.mxu0 0
    %447 = vmatpush2.bf16.xpose.msra.mxu0 0
    %448 = vmatprep.subr.bf16.mxu0 0
    %449 = vmatpush2.bf16.xpose.msra.mxu0 0
    %450 = vmatprep.subr.bf16.mxu0 0
    %451 = vmatpush2.bf16.xpose.msra.mxu0 0
    %452 = vmatprep.subr.bf16.mxu0 0
    %453 = vmatpush2.bf16.xpose.msra.mxu0 0
    %454 = vmatprep.mubr.bf16.mxu0 0
    %455 = vmatmul.mubr.bf16.gmra.mxu0 %v417
    %v456 = vpop.f32.mrf.mxu0
    %v457 = vadd.f32 %v390, %v456
    %v458 = vpop.f32.mrf.mxu0
    %v459 = vpop.f32.mrf.mxu0
    %v460 = vpop.f32.mrf.mxu0
    %461 = vdwg.mxu0
    %v463 = vsel %vm415, %v392, 0
    %v466 = vsel %vm415, %v400, 0
    %468 = vmatprep.subr.bf16.mxu0 0
    %469 = vmatpush1.bf16.xpose.msra.mxu0 0
    %470 = vmatprep.subr.bf16.mxu0 0
    %471 = vmatpush1.bf16.xpose.msra.mxu0 0
    %472 = vmatprep.subr.bf16.mxu0 0
    %473 = vmatpush1.bf16.xpose.msra.mxu0 0
    %474 = vmatprep.subr.bf16.mxu0 0
    %475 = vmatpush1.bf16.xpose.msra.mxu0 0
    %476 = vmatprep.subr.bf16.mxu0 0
    %477 = vmatpush1.bf16.xpose.msra.mxu0 0
    %478 = vmatprep.subr.bf16.mxu0 0
    %479 = vmatpush1.bf16.xpose.msra.mxu0 0
    %480 = vmatprep.subr.bf16.mxu0 0
    %481 = vmatpush1.bf16.xpose.msra.mxu0 0
    %482 = vmatprep.subr.bf16.mxu0 0
    %483 = vmatpush1.bf16.xpose.msra.mxu0 %v466
    %484 = vmatprep.subr.bf16.mxu0 0
    %485 = vmatpush2.bf16.xpose.msra.mxu0 0
    %486 = vmatprep.subr.bf16.mxu0 0
    %487 = vmatpush2.bf16.xpose.msra.mxu0 0
    %488 = vmatprep.subr.bf16.mxu0 0
    %489 = vmatpush2.bf16.xpose.msra.mxu0 0
    %490 = vmatprep.subr.bf16.mxu0 0
    %491 = vmatpush2.bf16.xpose.msra.mxu0 0
    %492 = vmatprep.subr.bf16.mxu0 0
    %493 = vmatpush2.bf16.xpose.msra.mxu0 0
    %494 = vmatprep.subr.bf16.mxu0 0
    %495 = vmatpush2.bf16.xpose.msra.mxu0 0
    %496 = vmatprep.subr.bf16.mxu0 0
    %497 = vmatpush2.bf16.xpose.msra.mxu0 0
    %498 = vmatprep.subr.bf16.mxu0 0
    %499 = vmatpush2.bf16.xpose.msra.mxu0 0
    %500 = vmatprep.mubr.bf16.mxu0 0
    %501 = vmatmul.mubr.bf16.gmra.mxu0 %v463
    %v502 = vpop.f32.mrf.mxu0
    %v503 = vadd.f32 %v390, %v502
    %v504 = vpop.f32.mrf.mxu0
    %v505 = vpop.f32.mrf.mxu0
    %v506 = vpop.f32.mrf.mxu0
    %507 = vdwg.mxu0
    %v509 = vsel %vm415, %v393, 0
    %v512 = vsel %vm415, %v401, 0
    %514 = vmatprep.subr.bf16.mxu0 0
    %515 = vmatpush1.bf16.xpose.msra.mxu0 0
    %516 = vmatprep.subr.bf16.mxu0 0
    %517 = vmatpush1.bf16.xpose.msra.mxu0 0
    %518 = vmatprep.subr.bf16.mxu0 0
    %519 = vmatpush1.bf16.xpose.msra.mxu0 0
    %520 = vmatprep.subr.bf16.mxu0 0
    %521 = vmatpush1.bf16.xpose.msra.mxu0 0
    %522 = vmatprep.subr.bf16.mxu0 0
    %523 = vmatpush1.bf16.xpose.msra.mxu0 0
    %524 = vmatprep.subr.bf16.mxu0 0
    %525 = vmatpush1.bf16.xpose.msra.mxu0 0
    %526 = vmatprep.subr.bf16.mxu0 0
    %527 = vmatpush1.bf16.xpose.msra.mxu0 0
    %528 = vmatprep.subr.bf16.mxu0 0
    %529 = vmatpush1.bf16.xpose.msra.mxu0 %v512
    %530 = vmatprep.subr.bf16.mxu0 0
    %531 = vmatpush2.bf16.xpose.msra.mxu0 0
    %532 = vmatprep.subr.bf16.mxu0 0
    %533 = vmatpush2.bf16.xpose.msra.mxu0 0
    %534 = vmatprep.subr.bf16.mxu0 0
    %535 = vmatpush2.bf16.xpose.msra.mxu0 0
    %536 = vmatprep.subr.bf16.mxu0 0
    %537 = vmatpush2.bf16.xpose.msra.mxu0 0
    %538 = vmatprep.subr.bf16.mxu0 0
    %539 = vmatpush2.bf16.xpose.msra.mxu0 0
    %540 = vmatprep.subr.bf16.mxu0 0
    %541 = vmatpush2.bf16.xpose.msra.mxu0 0
    %542 = vmatprep.subr.bf16.mxu0 0
    %543 = vmatpush2.bf16.xpose.msra.mxu0 0
    %544 = vmatprep.subr.bf16.mxu0 0
    %545 = vmatpush2.bf16.xpose.msra.mxu0 0
    %546 = vmatprep.mubr.bf16.mxu0 0
    %547 = vmatmul.mubr.bf16.gmra.mxu0 %v509
    %v548 = vpop.f32.mrf.mxu0
    %v549 = vadd.f32 %v390, %v548
    %v550 = vpop.f32.mrf.mxu0
    %v551 = vpop.f32.mrf.mxu0
    %v552 = vpop.f32.mrf.mxu0
    %553 = vdwg.mxu0
    %v555 = vsel %vm415, %v394, 0
    %v558 = vsel %vm415, %v402, 0
    %560 = vmatprep.subr.bf16.mxu0 0
    %561 = vmatpush1.bf16.xpose.msra.mxu0 0
    %562 = vmatprep.subr.bf16.mxu0 0
    %563 = vmatpush1.bf16.xpose.msra.mxu0 0
    %564 = vmatprep.subr.bf16.mxu0 0
    %565 = vmatpush1.bf16.xpose.msra.mxu0 0
    %566 = vmatprep.subr.bf16.mxu0 0
    %567 = vmatpush1.bf16.xpose.msra.mxu0 0
    %568 = vmatprep.subr.bf16.mxu0 0
    %569 = vmatpush1.bf16.xpose.msra.mxu0 0
    %570 = vmatprep.subr.bf16.mxu0 0
    %571 = vmatpush1.bf16.xpose.msra.mxu0 0
    %572 = vmatprep.subr.bf16.mxu0 0
    %573 = vmatpush1.bf16.xpose.msra.mxu0 0
    %574 = vmatprep.subr.bf16.mxu0 0
    %575 = vmatpush1.bf16.xpose.msra.mxu0 %v558
    %576 = vmatprep.subr.bf16.mxu0 0
    %577 = vmatpush2.bf16.xpose.msra.mxu0 0
    %578 = vmatprep.subr.bf16.mxu0 0
    %579 = vmatpush2.bf16.xpose.msra.mxu0 0
    %580 = vmatprep.subr.bf16.mxu0 0
    %581 = vmatpush2.bf16.xpose.msra.mxu0 0
    %582 = vmatprep.subr.bf16.mxu0 0
    %583 = vmatpush2.bf16.xpose.msra.mxu0 0
    %584 = vmatprep.subr.bf16.mxu0 0
    %585 = vmatpush2.bf16.xpose.msra.mxu0 0
    %586 = vmatprep.subr.bf16.mxu0 0
    %587 = vmatpush2.bf16.xpose.msra.mxu0 0
    %588 = vmatprep.subr.bf16.mxu0 0
    %589 = vmatpush2.bf16.xpose.msra.mxu0 0
    %590 = vmatprep.subr.bf16.mxu0 0
    %591 = vmatpush2.bf16.xpose.msra.mxu0 0
    %592 = vmatprep.mubr.bf16.mxu0 0
    %593 = vmatmul.mubr.bf16.gmra.mxu0 %v555
    %v594 = vpop.f32.mrf.mxu0
    %v595 = vadd.f32 %v390, %v594
    %v596 = vpop.f32.mrf.mxu0
    %v597 = vpop.f32.mrf.mxu0
    %v598 = vpop.f32.mrf.mxu0
    %599 = vdwg.mxu0
    %v601 = vsel %vm415, %v395, 0
    %v604 = vsel %vm415, %v403, 0
    %606 = vmatprep.subr.bf16.mxu0 0
    %607 = vmatpush1.bf16.xpose.msra.mxu0 0
    %608 = vmatprep.subr.bf16.mxu0 0
    %609 = vmatpush1.bf16.xpose.msra.mxu0 0
    %610 = vmatprep.subr.bf16.mxu0 0
    %611 = vmatpush1.bf16.xpose.msra.mxu0 0
    %612 = vmatprep.subr.bf16.mxu0 0
    %613 = vmatpush1.bf16.xpose.msra.mxu0 0
    %614 = vmatprep.subr.bf16.mxu0 0
    %615 = vmatpush1.bf16.xpose.msra.mxu0 0
    %616 = vmatprep.subr.bf16.mxu0 0
    %617 = vmatpush1.bf16.xpose.msra.mxu0 0
    %618 = vmatprep.subr.bf16.mxu0 0
    %619 = vmatpush1.bf16.xpose.msra.mxu0 0
    %620 = vmatprep.subr.bf16.mxu0 0
    %621 = vmatpush1.bf16.xpose.msra.mxu0 %v604
    %622 = vmatprep.subr.bf16.mxu0 0
    %623 = vmatpush2.bf16.xpose.msra.mxu0 0
    %624 = vmatprep.subr.bf16.mxu0 0
    %625 = vmatpush2.bf16.xpose.msra.mxu0 0
    %626 = vmatprep.subr.bf16.mxu0 0
    %627 = vmatpush2.bf16.xpose.msra.mxu0 0
    %628 = vmatprep.subr.bf16.mxu0 0
    %629 = vmatpush2.bf16.xpose.msra.mxu0 0
    %630 = vmatprep.subr.bf16.mxu0 0
    %631 = vmatpush2.bf16.xpose.msra.mxu0 0
    %632 = vmatprep.subr.bf16.mxu0 0
    %633 = vmatpush2.bf16.xpose.msra.mxu0 0
    %634 = vmatprep.subr.bf16.mxu0 0
    %635 = vmatpush2.bf16.xpose.msra.mxu0 0
    %636 = vmatprep.subr.bf16.mxu0 0
    %637 = vmatpush2.bf16.xpose.msra.mxu0 0
    %638 = vmatprep.mubr.bf16.mxu0 0
    %639 = vmatmul.mubr.bf16.gmra.mxu0 %v601
    %v640 = vpop.f32.mrf.mxu0
    %v641 = vadd.f32 %v390, %v640
    %v642 = vpop.f32.mrf.mxu0
    %v643 = vpop.f32.mrf.mxu0
    %v644 = vpop.f32.mrf.mxu0
    %645 = vdwg.mxu0
    %v647 = vsel %vm415, %v396, 0
    %v650 = vsel %vm415, %v404, 0
    %652 = vmatprep.subr.bf16.mxu0 0
    %653 = vmatpush1.bf16.xpose.msra.mxu0 0
    %654 = vmatprep.subr.bf16.mxu0 0
    %655 = vmatpush1.bf16.xpose.msra.mxu0 0
    %656 = vmatprep.subr.bf16.mxu0 0
    %657 = vmatpush1.bf16.xpose.msra.mxu0 0
    %658 = vmatprep.subr.bf16.mxu0 0
    %659 = vmatpush1.bf16.xpose.msra.mxu0 0
    %660 = vmatprep.subr.bf16.mxu0 0
    %661 = vmatpush1.bf16.xpose.msra.mxu0 0
    %662 = vmatprep.subr.bf16.mxu0 0
    %663 = vmatpush1.bf16.xpose.msra.mxu0 0
    %664 = vmatprep.subr.bf16.mxu0 0
    %665 = vmatpush1.bf16.xpose.msra.mxu0 0
    %666 = vmatprep.subr.bf16.mxu0 0
    %667 = vmatpush1.bf16.xpose.msra.mxu0 %v650
    %668 = vmatprep.subr.bf16.mxu0 0
    %669 = vmatpush2.bf16.xpose.msra.mxu0 0
    %670 = vmatprep.subr.bf16.mxu0 0
    %671 = vmatpush2.bf16.xpose.msra.mxu0 0
    %672 = vmatprep.subr.bf16.mxu0 0
    %673 = vmatpush2.bf16.xpose.msra.mxu0 0
    %674 = vmatprep.subr.bf16.mxu0 0
    %675 = vmatpush2.bf16.xpose.msra.mxu0 0
    %676 = vmatprep.subr.bf16.mxu0 0
    %677 = vmatpush2.bf16.xpose.msra.mxu0 0
    %678 = vmatprep.subr.bf16.mxu0 0
    %679 = vmatpush2.bf16.xpose.msra.mxu0 0
    %680 = vmatprep.subr.bf16.mxu0 0
    %681 = vmatpush2.bf16.xpose.msra.mxu0 0
    %682 = vmatprep.subr.bf16.mxu0 0
    %683 = vmatpush2.bf16.xpose.msra.mxu0 0
    %684 = vmatprep.mubr.bf16.mxu0 0
    %685 = vmatmul.mubr.bf16.gmra.mxu0 %v647
    %v686 = vpop.f32.mrf.mxu0
    %v687 = vadd.f32 %v390, %v686
    %v688 = vpop.f32.mrf.mxu0
    %v689 = vpop.f32.mrf.mxu0
    %v690 = vpop.f32.mrf.mxu0
    %691 = vdwg.mxu0
    %v693 = vsel %vm415, %v397, 0
    %v696 = vsel %vm415, %v405, 0
    %698 = vmatprep.subr.bf16.mxu0 0
    %699 = vmatpush1.bf16.xpose.msra.mxu0 0
    %700 = vmatprep.subr.bf16.mxu0 0
    %701 = vmatpush1.bf16.xpose.msra.mxu0 0
    %702 = vmatprep.subr.bf16.mxu0 0
    %703 = vmatpush1.bf16.xpose.msra.mxu0 0
    %704 = vmatprep.subr.bf16.mxu0 0
    %705 = vmatpush1.bf16.xpose.msra.mxu0 0
    %706 = vmatprep.subr.bf16.mxu0 0
    %707 = vmatpush1.bf16.xpose.msra.mxu0 0
    %708 = vmatprep.subr.bf16.mxu0 0
    %709 = vmatpush1.bf16.xpose.msra.mxu0 0
    %710 = vmatprep.subr.bf16.mxu0 0
    %711 = vmatpush1.bf16.xpose.msra.mxu0 0
    %712 = vmatprep.subr.bf16.mxu0 0
    %713 = vmatpush1.bf16.xpose.msra.mxu0 %v696
    %714 = vmatprep.subr.bf16.mxu0 0
    %715 = vmatpush2.bf16.xpose.msra.mxu0 0
    %716 = vmatprep.subr.bf16.mxu0 0
    %717 = vmatpush2.bf16.xpose.msra.mxu0 0
    %718 = vmatprep.subr.bf16.mxu0 0
    %719 = vmatpush2.bf16.xpose.msra.mxu0 0
    %720 = vmatprep.subr.bf16.mxu0 0
    %721 = vmatpush2.bf16.xpose.msra.mxu0 0
    %722 = vmatprep.subr.bf16.mxu0 0
    %723 = vmatpush2.bf16.xpose.msra.mxu0 0
    %724 = vmatprep.subr.bf16.mxu0 0
    %725 = vmatpush2.bf16.xpose.msra.mxu0 0
    %726 = vmatprep.subr.bf16.mxu0 0
    %727 = vmatpush2.bf16.xpose.msra.mxu0 0
    %728 = vmatprep.subr.bf16.mxu0 0
    %729 = vmatpush2.bf16.xpose.msra.mxu0 0
    %730 = vmatprep.mubr.bf16.mxu0 0
    %731 = vmatmul.mubr.bf16.gmra.mxu0 %v693
    %v732 = vpop.f32.mrf.mxu0
    %v733 = vadd.f32 %v390, %v732
    %v734 = vpop.f32.mrf.mxu0
    %v735 = vpop.f32.mrf.mxu0
    %v736 = vpop.f32.mrf.mxu0
    %737 = vdwg.mxu0
    %v739 = vsel %vm415, %v398, 0
    %v742 = vsel %vm415, %v406, 0
    %744 = vmatprep.subr.bf16.mxu0 0
    %745 = vmatpush1.bf16.xpose.msra.mxu0 0
    %746 = vmatprep.subr.bf16.mxu0 0
    %747 = vmatpush1.bf16.xpose.msra.mxu0 0
    %748 = vmatprep.subr.bf16.mxu0 0
    %749 = vmatpush1.bf16.xpose.msra.mxu0 0
    %750 = vmatprep.subr.bf16.mxu0 0
    %751 = vmatpush1.bf16.xpose.msra.mxu0 0
    %752 = vmatprep.subr.bf16.mxu0 0
    %753 = vmatpush1.bf16.xpose.msra.mxu0 0
    %754 = vmatprep.subr.bf16.mxu0 0
    %755 = vmatpush1.bf16.xpose.msra.mxu0 0
    %756 = vmatprep.subr.bf16.mxu0 0
    %757 = vmatpush1.bf16.xpose.msra.mxu0 0
    %758 = vmatprep.subr.bf16.mxu0 0
    %759 = vmatpush1.bf16.xpose.msra.mxu0 %v742
    %760 = vmatprep.subr.bf16.mxu0 0
    %761 = vmatpush2.bf16.xpose.msra.mxu0 0
    %762 = vmatprep.subr.bf16.mxu0 0
    %763 = vmatpush2.bf16.xpose.msra.mxu0 0
    %764 = vmatprep.subr.bf16.mxu0 0
    %765 = vmatpush2.bf16.xpose.msra.mxu0 0
    %766 = vmatprep.subr.bf16.mxu0 0
    %767 = vmatpush2.bf16.xpose.msra.mxu0 0
    %768 = vmatprep.subr.bf16.mxu0 0
    %769 = vmatpush2.bf16.xpose.msra.mxu0 0
    %770 = vmatprep.subr.bf16.mxu0 0
    %771 = vmatpush2.bf16.xpose.msra.mxu0 0
    %772 = vmatprep.subr.bf16.mxu0 0
    %773 = vmatpush2.bf16.xpose.msra.mxu0 0
    %774 = vmatprep.subr.bf16.mxu0 0
    %775 = vmatpush2.bf16.xpose.msra.mxu0 0
    %776 = vmatprep.mubr.bf16.mxu0 0
    %777 = vmatmul.mubr.bf16.gmra.mxu0 %v739
    %v778 = vpop.f32.mrf.mxu0
    %v779 = vadd.f32 %v390, %v778
    %v780 = vpop.f32.mrf.mxu0
    %v781 = vpop.f32.mrf.mxu0
    %v782 = vpop.f32.mrf.mxu0
    %783 = vdwg.mxu0
    %vm784 = vcmask 64512
    %v785 = vsel %vm784, %v457, -inf
    %786 = vmax.xlane.f32.xlu0 %v785
    %v787 = vpop.xlane.xlu0 %786
    %v788 = vsel %vm784, %v503, -inf
    %789 = vmax.xlane.f32.xlu0 %v788
    %v790 = vpop.xlane.xlu0 %789
    %v791 = vsel %vm784, %v549, -inf
    %792 = vmax.xlane.f32.xlu0 %v791
    %v793 = vpop.xlane.xlu0 %792
    %v794 = vsel %vm784, %v595, -inf
    %795 = vmax.xlane.f32.xlu0 %v794
    %v796 = vpop.xlane.xlu0 %795
    %v797 = vsel %vm784, %v641, -inf
    %798 = vmax.xlane.f32.xlu0 %v797
    %v799 = vpop.xlane.xlu0 %798
    %v800 = vsel %vm784, %v687, -inf
    %801 = vmax.xlane.f32.xlu0 %v800
    %v802 = vpop.xlane.xlu0 %801
    %v803 = vsel %vm784, %v733, -inf
    %804 = vmax.xlane.f32.xlu0 %v803
    %v805 = vpop.xlane.xlu0 %804
    %v806 = vsel %vm784, %v779, -inf
    %807 = vmax.xlane.f32.xlu0 %v806
    %v808 = vpop.xlane.xlu0 %807
    %v809 = vsub.f32 %v457, %v787
    %v810 = vsub.f32 %v503, %v790
    %v811 = vsub.f32 %v549, %v793
    %v812 = vsub.f32 %v595, %v796
    %v813 = vsub.f32 %v641, %v799
    %v814 = vsub.f32 %v687, %v802
    %v815 = vsub.f32 %v733, %v805
    %v816 = vsub.f32 %v779, %v808
    %v817 = vmul.f32 %v809, 1.442695
    %v818 = vpow.pop %v817
    %v819 = vmul.f32 %v810, 1.442695
    %v820 = vpow.pop %v819
    %v821 = vmul.f32 %v811, 1.442695
    %v822 = vpow.pop %v821
    %v823 = vmul.f32 %v812, 1.442695
    %v824 = vpow.pop %v823
    %v825 = vmul.f32 %v813, 1.442695
    %v826 = vpow.pop %v825
    %v827 = vmul.f32 %v814, 1.442695
    %v828 = vpow.pop %v827
    %v829 = vmul.f32 %v815, 1.442695
    %v830 = vpow.pop %v829
    %v831 = vmul.f32 %v816, 1.442695
    %v832 = vpow.pop %v831
    %v833 = vsel %vm784, %v818, 0.0
    %834 = vadd.xlane.f32.xlu0 %v833
    %v835 = vpop.xlane.xlu0 %834
    %v836 = vsel %vm784, %v820, 0.0
    %837 = vadd.xlane.f32.xlu0 %v836
    %v838 = vpop.xlane.xlu0 %837
    %v839 = vsel %vm784, %v822, 0.0
    %840 = vadd.xlane.f32.xlu0 %v839
    %v841 = vpop.xlane.xlu0 %840
    %v842 = vsel %vm784, %v824, 0.0
    %843 = vadd.xlane.f32.xlu0 %v842
    %v844 = vpop.xlane.xlu0 %843
    %v845 = vsel %vm784, %v826, 0.0
    %846 = vadd.xlane.f32.xlu0 %v845
    %v847 = vpop.xlane.xlu0 %846
    %v848 = vsel %vm784, %v828, 0.0
    %849 = vadd.xlane.f32.xlu0 %v848
    %v850 = vpop.xlane.xlu0 %849
    %v851 = vsel %vm784, %v830, 0.0
    %852 = vadd.xlane.f32.xlu0 %v851
    %v853 = vpop.xlane.xlu0 %852
    %v854 = vsel %vm784, %v832, 0.0
    %855 = vadd.xlane.f32.xlu0 %v854
    %v856 = vpop.xlane.xlu0 %855
    %v857 = vrcp.pop %v835
    %v858 = vrcp.pop %v838
    %v859 = vrcp.pop %v841
    %v860 = vrcp.pop %v844
    %v861 = vrcp.pop %v847
    %v862 = vrcp.pop %v850
    %v863 = vrcp.pop %v853
    %v864 = vrcp.pop %v856
    %v865 = vmul.f32 %v818, %v857
    %v866 = vmul.f32 %v820, %v858
    %v867 = vmul.f32 %v822, %v859
    %v868 = vmul.f32 %v824, %v860
    %v869 = vmul.f32 %v826, %v861
    %v870 = vmul.f32 %v828, %v862
    %v871 = vmul.f32 %v830, %v863
    %v872 = vmul.f32 %v832, %v864
    %v873 = vpack.c.bf16 %v865, %v865
    %v874 = vpack.c.bf16 %v866, %v866
    %v875 = vpack.c.bf16 %v867, %v867
    %v876 = vpack.c.bf16 %v868, %v868
    %v877 = vpack.c.bf16 %v869, %v869
    %v878 = vpack.c.bf16 %v870, %v870
    %v879 = vpack.c.bf16 %v871, %v871
    %v880 = vpack.c.bf16 %v872, %v872
    %v882 = vsel %vm784, %v873, 0
    %vm884 = vcmask 1043456
    %v886 = vsel %vm884, %v407, 0
    %888 = vmatprep.subr.bf16.mxu0 0
    %889 = vmatpush1.bf16.msra.mxu0 0
    %890 = vmatprep.subr.bf16.mxu0 0
    %891 = vmatpush1.bf16.msra.mxu0 0
    %892 = vmatprep.subr.bf16.mxu0 0
    %893 = vmatpush1.bf16.msra.mxu0 0
    %894 = vmatprep.subr.bf16.mxu0 0
    %895 = vmatpush1.bf16.msra.mxu0 0
    %896 = vmatprep.subr.bf16.mxu0 0
    %897 = vmatpush1.bf16.msra.mxu0 0
    %898 = vmatprep.subr.bf16.mxu0 0
    %899 = vmatpush1.bf16.msra.mxu0 0
    %900 = vmatprep.subr.bf16.mxu0 0
    %901 = vmatpush1.bf16.msra.mxu0 0
    %902 = vmatprep.subr.bf16.mxu0 0
    %903 = vmatpush1.bf16.msra.mxu0 %v886
    %904 = vmatprep.subr.bf16.mxu0 0
    %905 = vmatpush2.bf16.msra.mxu0 0
    %906 = vmatprep.subr.bf16.mxu0 0
    %907 = vmatpush2.bf16.msra.mxu0 0
    %908 = vmatprep.subr.bf16.mxu0 0
    %909 = vmatpush2.bf16.msra.mxu0 0
    %910 = vmatprep.subr.bf16.mxu0 0
    %911 = vmatpush2.bf16.msra.mxu0 0
    %912 = vmatprep.subr.bf16.mxu0 0
    %913 = vmatpush2.bf16.msra.mxu0 0
    %914 = vmatprep.subr.bf16.mxu0 0
    %915 = vmatpush2.bf16.msra.mxu0 0
    %916 = vmatprep.subr.bf16.mxu0 0
    %917 = vmatpush2.bf16.msra.mxu0 0
    %918 = vmatprep.subr.bf16.mxu0 0
    %919 = vmatpush2.bf16.msra.mxu0 0
    %920 = vmatprep.mubr.bf16.mxu0 0
    %921 = vmatmul.mubr.bf16.gmra.mxu0 %v882
    %v922 = vpop.f32.mrf.mxu0
    %v923 = vadd.f32 0.0, %v922
    %v924 = vpop.f32.mrf.mxu0
    %v925 = vpop.f32.mrf.mxu0
    %v926 = vpop.f32.mrf.mxu0
    %927 = vdwg.mxu0
    %v929 = vsel %vm784, %v874, 0
    %v932 = vsel %vm884, %v408, 0
    %934 = vmatprep.subr.bf16.mxu0 0
    %935 = vmatpush1.bf16.msra.mxu0 0
    %936 = vmatprep.subr.bf16.mxu0 0
    %937 = vmatpush1.bf16.msra.mxu0 0
    %938 = vmatprep.subr.bf16.mxu0 0
    %939 = vmatpush1.bf16.msra.mxu0 0
    %940 = vmatprep.subr.bf16.mxu0 0
    %941 = vmatpush1.bf16.msra.mxu0 0
    %942 = vmatprep.subr.bf16.mxu0 0
    %943 = vmatpush1.bf16.msra.mxu0 0
    %944 = vmatprep.subr.bf16.mxu0 0
    %945 = vmatpush1.bf16.msra.mxu0 0
    %946 = vmatprep.subr.bf16.mxu0 0
    %947 = vmatpush1.bf16.msra.mxu0 0
    %948 = vmatprep.subr.bf16.mxu0 0
    %949 = vmatpush1.bf16.msra.mxu0 %v932
    %950 = vmatprep.subr.bf16.mxu0 0
    %951 = vmatpush2.bf16.msra.mxu0 0
    %952 = vmatprep.subr.bf16.mxu0 0
    %953 = vmatpush2.bf16.msra.mxu0 0
    %954 = vmatprep.subr.bf16.mxu0 0
    %955 = vmatpush2.bf16.msra.mxu0 0
    %956 = vmatprep.subr.bf16.mxu0 0
    %957 = vmatpush2.bf16.msra.mxu0 0
    %958 = vmatprep.subr.bf16.mxu0 0
    %959 = vmatpush2.bf16.msra.mxu0 0
    %960 = vmatprep.subr.bf16.mxu0 0
    %961 = vmatpush2.bf16.msra.mxu0 0
    %962 = vmatprep.subr.bf16.mxu0 0
    %963 = vmatpush2.bf16.msra.mxu0 0
    %964 = vmatprep.subr.bf16.mxu0 0
    %965 = vmatpush2.bf16.msra.mxu0 0
    %966 = vmatprep.mubr.bf16.mxu0 0
    %967 = vmatmul.mubr.bf16.gmra.mxu0 %v929
    %v968 = vpop.f32.mrf.mxu0
    %v969 = vadd.f32 0.0, %v968
    %v970 = vpop.f32.mrf.mxu0
    %v971 = vpop.f32.mrf.mxu0
    %v972 = vpop.f32.mrf.mxu0
    %973 = vdwg.mxu0
    %v975 = vsel %vm784, %v875, 0
    %v978 = vsel %vm884, %v409, 0
    %980 = vmatprep.subr.bf16.mxu0 0
    %981 = vmatpush1.bf16.msra.mxu0 0
    %982 = vmatprep.subr.bf16.mxu0 0
    %983 = vmatpush1.bf16.msra.mxu0 0
    %984 = vmatprep.subr.bf16.mxu0 0
    %985 = vmatpush1.bf16.msra.mxu0 0
    %986 = vmatprep.subr.bf16.mxu0 0
    %987 = vmatpush1.bf16.msra.mxu0 0
    %988 = vmatprep.subr.bf16.mxu0 0
    %989 = vmatpush1.bf16.msra.mxu0 0
    %990 = vmatprep.subr.bf16.mxu0 0
    %991 = vmatpush1.bf16.msra.mxu0 0
    %992 = vmatprep.subr.bf16.mxu0 0
    %993 = vmatpush1.bf16.msra.mxu0 0
    %994 = vmatprep.subr.bf16.mxu0 0
    %995 = vmatpush1.bf16.msra.mxu0 %v978
    %996 = vmatprep.subr.bf16.mxu0 0
    %997 = vmatpush2.bf16.msra.mxu0 0
    %998 = vmatprep.subr.bf16.mxu0 0
    %999 = vmatpush2.bf16.msra.mxu0 0
    %1000 = vmatprep.subr.bf16.mxu0 0
    %1001 = vmatpush2.bf16.msra.mxu0 0
    %1002 = vmatprep.subr.bf16.mxu0 0
    %1003 = vmatpush2.bf16.msra.mxu0 0
    %1004 = vmatprep.subr.bf16.mxu0 0
    %1005 = vmatpush2.bf16.msra.mxu0 0
    %1006 = vmatprep.subr.bf16.mxu0 0
    %1007 = vmatpush2.bf16.msra.mxu0 0
    %1008 = vmatprep.subr.bf16.mxu0 0
    %1009 = vmatpush2.bf16.msra.mxu0 0
    %1010 = vmatprep.subr.bf16.mxu0 0
    %1011 = vmatpush2.bf16.msra.mxu0 0
    %1012 = vmatprep.mubr.bf16.mxu0 0
    %1013 = vmatmul.mubr.bf16.gmra.mxu0 %v975
    %v1014 = vpop.f32.mrf.mxu0
    %v1015 = vadd.f32 0.0, %v1014
    %v1016 = vpop.f32.mrf.mxu0
    %v1017 = vpop.f32.mrf.mxu0
    %v1018 = vpop.f32.mrf.mxu0
    %1019 = vdwg.mxu0
    %v1021 = vsel %vm784, %v876, 0
    %v1024 = vsel %vm884, %v410, 0
    %1026 = vmatprep.subr.bf16.mxu0 0
    %1027 = vmatpush1.bf16.msra.mxu0 0
    %1028 = vmatprep.subr.bf16.mxu0 0
    %1029 = vmatpush1.bf16.msra.mxu0 0
    %1030 = vmatprep.subr.bf16.mxu0 0
    %1031 = vmatpush1.bf16.msra.mxu0 0
    %1032 = vmatprep.subr.bf16.mxu0 0
    %1033 = vmatpush1.bf16.msra.mxu0 0
    %1034 = vmatprep.subr.bf16.mxu0 0
    %1035 = vmatpush1.bf16.msra.mxu0 0
    %1036 = vmatprep.subr.bf16.mxu0 0
    %1037 = vmatpush1.bf16.msra.mxu0 0
    %1038 = vmatprep.subr.bf16.mxu0 0
    %1039 = vmatpush1.bf16.msra.mxu0 0
    %1040 = vmatprep.subr.bf16.mxu0 0
    %1041 = vmatpush1.bf16.msra.mxu0 %v1024
    %1042 = vmatprep.subr.bf16.mxu0 0
    %1043 = vmatpush2.bf16.msra.mxu0 0
    %1044 = vmatprep.subr.bf16.mxu0 0
    %1045 = vmatpush2.bf16.msra.mxu0 0
    %1046 = vmatprep.subr.bf16.mxu0 0
    %1047 = vmatpush2.bf16.msra.mxu0 0
    %1048 = vmatprep.subr.bf16.mxu0 0
    %1049 = vmatpush2.bf16.msra.mxu0 0
    %1050 = vmatprep.subr.bf16.mxu0 0
    %1051 = vmatpush2.bf16.msra.mxu0 0
    %1052 = vmatprep.subr.bf16.mxu0 0
    %1053 = vmatpush2.bf16.msra.mxu0 0
    %1054 = vmatprep.subr.bf16.mxu0 0
    %1055 = vmatpush2.bf16.msra.mxu0 0
    %1056 = vmatprep.subr.bf16.mxu0 0
    %1057 = vmatpush2.bf16.msra.mxu0 0
    %1058 = vmatprep.mubr.bf16.mxu0 0
    %1059 = vmatmul.mubr.bf16.gmra.mxu0 %v1021
    %v1060 = vpop.f32.mrf.mxu0
    %v1061 = vadd.f32 0.0, %v1060
    %v1062 = vpop.f32.mrf.mxu0
    %v1063 = vpop.f32.mrf.mxu0
    %v1064 = vpop.f32.mrf.mxu0
    %1065 = vdwg.mxu0
    %v1067 = vsel %vm784, %v877, 0
    %v1070 = vsel %vm884, %v411, 0
    %1072 = vmatprep.subr.bf16.mxu0 0
    %1073 = vmatpush1.bf16.msra.mxu0 0
    %1074 = vmatprep.subr.bf16.mxu0 0
    %1075 = vmatpush1.bf16.msra.mxu0 0
    %1076 = vmatprep.subr.bf16.mxu0 0
    %1077 = vmatpush1.bf16.msra.mxu0 0
    %1078 = vmatprep.subr.bf16.mxu0 0
    %1079 = vmatpush1.bf16.msra.mxu0 0
    %1080 = vmatprep.subr.bf16.mxu0 0
    %1081 = vmatpush1.bf16.msra.mxu0 0
    %1082 = vmatprep.subr.bf16.mxu0 0
    %1083 = vmatpush1.bf16.msra.mxu0 0
    %1084 = vmatprep.subr.bf16.mxu0 0
    %1085 = vmatpush1.bf16.msra.mxu0 0
    %1086 = vmatprep.subr.bf16.mxu0 0
    %1087 = vmatpush1.bf16.msra.mxu0 %v1070
    %1088 = vmatprep.subr.bf16.mxu0 0
    %1089 = vmatpush2.bf16.msra.mxu0 0
    %1090 = vmatprep.subr.bf16.mxu0 0
    %1091 = vmatpush2.bf16.msra.mxu0 0
    %1092 = vmatprep.subr.bf16.mxu0 0
    %1093 = vmatpush2.bf16.msra.mxu0 0
    %1094 = vmatprep.subr.bf16.mxu0 0
    %1095 = vmatpush2.bf16.msra.mxu0 0
    %1096 = vmatprep.subr.bf16.mxu0 0
    %1097 = vmatpush2.bf16.msra.mxu0 0
    %1098 = vmatprep.subr.bf16.mxu0 0
    %1099 = vmatpush2.bf16.msra.mxu0 0
    %1100 = vmatprep.subr.bf16.mxu0 0
    %1101 = vmatpush2.bf16.msra.mxu0 0
    %1102 = vmatprep.subr.bf16.mxu0 0
    %1103 = vmatpush2.bf16.msra.mxu0 0
    %1104 = vmatprep.mubr.bf16.mxu0 0
    %1105 = vmatmul.mubr.bf16.gmra.mxu0 %v1067
    %v1106 = vpop.f32.mrf.mxu0
    %v1107 = vadd.f32 0.0, %v1106
    %v1108 = vpop.f32.mrf.mxu0
    %v1109 = vpop.f32.mrf.mxu0
    %v1110 = vpop.f32.mrf.mxu0
    %1111 = vdwg.mxu0
    %v1113 = vsel %vm784, %v878, 0
    %v1116 = vsel %vm884, %v412, 0
    %1118 = vmatprep.subr.bf16.mxu0 0
    %1119 = vmatpush1.bf16.msra.mxu0 0
    %1120 = vmatprep.subr.bf16.mxu0 0
    %1121 = vmatpush1.bf16.msra.mxu0 0
    %1122 = vmatprep.subr.bf16.mxu0 0
    %1123 = vmatpush1.bf16.msra.mxu0 0
    %1124 = vmatprep.subr.bf16.mxu0 0
    %1125 = vmatpush1.bf16.msra.mxu0 0
    %1126 = vmatprep.subr.bf16.mxu0 0
    %1127 = vmatpush1.bf16.msra.mxu0 0
    %1128 = vmatprep.subr.bf16.mxu0 0
    %1129 = vmatpush1.bf16.msra.mxu0 0
    %1130 = vmatprep.subr.bf16.mxu0 0
    %1131 = vmatpush1.bf16.msra.mxu0 0
    %1132 = vmatprep.subr.bf16.mxu0 0
    %1133 = vmatpush1.bf16.msra.mxu0 %v1116
    %1134 = vmatprep.subr.bf16.mxu0 0
    %1135 = vmatpush2.bf16.msra.mxu0 0
    %1136 = vmatprep.subr.bf16.mxu0 0
    %1137 = vmatpush2.bf16.msra.mxu0 0
    %1138 = vmatprep.subr.bf16.mxu0 0
    %1139 = vmatpush2.bf16.msra.mxu0 0
    %1140 = vmatprep.subr.bf16.mxu0 0
    %1141 = vmatpush2.bf16.msra.mxu0 0
    %1142 = vmatprep.subr.bf16.mxu0 0
    %1143 = vmatpush2.bf16.msra.mxu0 0
    %1144 = vmatprep.subr.bf16.mxu0 0
    %1145 = vmatpush2.bf16.msra.mxu0 0
    %1146 = vmatprep.subr.bf16.mxu0 0
    %1147 = vmatpush2.bf16.msra.mxu0 0
    %1148 = vmatprep.subr.bf16.mxu0 0
    %1149 = vmatpush2.bf16.msra.mxu0 0
    %1150 = vmatprep.mubr.bf16.mxu0 0
    %1151 = vmatmul.mubr.bf16.gmra.mxu0 %v1113
    %v1152 = vpop.f32.mrf.mxu0
    %v1153 = vadd.f32 0.0, %v1152
    %v1154 = vpop.f32.mrf.mxu0
    %v1155 = vpop.f32.mrf.mxu0
    %v1156 = vpop.f32.mrf.mxu0
    %1157 = vdwg.mxu0
    %v1159 = vsel %vm784, %v879, 0
    %v1162 = vsel %vm884, %v413, 0
    %1164 = vmatprep.subr.bf16.mxu0 0
    %1165 = vmatpush1.bf16.msra.mxu0 0
    %1166 = vmatprep.subr.bf16.mxu0 0
    %1167 = vmatpush1.bf16.msra.mxu0 0
    %1168 = vmatprep.subr.bf16.mxu0 0
    %1169 = vmatpush1.bf16.msra.mxu0 0
    %1170 = vmatprep.subr.bf16.mxu0 0
    %1171 = vmatpush1.bf16.msra.mxu0 0
    %1172 = vmatprep.subr.bf16.mxu0 0
    %1173 = vmatpush1.bf16.msra.mxu0 0
    %1174 = vmatprep.subr.bf16.mxu0 0
    %1175 = vmatpush1.bf16.msra.mxu0 0
    %1176 = vmatprep.subr.bf16.mxu0 0
    %1177 = vmatpush1.bf16.msra.mxu0 0
    %1178 = vmatprep.subr.bf16.mxu0 0
    %1179 = vmatpush1.bf16.msra.mxu0 %v1162
    %1180 = vmatprep.subr.bf16.mxu0 0
    %1181 = vmatpush2.bf16.msra.mxu0 0
    %1182 = vmatprep.subr.bf16.mxu0 0
    %1183 = vmatpush2.bf16.msra.mxu0 0
    %1184 = vmatprep.subr.bf16.mxu0 0
    %1185 = vmatpush2.bf16.msra.mxu0 0
    %1186 = vmatprep.subr.bf16.mxu0 0
    %1187 = vmatpush2.bf16.msra.mxu0 0
    %1188 = vmatprep.subr.bf16.mxu0 0
    %1189 = vmatpush2.bf16.msra.mxu0 0
    %1190 = vmatprep.subr.bf16.mxu0 0
    %1191 = vmatpush2.bf16.msra.mxu0 0
    %1192 = vmatprep.subr.bf16.mxu0 0
    %1193 = vmatpush2.bf16.msra.mxu0 0
    %1194 = vmatprep.subr.bf16.mxu0 0
    %1195 = vmatpush2.bf16.msra.mxu0 0
    %1196 = vmatprep.mubr.bf16.mxu0 0
    %1197 = vmatmul.mubr.bf16.gmra.mxu0 %v1159
    %v1198 = vpop.f32.mrf.mxu0
    %v1199 = vadd.f32 0.0, %v1198
    %v1200 = vpop.f32.mrf.mxu0
    %v1201 = vpop.f32.mrf.mxu0
    %v1202 = vpop.f32.mrf.mxu0
    %1203 = vdwg.mxu0
    %v1205 = vsel %vm784, %v880, 0
    %v1208 = vsel %vm884, %v414, 0
    %1210 = vmatprep.subr.bf16.mxu0 0
    %1211 = vmatpush1.bf16.msra.mxu0 0
    %1212 = vmatprep.subr.bf16.mxu0 0
    %1213 = vmatpush1.bf16.msra.mxu0 0
    %1214 = vmatprep.subr.bf16.mxu0 0
    %1215 = vmatpush1.bf16.msra.mxu0 0
    %1216 = vmatprep.subr.bf16.mxu0 0
    %1217 = vmatpush1.bf16.msra.mxu0 0
    %1218 = vmatprep.subr.bf16.mxu0 0
    %1219 = vmatpush1.bf16.msra.mxu0 0
    %1220 = vmatprep.subr.bf16.mxu0 0
    %1221 = vmatpush1.bf16.msra.mxu0 0
    %1222 = vmatprep.subr.bf16.mxu0 0
    %1223 = vmatpush1.bf16.msra.mxu0 0
    %1224 = vmatprep.subr.bf16.mxu0 0
    %1225 = vmatpush1.bf16.msra.mxu0 %v1208
    %1226 = vmatprep.subr.bf16.mxu0 0
    %1227 = vmatpush2.bf16.msra.mxu0 0
    %1228 = vmatprep.subr.bf16.mxu0 0
    %1229 = vmatpush2.bf16.msra.mxu0 0
    %1230 = vmatprep.subr.bf16.mxu0 0
    %1231 = vmatpush2.bf16.msra.mxu0 0
    %1232 = vmatprep.subr.bf16.mxu0 0
    %1233 = vmatpush2.bf16.msra.mxu0 0
    %1234 = vmatprep.subr.bf16.mxu0 0
    %1235 = vmatpush2.bf16.msra.mxu0 0
    %1236 = vmatprep.subr.bf16.mxu0 0
    %1237 = vmatpush2.bf16.msra.mxu0 0
    %1238 = vmatprep.subr.bf16.mxu0 0
    %1239 = vmatpush2.bf16.msra.mxu0 0
    %1240 = vmatprep.subr.bf16.mxu0 0
    %1241 = vmatpush2.bf16.msra.mxu0 0
    %1242 = vmatprep.mubr.bf16.mxu0 0
    %1243 = vmatmul.mubr.bf16.gmra.mxu0 %v1205
    %v1244 = vpop.f32.mrf.mxu0
    %v1245 = vadd.f32 0.0, %v1244
    %v1246 = vpop.f32.mrf.mxu0
    %v1247 = vpop.f32.mrf.mxu0
    %v1248 = vpop.f32.mrf.mxu0
    %1249 = vdwg.mxu0
    %v1250 = vpack.c.bf16 %v969, %v923
    %v1251 = vpack.c.bf16 %v1061, %v1015
    %v1252 = vpack.c.bf16 %v1153, %v1107
    %v1253 = vpack.c.bf16 %v1245, %v1199
    %v1254 = vld [vmem:[#allocation2 + $0xc] sm:$0xf]
    %v1255 = vld [vmem:[#allocation2 + $0x24] sm:$0xf]
    %v1256 = vld [vmem:[#allocation2 + $0x3c] sm:$0xf]
    %v1257 = vld [vmem:[#allocation2 + $0x54] sm:$0xf]
    %1259 = vrot.lane.b32.xlu0 %v391, 96
    %v1260 = vpop.permute.xlu0 %1259
    %1262 = vrot.lane.b32.xlu0 %v399, 96
    %v1263 = vpop.permute.xlu0 %1262
    %v1265 = vsel %vm415, %v1260, 0
    %v1268 = vsel %vm415, %v1263, 0
    %1270 = vmatprep.subr.bf16.mxu0 0
    %1271 = vmatpush1.bf16.xpose.msra.mxu0 0
    %1272 = vmatprep.subr.bf16.mxu0 0
    %1273 = vmatpush1.bf16.xpose.msra.mxu0 0
    %1274 = vmatprep.subr.bf16.mxu0 0
    %1275 = vmatpush1.bf16.xpose.msra.mxu0 0
    %1276 = vmatprep.subr.bf16.mxu0 0
    %1277 = vmatpush1.bf16.xpose.msra.mxu0 0
    %1278 = vmatprep.subr.bf16.mxu0 0
    %1279 = vmatpush1.bf16.xpose.msra.mxu0 0
    %1280 = vmatprep.subr.bf16.mxu0 0
    %1281 = vmatpush1.bf16.xpose.msra.mxu0 0
    %1282 = vmatprep.subr.bf16.mxu0 0
    %1283 = vmatpush1.bf16.xpose.msra.mxu0 0
    %1284 = vmatprep.subr.bf16.mxu0 0
    %1285 = vmatpush1.bf16.xpose.msra.mxu0 %v1268
    %1286 = vmatprep.subr.bf16.mxu0 0
    %1287 = vmatpush2.bf16.xpose.msra.mxu0 0
    %1288 = vmatprep.subr.bf16.mxu0 0
    %1289 = vmatpush2.bf16.xpose.msra.mxu0 0
    %1290 = vmatprep.subr.bf16.mxu0 0
    %1291 = vmatpush2.bf16.xpose.msra.mxu0 0
    %1292 = vmatprep.subr.bf16.mxu0 0
    %1293 = vmatpush2.bf16.xpose.msra.mxu0 0
    %1294 = vmatprep.subr.bf16.mxu0 0
    %1295 = vmatpush2.bf16.xpose.msra.mxu0 0
    %1296 = vmatprep.subr.bf16.mxu0 0
    %1297 = vmatpush2.bf16.xpose.msra.mxu0 0
    %1298 = vmatprep.subr.bf16.mxu0 0
    %1299 = vmatpush2.bf16.xpose.msra.mxu0 0
    %1300 = vmatprep.subr.bf16.mxu0 0
    %1301 = vmatpush2.bf16.xpose.msra.mxu0 0
    %1302 = vmatprep.mubr.bf16.mxu0 0
    %1303 = vmatmul.mubr.bf16.gmra.mxu0 %v1265
    %v1304 = vpop.f32.mrf.mxu0
    %v1305 = vadd.f32 %v390, %v1304
    %v1306 = vpop.f32.mrf.mxu0
    %v1307 = vpop.f32.mrf.mxu0
    %v1308 = vpop.f32.mrf.mxu0
    %1309 = vdwg.mxu0
    %1311 = vrot.lane.b32.xlu0 %v392, 96
    %v1312 = vpop.permute.xlu0 %1311
    %1314 = vrot.lane.b32.xlu0 %v400, 96
    %v1315 = vpop.permute.xlu0 %1314
    %v1317 = vsel %vm415, %v1312, 0
    %v1320 = vsel %vm415, %v1315, 0
    %1322 = vmatprep.subr.bf16.mxu0 0
    %1323 = vmatpush1.bf16.xpose.msra.mxu0 0
    %1324 = vmatprep.subr.bf16.mxu0 0
    %1325 = vmatpush1.bf16.xpose.msra.mxu0 0
    %1326 = vmatprep.subr.bf16.mxu0 0
    %1327 = vmatpush1.bf16.xpose.msra.mxu0 0
    %1328 = vmatprep.subr.bf16.mxu0 0
    %1329 = vmatpush1.bf16.xpose.msra.mxu0 0
    %1330 = vmatprep.subr.bf16.mxu0 0
    %1331 = vmatpush1.bf16.xpose.msra.mxu0 0
    %1332 = vmatprep.subr.bf16.mxu0 0
    %1333 = vmatpush1.bf16.xpose.msra.mxu0 0
    %1334 = vmatprep.subr.bf16.mxu0 0
    %1335 = vmatpush1.bf16.xpose.msra.mxu0 0
    %1336 = vmatprep.subr.bf16.mxu0 0
    %1337 = vmatpush1.bf16.xpose.msra.mxu0 %v1320
    %1338 = vmatprep.subr.bf16.mxu0 0
    %1339 = vmatpush2.bf16.xpose.msra.mxu0 0
    %1340 = vmatprep.subr.bf16.mxu0 0
    %1341 = vmatpush2.bf16.xpose.msra.mxu0 0
    %1342 = vmatprep.subr.bf16.mxu0 0
    %1343 = vmatpush2.bf16.xpose.msra.mxu0 0
    %1344 = vmatprep.subr.bf16.mxu0 0
    %1345 = vmatpush2.bf16.xpose.msra.mxu0 0
    %1346 = vmatprep.subr.bf16.mxu0 0
    %1347 = vmatpush2.bf16.xpose.msra.mxu0 0
    %1348 = vmatprep.subr.bf16.mxu0 0
    %1349 = vmatpush2.bf16.xpose.msra.mxu0 0
    %1350 = vmatprep.subr.bf16.mxu0 0
    %1351 = vmatpush2.bf16.xpose.msra.mxu0 0
    %1352 = vmatprep.subr.bf16.mxu0 0
    %1353 = vmatpush2.bf16.xpose.msra.mxu0 0
    %1354 = vmatprep.mubr.bf16.mxu0 0
    %1355 = vmatmul.mubr.bf16.gmra.mxu0 %v1317
    %v1356 = vpop.f32.mrf.mxu0
    %v1357 = vadd.f32 %v390, %v1356
    %v1358 = vpop.f32.mrf.mxu0
    %v1359 = vpop.f32.mrf.mxu0
    %v1360 = vpop.f32.mrf.mxu0
    %1361 = vdwg.mxu0
    %1363 = vrot.lane.b32.xlu0 %v393, 96
    %v1364 = vpop.permute.xlu0 %1363
    %1366 = vrot.lane.b32.xlu0 %v401, 96
    %v1367 = vpop.permute.xlu0 %1366
    %v1369 = vsel %vm415, %v1364, 0
    %v1372 = vsel %vm415, %v1367, 0
    %1374 = vmatprep.subr.bf16.mxu0 0
    %1375 = vmatpush1.bf16.xpose.msra.mxu0 0
    %1376 = vmatprep.subr.bf16.mxu0 0
    %1377 = vmatpush1.bf16.xpose.msra.mxu0 0
    %1378 = vmatprep.subr.bf16.mxu0 0
    %1379 = vmatpush1.bf16.xpose.msra.mxu0 0
    %1380 = vmatprep.subr.bf16.mxu0 0
    %1381 = vmatpush1.bf16.xpose.msra.mxu0 0
    %1382 = vmatprep.subr.bf16.mxu0 0
    %1383 = vmatpush1.bf16.xpose.msra.mxu0 0
    %1384 = vmatprep.subr.bf16.mxu0 0
    %1385 = vmatpush1.bf16.xpose.msra.mxu0 0
    %1386 = vmatprep.subr.bf16.mxu0 0
    %1387 = vmatpush1.bf16.xpose.msra.mxu0 0
    %1388 = vmatprep.subr.bf16.mxu0 0
    %1389 = vmatpush1.bf16.xpose.msra.mxu0 %v1372
    %1390 = vmatprep.subr.bf16.mxu0 0
    %1391 = vmatpush2.bf16.xpose.msra.mxu0 0
    %1392 = vmatprep.subr.bf16.mxu0 0
    %1393 = vmatpush2.bf16.xpose.msra.mxu0 0
    %1394 = vmatprep.subr.bf16.mxu0 0
    %1395 = vmatpush2.bf16.xpose.msra.mxu0 0
    %1396 = vmatprep.subr.bf16.mxu0 0
    %1397 = vmatpush2.bf16.xpose.msra.mxu0 0
    %1398 = vmatprep.subr.bf16.mxu0 0
    %1399 = vmatpush2.bf16.xpose.msra.mxu0 0
    %1400 = vmatprep.subr.bf16.mxu0 0
    %1401 = vmatpush2.bf16.xpose.msra.mxu0 0
    %1402 = vmatprep.subr.bf16.mxu0 0
    %1403 = vmatpush2.bf16.xpose.msra.mxu0 0
    %1404 = vmatprep.subr.bf16.mxu0 0
    %1405 = vmatpush2.bf16.xpose.msra.mxu0 0
    %1406 = vmatprep.mubr.bf16.mxu0 0
    %1407 = vmatmul.mubr.bf16.gmra.mxu0 %v1369
    %v1408 = vpop.f32.mrf.mxu0
    %v1409 = vadd.f32 %v390, %v1408
    %v1410 = vpop.f32.mrf.mxu0
    %v1411 = vpop.f32.mrf.mxu0
    %v1412 = vpop.f32.mrf.mxu0
    %1413 = vdwg.mxu0
    %1415 = vrot.lane.b32.xlu0 %v394, 96
    %v1416 = vpop.permute.xlu0 %1415
    %1418 = vrot.lane.b32.xlu0 %v402, 96
    %v1419 = vpop.permute.xlu0 %1418
    %v1421 = vsel %vm415, %v1416, 0
    %v1424 = vsel %vm415, %v1419, 0
    %1426 = vmatprep.subr.bf16.mxu0 0
    %1427 = vmatpush1.bf16.xpose.msra.mxu0 0
    %1428 = vmatprep.subr.bf16.mxu0 0
    %1429 = vmatpush1.bf16.xpose.msra.mxu0 0
    %1430 = vmatprep.subr.bf16.mxu0 0
    %1431 = vmatpush1.bf16.xpose.msra.mxu0 0
    %1432 = vmatprep.subr.bf16.mxu0 0
    %1433 = vmatpush1.bf16.xpose.msra.mxu0 0
    %1434 = vmatprep.subr.bf16.mxu0 0
    %1435 = vmatpush1.bf16.xpose.msra.mxu0 0
    %1436 = vmatprep.subr.bf16.mxu0 0
    %1437 = vmatpush1.bf16.xpose.msra.mxu0 0
    %1438 = vmatprep.subr.bf16.mxu0 0
    %1439 = vmatpush1.bf16.xpose.msra.mxu0 0
    %1440 = vmatprep.subr.bf16.mxu0 0
    %1441 = vmatpush1.bf16.xpose.msra.mxu0 %v1424
    %1442 = vmatprep.subr.bf16.mxu0 0
    %1443 = vmatpush2.bf16.xpose.msra.mxu0 0
    %1444 = vmatprep.subr.bf16.mxu0 0
    %1445 = vmatpush2.bf16.xpose.msra.mxu0 0
    %1446 = vmatprep.subr.bf16.mxu0 0
    %1447 = vmatpush2.bf16.xpose.msra.mxu0 0
    %1448 = vmatprep.subr.bf16.mxu0 0
    %1449 = vmatpush2.bf16.xpose.msra.mxu0 0
    %1450 = vmatprep.subr.bf16.mxu0 0
    %1451 = vmatpush2.bf16.xpose.msra.mxu0 0
    %1452 = vmatprep.subr.bf16.mxu0 0
    %1453 = vmatpush2.bf16.xpose.msra.mxu0 0
    %1454 = vmatprep.subr.bf16.mxu0 0
    %1455 = vmatpush2.bf16.xpose.msra.mxu0 0
    %1456 = vmatprep.subr.bf16.mxu0 0
    %1457 = vmatpush2.bf16.xpose.msra.mxu0 0
    %1458 = vmatprep.mubr.bf16.mxu0 0
    %1459 = vmatmul.mubr.bf16.gmra.mxu0 %v1421
    %v1460 = vpop.f32.mrf.mxu0
    %v1461 = vadd.f32 %v390, %v1460
    %v1462 = vpop.f32.mrf.mxu0
    %v1463 = vpop.f32.mrf.mxu0
    %v1464 = vpop.f32.mrf.mxu0
    %1465 = vdwg.mxu0
    %1467 = vrot.lane.b32.xlu0 %v395, 96
    %v1468 = vpop.permute.xlu0 %1467
    %1470 = vrot.lane.b32.xlu0 %v403, 96
    %v1471 = vpop.permute.xlu0 %1470
    %v1473 = vsel %vm415, %v1468, 0
    %v1476 = vsel %vm415, %v1471, 0
    %1478 = vmatprep.subr.bf16.mxu0 0
    %1479 = vmatpush1.bf16.xpose.msra.mxu0 0
    %1480 = vmatprep.subr.bf16.mxu0 0
    %1481 = vmatpush1.bf16.xpose.msra.mxu0 0
    %1482 = vmatprep.subr.bf16.mxu0 0
    %1483 = vmatpush1.bf16.xpose.msra.mxu0 0
    %1484 = vmatprep.subr.bf16.mxu0 0
    %1485 = vmatpush1.bf16.xpose.msra.mxu0 0
    %1486 = vmatprep.subr.bf16.mxu0 0
    %1487 = vmatpush1.bf16.xpose.msra.mxu0 0
    %1488 = vmatprep.subr.bf16.mxu0 0
    %1489 = vmatpush1.bf16.xpose.msra.mxu0 0
    %1490 = vmatprep.subr.bf16.mxu0 0
    %1491 = vmatpush1.bf16.xpose.msra.mxu0 0
    %1492 = vmatprep.subr.bf16.mxu0 0
    %1493 = vmatpush1.bf16.xpose.msra.mxu0 %v1476
    %1494 = vmatprep.subr.bf16.mxu0 0
    %1495 = vmatpush2.bf16.xpose.msra.mxu0 0
    %1496 = vmatprep.subr.bf16.mxu0 0
    %1497 = vmatpush2.bf16.xpose.msra.mxu0 0
    %1498 = vmatprep.subr.bf16.mxu0 0
    %1499 = vmatpush2.bf16.xpose.msra.mxu0 0
    %1500 = vmatprep.subr.bf16.mxu0 0
    %1501 = vmatpush2.bf16.xpose.msra.mxu0 0
    %1502 = vmatprep.subr.bf16.mxu0 0
    %1503 = vmatpush2.bf16.xpose.msra.mxu0 0
    %1504 = vmatprep.subr.bf16.mxu0 0
    %1505 = vmatpush2.bf16.xpose.msra.mxu0 0
    %1506 = vmatprep.subr.bf16.mxu0 0
    %1507 = vmatpush2.bf16.xpose.msra.mxu0 0
    %1508 = vmatprep.subr.bf16.mxu0 0
    %1509 = vmatpush2.bf16.xpose.msra.mxu0 0
    %1510 = vmatprep.mubr.bf16.mxu0 0
    %1511 = vmatmul.mubr.bf16.gmra.mxu0 %v1473
    %v1512 = vpop.f32.mrf.mxu0
    %v1513 = vadd.f32 %v390, %v1512
    %v1514 = vpop.f32.mrf.mxu0
    %v1515 = vpop.f32.mrf.mxu0
    %v1516 = vpop.f32.mrf.mxu0
    %1517 = vdwg.mxu0
    %1519 = vrot.lane.b32.xlu0 %v396, 96
    %v1520 = vpop.permute.xlu0 %1519
    %1522 = vrot.lane.b32.xlu0 %v404, 96
    %v1523 = vpop.permute.xlu0 %1522
    %v1525 = vsel %vm415, %v1520, 0
    %v1528 = vsel %vm415, %v1523, 0
    %1530 = vmatprep.subr.bf16.mxu0 0
    %1531 = vmatpush1.bf16.xpose.msra.mxu0 0
    %1532 = vmatprep.subr.bf16.mxu0 0
    %1533 = vmatpush1.bf16.xpose.msra.mxu0 0
    %1534 = vmatprep.subr.bf16.mxu0 0
    %1535 = vmatpush1.bf16.xpose.msra.mxu0 0
    %1536 = vmatprep.subr.bf16.mxu0 0
    %1537 = vmatpush1.bf16.xpose.msra.mxu0 0
    %1538 = vmatprep.subr.bf16.mxu0 0
    %1539 = vmatpush1.bf16.xpose.msra.mxu0 0
    %1540 = vmatprep.subr.bf16.mxu0 0
    %1541 = vmatpush1.bf16.xpose.msra.mxu0 0
    %1542 = vmatprep.subr.bf16.mxu0 0
    %1543 = vmatpush1.bf16.xpose.msra.mxu0 0
    %1544 = vmatprep.subr.bf16.mxu0 0
    %1545 = vmatpush1.bf16.xpose.msra.mxu0 %v1528
    %1546 = vmatprep.subr.bf16.mxu0 0
    %1547 = vmatpush2.bf16.xpose.msra.mxu0 0
    %1548 = vmatprep.subr.bf16.mxu0 0
    %1549 = vmatpush2.bf16.xpose.msra.mxu0 0
    %1550 = vmatprep.subr.bf16.mxu0 0
    %1551 = vmatpush2.bf16.xpose.msra.mxu0 0
    %1552 = vmatprep.subr.bf16.mxu0 0
    %1553 = vmatpush2.bf16.xpose.msra.mxu0 0
    %1554 = vmatprep.subr.bf16.mxu0 0
    %1555 = vmatpush2.bf16.xpose.msra.mxu0 0
    %1556 = vmatprep.subr.bf16.mxu0 0
    %1557 = vmatpush2.bf16.xpose.msra.mxu0 0
    %1558 = vmatprep.subr.bf16.mxu0 0
    %1559 = vmatpush2.bf16.xpose.msra.mxu0 0
    %1560 = vmatprep.subr.bf16.mxu0 0
    %1561 = vmatpush2.bf16.xpose.msra.mxu0 0
    %1562 = vmatprep.mubr.bf16.mxu0 0
    %1563 = vmatmul.mubr.bf16.gmra.mxu0 %v1525
    %v1564 = vpop.f32.mrf.mxu0
    %v1565 = vadd.f32 %v390, %v1564
    %v1566 = vpop.f32.mrf.mxu0
    %v1567 = vpop.f32.mrf.mxu0
    %v1568 = vpop.f32.mrf.mxu0
    %1569 = vdwg.mxu0
    %1571 = vrot.lane.b32.xlu0 %v397, 96
    %v1572 = vpop.permute.xlu0 %1571
    %1574 = vrot.lane.b32.xlu0 %v405, 96
    %v1575 = vpop.permute.xlu0 %1574
    %v1577 = vsel %vm415, %v1572, 0
    %v1580 = vsel %vm415, %v1575, 0
    %1582 = vmatprep.subr.bf16.mxu0 0
    %1583 = vmatpush1.bf16.xpose.msra.mxu0 0
    %1584 = vmatprep.subr.bf16.mxu0 0
    %1585 = vmatpush1.bf16.xpose.msra.mxu0 0
    %1586 = vmatprep.subr.bf16.mxu0 0
    %1587 = vmatpush1.bf16.xpose.msra.mxu0 0
    %1588 = vmatprep.subr.bf16.mxu0 0
    %1589 = vmatpush1.bf16.xpose.msra.mxu0 0
    %1590 = vmatprep.subr.bf16.mxu0 0
    %1591 = vmatpush1.bf16.xpose.msra.mxu0 0
    %1592 = vmatprep.subr.bf16.mxu0 0
    %1593 = vmatpush1.bf16.xpose.msra.mxu0 0
    %1594 = vmatprep.subr.bf16.mxu0 0
    %1595 = vmatpush1.bf16.xpose.msra.mxu0 0
    %1596 = vmatprep.subr.bf16.mxu0 0
    %1597 = vmatpush1.bf16.xpose.msra.mxu0 %v1580
    %1598 = vmatprep.subr.bf16.mxu0 0
    %1599 = vmatpush2.bf16.xpose.msra.mxu0 0
    %1600 = vmatprep.subr.bf16.mxu0 0
    %1601 = vmatpush2.bf16.xpose.msra.mxu0 0
    %1602 = vmatprep.subr.bf16.mxu0 0
    %1603 = vmatpush2.bf16.xpose.msra.mxu0 0
    %1604 = vmatprep.subr.bf16.mxu0 0
    %1605 = vmatpush2.bf16.xpose.msra.mxu0 0
    %1606 = vmatprep.subr.bf16.mxu0 0
    %1607 = vmatpush2.bf16.xpose.msra.mxu0 0
    %1608 = vmatprep.subr.bf16.mxu0 0
    %1609 = vmatpush2.bf16.xpose.msra.mxu0 0
    %1610 = vmatprep.subr.bf16.mxu0 0
    %1611 = vmatpush2.bf16.xpose.msra.mxu0 0
    %1612 = vmatprep.subr.bf16.mxu0 0
    %1613 = vmatpush2.bf16.xpose.msra.mxu0 0
    %1614 = vmatprep.mubr.bf16.mxu0 0
    %1615 = vmatmul.mubr.bf16.gmra.mxu0 %v1577
    %v1616 = vpop.f32.mrf.mxu0
    %v1617 = vadd.f32 %v390, %v1616
    %v1618 = vpop.f32.mrf.mxu0
    %v1619 = vpop.f32.mrf.mxu0
    %v1620 = vpop.f32.mrf.mxu0
    %1621 = vdwg.mxu0
    %1623 = vrot.lane.b32.xlu0 %v398, 96
    %v1624 = vpop.permute.xlu0 %1623
    %1626 = vrot.lane.b32.xlu0 %v406, 96
    %v1627 = vpop.permute.xlu0 %1626
    %v1629 = vsel %vm415, %v1624, 0
    %v1632 = vsel %vm415, %v1627, 0
    %1634 = vmatprep.subr.bf16.mxu0 0
    %1635 = vmatpush1.bf16.xpose.msra.mxu0 0
    %1636 = vmatprep.subr.bf16.mxu0 0
    %1637 = vmatpush1.bf16.xpose.msra.mxu0 0
    %1638 = vmatprep.subr.bf16.mxu0 0
    %1639 = vmatpush1.bf16.xpose.msra.mxu0 0
    %1640 = vmatprep.subr.bf16.mxu0 0
    %1641 = vmatpush1.bf16.xpose.msra.mxu0 0
    %1642 = vmatprep.subr.bf16.mxu0 0
    %1643 = vmatpush1.bf16.xpose.msra.mxu0 0
    %1644 = vmatprep.subr.bf16.mxu0 0
    %1645 = vmatpush1.bf16.xpose.msra.mxu0 0
    %1646 = vmatprep.subr.bf16.mxu0 0
    %1647 = vmatpush1.bf16.xpose.msra.mxu0 0
    %1648 = vmatprep.subr.bf16.mxu0 0
    %1649 = vmatpush1.bf16.xpose.msra.mxu0 %v1632
    %1650 = vmatprep.subr.bf16.mxu0 0
    %1651 = vmatpush2.bf16.xpose.msra.mxu0 0
    %1652 = vmatprep.subr.bf16.mxu0 0
    %1653 = vmatpush2.bf16.xpose.msra.mxu0 0
    %1654 = vmatprep.subr.bf16.mxu0 0
    %1655 = vmatpush2.bf16.xpose.msra.mxu0 0
    %1656 = vmatprep.subr.bf16.mxu0 0
    %1657 = vmatpush2.bf16.xpose.msra.mxu0 0
    %1658 = vmatprep.subr.bf16.mxu0 0
    %1659 = vmatpush2.bf16.xpose.msra.mxu0 0
    %1660 = vmatprep.subr.bf16.mxu0 0
    %1661 = vmatpush2.bf16.xpose.msra.mxu0 0
    %1662 = vmatprep.subr.bf16.mxu0 0
    %1663 = vmatpush2.bf16.xpose.msra.mxu0 0
    %1664 = vmatprep.subr.bf16.mxu0 0
    %1665 = vmatpush2.bf16.xpose.msra.mxu0 0
    %1666 = vmatprep.mubr.bf16.mxu0 0
    %1667 = vmatmul.mubr.bf16.gmra.mxu0 %v1629
    %v1668 = vpop.f32.mrf.mxu0
    %v1669 = vadd.f32 %v390, %v1668
    %v1670 = vpop.f32.mrf.mxu0
    %v1671 = vpop.f32.mrf.mxu0
    %v1672 = vpop.f32.mrf.mxu0
    %1673 = vdwg.mxu0
    %v1674 = vsel %vm784, %v1305, -inf
    %1675 = vmax.xlane.f32.xlu0 %v1674
    %v1676 = vpop.xlane.xlu0 %1675
    %v1677 = vsel %vm784, %v1357, -inf
    %1678 = vmax.xlane.f32.xlu0 %v1677
    %v1679 = vpop.xlane.xlu0 %1678
    %v1680 = vsel %vm784, %v1409, -inf
    %1681 = vmax.xlane.f32.xlu0 %v1680
    %v1682 = vpop.xlane.xlu0 %1681
    %v1683 = vsel %vm784, %v1461, -inf
    %1684 = vmax.xlane.f32.xlu0 %v1683
    %v1685 = vpop.xlane.xlu0 %1684
    %v1686 = vsel %vm784, %v1513, -inf
    %1687 = vmax.xlane.f32.xlu0 %v1686
    %v1688 = vpop.xlane.xlu0 %1687
    %v1689 = vsel %vm784, %v1565, -inf
    %1690 = vmax.xlane.f32.xlu0 %v1689
    %v1691 = vpop.xlane.xlu0 %1690
    %v1692 = vsel %vm784, %v1617, -inf
    %1693 = vmax.xlane.f32.xlu0 %v1692
    %v1694 = vpop.xlane.xlu0 %1693
    %v1695 = vsel %vm784, %v1669, -inf
    %1696 = vmax.xlane.f32.xlu0 %v1695
    %v1697 = vpop.xlane.xlu0 %1696
    %v1698 = vsub.f32 %v1305, %v1676
    %v1699 = vsub.f32 %v1357, %v1679
    %v1700 = vsub.f32 %v1409, %v1682
    %v1701 = vsub.f32 %v1461, %v1685
    %v1702 = vsub.f32 %v1513, %v1688
    %v1703 = vsub.f32 %v1565, %v1691
    %v1704 = vsub.f32 %v1617, %v1694
    %v1705 = vsub.f32 %v1669, %v1697
    %v1706 = vmul.f32 %v1698, 1.442695
    %v1707 = vpow.pop %v1706
    %v1708 = vmul.f32 %v1699, 1.442695
    %v1709 = vpow.pop %v1708
    %v1710 = vmul.f32 %v1700, 1.442695
    %v1711 = vpow.pop %v1710
    %v1712 = vmul.f32 %v1701, 1.442695
    %v1713 = vpow.pop %v1712
    %v1714 = vmul.f32 %v1702, 1.442695
    %v1715 = vpow.pop %v1714
    %v1716 = vmul.f32 %v1703, 1.442695
    %v1717 = vpow.pop %v1716
    %v1718 = vmul.f32 %v1704, 1.442695
    %v1719 = vpow.pop %v1718
    %v1720 = vmul.f32 %v1705, 1.442695
    %v1721 = vpow.pop %v1720
    %v1722 = vsel %vm784, %v1707, 0.0
    %1723 = vadd.xlane.f32.xlu0 %v1722
    %v1724 = vpop.xlane.xlu0 %1723
    %v1725 = vsel %vm784, %v1709, 0.0
    %1726 = vadd.xlane.f32.xlu0 %v1725
    %v1727 = vpop.xlane.xlu0 %1726
    %v1728 = vsel %vm784, %v1711, 0.0
    %1729 = vadd.xlane.f32.xlu0 %v1728
    %v1730 = vpop.xlane.xlu0 %1729
    %v1731 = vsel %vm784, %v1713, 0.0
    %1732 = vadd.xlane.f32.xlu0 %v1731
    %v1733 = vpop.xlane.xlu0 %1732
    %v1734 = vsel %vm784, %v1715, 0.0
    %1735 = vadd.xlane.f32.xlu0 %v1734
    %v1736 = vpop.xlane.xlu0 %1735
    %v1737 = vsel %vm784, %v1717, 0.0
    %1738 = vadd.xlane.f32.xlu0 %v1737
    %v1739 = vpop.xlane.xlu0 %1738
    %v1740 = vsel %vm784, %v1719, 0.0
    %1741 = vadd.xlane.f32.xlu0 %v1740
    %v1742 = vpop.xlane.xlu0 %1741
    %v1743 = vsel %vm784, %v1721, 0.0
    %1744 = vadd.xlane.f32.xlu0 %v1743
    %v1745 = vpop.xlane.xlu0 %1744
    %v1746 = vrcp.pop %v1724
    %v1747 = vrcp.pop %v1727
    %v1748 = vrcp.pop %v1730
    %v1749 = vrcp.pop %v1733
    %v1750 = vrcp.pop %v1736
    %v1751 = vrcp.pop %v1739
    %v1752 = vrcp.pop %v1742
    %v1753 = vrcp.pop %v1745
    %v1754 = vmul.f32 %v1707, %v1746
    %v1755 = vmul.f32 %v1709, %v1747
    %v1756 = vmul.f32 %v1711, %v1748
    %v1757 = vmul.f32 %v1713, %v1749
    %v1758 = vmul.f32 %v1715, %v1750
    %v1759 = vmul.f32 %v1717, %v1751
    %v1760 = vmul.f32 %v1719, %v1752
    %v1761 = vmul.f32 %v1721, %v1753
    %v1762 = vpack.c.bf16 %v1754, %v1754
    %v1763 = vpack.c.bf16 %v1755, %v1755
    %v1764 = vpack.c.bf16 %v1756, %v1756
    %v1765 = vpack.c.bf16 %v1757, %v1757
    %v1766 = vpack.c.bf16 %v1758, %v1758
    %v1767 = vpack.c.bf16 %v1759, %v1759
    %v1768 = vpack.c.bf16 %v1760, %v1760
    %v1769 = vpack.c.bf16 %v1761, %v1761
    %1771 = vrot.lane.b32.xlu0 %v407, 96
    %v1772 = vpop.permute.xlu0 %1771
    %v1774 = vsel %vm784, %v1762, 0
    %v1777 = vsel %vm884, %v1772, 0
    %1779 = vmatprep.subr.bf16.mxu0 0
    %1780 = vmatpush1.bf16.msra.mxu0 0
    %1781 = vmatprep.subr.bf16.mxu0 0
    %1782 = vmatpush1.bf16.msra.mxu0 0
    %1783 = vmatprep.subr.bf16.mxu0 0
    %1784 = vmatpush1.bf16.msra.mxu0 0
    %1785 = vmatprep.subr.bf16.mxu0 0
    %1786 = vmatpush1.bf16.msra.mxu0 0
    %1787 = vmatprep.subr.bf16.mxu0 0
    %1788 = vmatpush1.bf16.msra.mxu0 0
    %1789 = vmatprep.subr.bf16.mxu0 0
    %1790 = vmatpush1.bf16.msra.mxu0 0
    %1791 = vmatprep.subr.bf16.mxu0 0
    %1792 = vmatpush1.bf16.msra.mxu0 0
    %1793 = vmatprep.subr.bf16.mxu0 0
    %1794 = vmatpush1.bf16.msra.mxu0 %v1777
    %1795 = vmatprep.subr.bf16.mxu0 0
    %1796 = vmatpush2.bf16.msra.mxu0 0
    %1797 = vmatprep.subr.bf16.mxu0 0
    %1798 = vmatpush2.bf16.msra.mxu0 0
    %1799 = vmatprep.subr.bf16.mxu0 0
    %1800 = vmatpush2.bf16.msra.mxu0 0
    %1801 = vmatprep.subr.bf16.mxu0 0
    %1802 = vmatpush2.bf16.msra.mxu0 0
    %1803 = vmatprep.subr.bf16.mxu0 0
    %1804 = vmatpush2.bf16.msra.mxu0 0
    %1805 = vmatprep.subr.bf16.mxu0 0
    %1806 = vmatpush2.bf16.msra.mxu0 0
    %1807 = vmatprep.subr.bf16.mxu0 0
    %1808 = vmatpush2.bf16.msra.mxu0 0
    %1809 = vmatprep.subr.bf16.mxu0 0
    %1810 = vmatpush2.bf16.msra.mxu0 0
    %1811 = vmatprep.mubr.bf16.mxu0 0
    %1812 = vmatmul.mubr.bf16.gmra.mxu0 %v1774
    %v1813 = vpop.f32.mrf.mxu0
    %v1814 = vadd.f32 0.0, %v1813
    %v1815 = vpop.f32.mrf.mxu0
    %v1816 = vpop.f32.mrf.mxu0
    %v1817 = vpop.f32.mrf.mxu0
    %1818 = vdwg.mxu0
    %1820 = vrot.lane.b32.xlu0 %v408, 96
    %v1821 = vpop.permute.xlu0 %1820
    %v1823 = vsel %vm784, %v1763, 0
    %v1826 = vsel %vm884, %v1821, 0
    %1828 = vmatprep.subr.bf16.mxu0 0
    %1829 = vmatpush1.bf16.msra.mxu0 0
    %1830 = vmatprep.subr.bf16.mxu0 0
    %1831 = vmatpush1.bf16.msra.mxu0 0
    %1832 = vmatprep.subr.bf16.mxu0 0
    %1833 = vmatpush1.bf16.msra.mxu0 0
    %1834 = vmatprep.subr.bf16.mxu0 0
    %1835 = vmatpush1.bf16.msra.mxu0 0
    %1836 = vmatprep.subr.bf16.mxu0 0
    %1837 = vmatpush1.bf16.msra.mxu0 0
    %1838 = vmatprep.subr.bf16.mxu0 0
    %1839 = vmatpush1.bf16.msra.mxu0 0
    %1840 = vmatprep.subr.bf16.mxu0 0
    %1841 = vmatpush1.bf16.msra.mxu0 0
    %1842 = vmatprep.subr.bf16.mxu0 0
    %1843 = vmatpush1.bf16.msra.mxu0 %v1826
    %1844 = vmatprep.subr.bf16.mxu0 0
    %1845 = vmatpush2.bf16.msra.mxu0 0
    %1846 = vmatprep.subr.bf16.mxu0 0
    %1847 = vmatpush2.bf16.msra.mxu0 0
    %1848 = vmatprep.subr.bf16.mxu0 0
    %1849 = vmatpush2.bf16.msra.mxu0 0
    %1850 = vmatprep.subr.bf16.mxu0 0
    %1851 = vmatpush2.bf16.msra.mxu0 0
    %1852 = vmatprep.subr.bf16.mxu0 0
    %1853 = vmatpush2.bf16.msra.mxu0 0
    %1854 = vmatprep.subr.bf16.mxu0 0
    %1855 = vmatpush2.bf16.msra.mxu0 0
    %1856 = vmatprep.subr.bf16.mxu0 0
    %1857 = vmatpush2.bf16.msra.mxu0 0
    %1858 = vmatprep.subr.bf16.mxu0 0
    %1859 = vmatpush2.bf16.msra.mxu0 0
    %1860 = vmatprep.mubr.bf16.mxu0 0
    %1861 = vmatmul.mubr.bf16.gmra.mxu0 %v1823
    %v1862 = vpop.f32.mrf.mxu0
    %v1863 = vadd.f32 0.0, %v1862
    %v1864 = vpop.f32.mrf.mxu0
    %v1865 = vpop.f32.mrf.mxu0
    %v1866 = vpop.f32.mrf.mxu0
    %1867 = vdwg.mxu0
    %1869 = vrot.lane.b32.xlu0 %v409, 96
    %v1870 = vpop.permute.xlu0 %1869
    %v1872 = vsel %vm784, %v1764, 0
    %v1875 = vsel %vm884, %v1870, 0
    %1877 = vmatprep.subr.bf16.mxu0 0
    %1878 = vmatpush1.bf16.msra.mxu0 0
    %1879 = vmatprep.subr.bf16.mxu0 0
    %1880 = vmatpush1.bf16.msra.mxu0 0
    %1881 = vmatprep.subr.bf16.mxu0 0
    %1882 = vmatpush1.bf16.msra.mxu0 0
    %1883 = vmatprep.subr.bf16.mxu0 0
    %1884 = vmatpush1.bf16.msra.mxu0 0
    %1885 = vmatprep.subr.bf16.mxu0 0
    %1886 = vmatpush1.bf16.msra.mxu0 0
    %1887 = vmatprep.subr.bf16.mxu0 0
    %1888 = vmatpush1.bf16.msra.mxu0 0
    %1889 = vmatprep.subr.bf16.mxu0 0
    %1890 = vmatpush1.bf16.msra.mxu0 0
    %1891 = vmatprep.subr.bf16.mxu0 0
    %1892 = vmatpush1.bf16.msra.mxu0 %v1875
    %1893 = vmatprep.subr.bf16.mxu0 0
    %1894 = vmatpush2.bf16.msra.mxu0 0
    %1895 = vmatprep.subr.bf16.mxu0 0
    %1896 = vmatpush2.bf16.msra.mxu0 0
    %1897 = vmatprep.subr.bf16.mxu0 0
    %1898 = vmatpush2.bf16.msra.mxu0 0
    %1899 = vmatprep.subr.bf16.mxu0 0
    %1900 = vmatpush2.bf16.msra.mxu0 0
    %1901 = vmatprep.subr.bf16.mxu0 0
    %1902 = vmatpush2.bf16.msra.mxu0 0
    %1903 = vmatprep.subr.bf16.mxu0 0
    %1904 = vmatpush2.bf16.msra.mxu0 0
    %1905 = vmatprep.subr.bf16.mxu0 0
    %1906 = vmatpush2.bf16.msra.mxu0 0
    %1907 = vmatprep.subr.bf16.mxu0 0
    %1908 = vmatpush2.bf16.msra.mxu0 0
    %1909 = vmatprep.mubr.bf16.mxu0 0
    %1910 = vmatmul.mubr.bf16.gmra.mxu0 %v1872
    %v1911 = vpop.f32.mrf.mxu0
    %v1912 = vadd.f32 0.0, %v1911
    %v1913 = vpop.f32.mrf.mxu0
    %v1914 = vpop.f32.mrf.mxu0
    %v1915 = vpop.f32.mrf.mxu0
    %1916 = vdwg.mxu0
    %1918 = vrot.lane.b32.xlu0 %v410, 96
    %v1919 = vpop.permute.xlu0 %1918
    %v1921 = vsel %vm784, %v1765, 0
    %v1924 = vsel %vm884, %v1919, 0
    %1926 = vmatprep.subr.bf16.mxu0 0
    %1927 = vmatpush1.bf16.msra.mxu0 0
    %1928 = vmatprep.subr.bf16.mxu0 0
    %1929 = vmatpush1.bf16.msra.mxu0 0
    %1930 = vmatprep.subr.bf16.mxu0 0
    %1931 = vmatpush1.bf16.msra.mxu0 0
    %1932 = vmatprep.subr.bf16.mxu0 0
    %1933 = vmatpush1.bf16.msra.mxu0 0
    %1934 = vmatprep.subr.bf16.mxu0 0
    %1935 = vmatpush1.bf16.msra.mxu0 0
    %1936 = vmatprep.subr.bf16.mxu0 0
    %1937 = vmatpush1.bf16.msra.mxu0 0
    %1938 = vmatprep.subr.bf16.mxu0 0
    %1939 = vmatpush1.bf16.msra.mxu0 0
    %1940 = vmatprep.subr.bf16.mxu0 0
    %1941 = vmatpush1.bf16.msra.mxu0 %v1924
    %1942 = vmatprep.subr.bf16.mxu0 0
    %1943 = vmatpush2.bf16.msra.mxu0 0
    %1944 = vmatprep.subr.bf16.mxu0 0
    %1945 = vmatpush2.bf16.msra.mxu0 0
    %1946 = vmatprep.subr.bf16.mxu0 0
    %1947 = vmatpush2.bf16.msra.mxu0 0
    %1948 = vmatprep.subr.bf16.mxu0 0
    %1949 = vmatpush2.bf16.msra.mxu0 0
    %1950 = vmatprep.subr.bf16.mxu0 0
    %1951 = vmatpush2.bf16.msra.mxu0 0
    %1952 = vmatprep.subr.bf16.mxu0 0
    %1953 = vmatpush2.bf16.msra.mxu0 0
    %1954 = vmatprep.subr.bf16.mxu0 0
    %1955 = vmatpush2.bf16.msra.mxu0 0
    %1956 = vmatprep.subr.bf16.mxu0 0
    %1957 = vmatpush2.bf16.msra.mxu0 0
    %1958 = vmatprep.mubr.bf16.mxu0 0
    %1959 = vmatmul.mubr.bf16.gmra.mxu0 %v1921
    %v1960 = vpop.f32.mrf.mxu0
    %v1961 = vadd.f32 0.0, %v1960
    %v1962 = vpop.f32.mrf.mxu0
    %v1963 = vpop.f32.mrf.mxu0
    %v1964 = vpop.f32.mrf.mxu0
    %1965 = vdwg.mxu0
    %1967 = vrot.lane.b32.xlu0 %v411, 96
    %v1968 = vpop.permute.xlu0 %1967
    %v1970 = vsel %vm784, %v1766, 0
    %v1973 = vsel %vm884, %v1968, 0
    %1975 = vmatprep.subr.bf16.mxu0 0
    %1976 = vmatpush1.bf16.msra.mxu0 0
    %1977 = vmatprep.subr.bf16.mxu0 0
    %1978 = vmatpush1.bf16.msra.mxu0 0
    %1979 = vmatprep.subr.bf16.mxu0 0
    %1980 = vmatpush1.bf16.msra.mxu0 0
    %1981 = vmatprep.subr.bf16.mxu0 0
    %1982 = vmatpush1.bf16.msra.mxu0 0
    %1983 = vmatprep.subr.bf16.mxu0 0
    %1984 = vmatpush1.bf16.msra.mxu0 0
    %1985 = vmatprep.subr.bf16.mxu0 0
    %1986 = vmatpush1.bf16.msra.mxu0 0
    %1987 = vmatprep.subr.bf16.mxu0 0
    %1988 = vmatpush1.bf16.msra.mxu0 0
    %1989 = vmatprep.subr.bf16.mxu0 0
    %1990 = vmatpush1.bf16.msra.mxu0 %v1973
    %1991 = vmatprep.subr.bf16.mxu0 0
    %1992 = vmatpush2.bf16.msra.mxu0 0
    %1993 = vmatprep.subr.bf16.mxu0 0
    %1994 = vmatpush2.bf16.msra.mxu0 0
    %1995 = vmatprep.subr.bf16.mxu0 0
    %1996 = vmatpush2.bf16.msra.mxu0 0
    %1997 = vmatprep.subr.bf16.mxu0 0
    %1998 = vmatpush2.bf16.msra.mxu0 0
    %1999 = vmatprep.subr.bf16.mxu0 0
    %2000 = vmatpush2.bf16.msra.mxu0 0
    %2001 = vmatprep.subr.bf16.mxu0 0
    %2002 = vmatpush2.bf16.msra.mxu0 0
    %2003 = vmatprep.subr.bf16.mxu0 0
    %2004 = vmatpush2.bf16.msra.mxu0 0
    %2005 = vmatprep.subr.bf16.mxu0 0
    %2006 = vmatpush2.bf16.msra.mxu0 0
    %2007 = vmatprep.mubr.bf16.mxu0 0
    %2008 = vmatmul.mubr.bf16.gmra.mxu0 %v1970
    %v2009 = vpop.f32.mrf.mxu0
    %v2010 = vadd.f32 0.0, %v2009
    %v2011 = vpop.f32.mrf.mxu0
    %v2012 = vpop.f32.mrf.mxu0
    %v2013 = vpop.f32.mrf.mxu0
    %2014 = vdwg.mxu0
    %2016 = vrot.lane.b32.xlu0 %v412, 96
    %v2017 = vpop.permute.xlu0 %2016
    %v2019 = vsel %vm784, %v1767, 0
    %v2022 = vsel %vm884, %v2017, 0
    %2024 = vmatprep.subr.bf16.mxu0 0
    %2025 = vmatpush1.bf16.msra.mxu0 0
    %2026 = vmatprep.subr.bf16.mxu0 0
    %2027 = vmatpush1.bf16.msra.mxu0 0
    %2028 = vmatprep.subr.bf16.mxu0 0
    %2029 = vmatpush1.bf16.msra.mxu0 0
    %2030 = vmatprep.subr.bf16.mxu0 0
    %2031 = vmatpush1.bf16.msra.mxu0 0
    %2032 = vmatprep.subr.bf16.mxu0 0
    %2033 = vmatpush1.bf16.msra.mxu0 0
    %2034 = vmatprep.subr.bf16.mxu0 0
    %2035 = vmatpush1.bf16.msra.mxu0 0
    %2036 = vmatprep.subr.bf16.mxu0 0
    %2037 = vmatpush1.bf16.msra.mxu0 0
    %2038 = vmatprep.subr.bf16.mxu0 0
    %2039 = vmatpush1.bf16.msra.mxu0 %v2022
    %2040 = vmatprep.subr.bf16.mxu0 0
    %2041 = vmatpush2.bf16.msra.mxu0 0
    %2042 = vmatprep.subr.bf16.mxu0 0
    %2043 = vmatpush2.bf16.msra.mxu0 0
    %2044 = vmatprep.subr.bf16.mxu0 0
    %2045 = vmatpush2.bf16.msra.mxu0 0
    %2046 = vmatprep.subr.bf16.mxu0 0
    %2047 = vmatpush2.bf16.msra.mxu0 0
    %2048 = vmatprep.subr.bf16.mxu0 0
    %2049 = vmatpush2.bf16.msra.mxu0 0
    %2050 = vmatprep.subr.bf16.mxu0 0
    %2051 = vmatpush2.bf16.msra.mxu0 0
    %2052 = vmatprep.subr.bf16.mxu0 0
    %2053 = vmatpush2.bf16.msra.mxu0 0
    %2054 = vmatprep.subr.bf16.mxu0 0
    %2055 = vmatpush2.bf16.msra.mxu0 0
    %2056 = vmatprep.mubr.bf16.mxu0 0
    %2057 = vmatmul.mubr.bf16.gmra.mxu0 %v2019
    %v2058 = vpop.f32.mrf.mxu0
    %v2059 = vadd.f32 0.0, %v2058
    %v2060 = vpop.f32.mrf.mxu0
    %v2061 = vpop.f32.mrf.mxu0
    %v2062 = vpop.f32.mrf.mxu0
    %2063 = vdwg.mxu0
    %2065 = vrot.lane.b32.xlu0 %v413, 96
    %v2066 = vpop.permute.xlu0 %2065
    %v2068 = vsel %vm784, %v1768, 0
    %v2071 = vsel %vm884, %v2066, 0
    %2073 = vmatprep.subr.bf16.mxu0 0
    %2074 = vmatpush1.bf16.msra.mxu0 0
    %2075 = vmatprep.subr.bf16.mxu0 0
    %2076 = vmatpush1.bf16.msra.mxu0 0
    %2077 = vmatprep.subr.bf16.mxu0 0
    %2078 = vmatpush1.bf16.msra.mxu0 0
    %2079 = vmatprep.subr.bf16.mxu0 0
    %2080 = vmatpush1.bf16.msra.mxu0 0
    %2081 = vmatprep.subr.bf16.mxu0 0
    %2082 = vmatpush1.bf16.msra.mxu0 0
    %2083 = vmatprep.subr.bf16.mxu0 0
    %2084 = vmatpush1.bf16.msra.mxu0 0
    %2085 = vmatprep.subr.bf16.mxu0 0
    %2086 = vmatpush1.bf16.msra.mxu0 0
    %2087 = vmatprep.subr.bf16.mxu0 0
    %2088 = vmatpush1.bf16.msra.mxu0 %v2071
    %2089 = vmatprep.subr.bf16.mxu0 0
    %2090 = vmatpush2.bf16.msra.mxu0 0
    %2091 = vmatprep.subr.bf16.mxu0 0
    %2092 = vmatpush2.bf16.msra.mxu0 0
    %2093 = vmatprep.subr.bf16.mxu0 0
    %2094 = vmatpush2.bf16.msra.mxu0 0
    %2095 = vmatprep.subr.bf16.mxu0 0
    %2096 = vmatpush2.bf16.msra.mxu0 0
    %2097 = vmatprep.subr.bf16.mxu0 0
    %2098 = vmatpush2.bf16.msra.mxu0 0
    %2099 = vmatprep.subr.bf16.mxu0 0
    %2100 = vmatpush2.bf16.msra.mxu0 0
    %2101 = vmatprep.subr.bf16.mxu0 0
    %2102 = vmatpush2.bf16.msra.mxu0 0
    %2103 = vmatprep.subr.bf16.mxu0 0
    %2104 = vmatpush2.bf16.msra.mxu0 0
    %2105 = vmatprep.mubr.bf16.mxu0 0
    %2106 = vmatmul.mubr.bf16.gmra.mxu0 %v2068
    %v2107 = vpop.f32.mrf.mxu0
    %v2108 = vadd.f32 0.0, %v2107
    %v2109 = vpop.f32.mrf.mxu0
    %v2110 = vpop.f32.mrf.mxu0
    %v2111 = vpop.f32.mrf.mxu0
    %2112 = vdwg.mxu0
    %2114 = vrot.lane.b32.xlu0 %v414, 96
    %v2115 = vpop.permute.xlu0 %2114
    %v2117 = vsel %vm784, %v1769, 0
    %v2120 = vsel %vm884, %v2115, 0
    %2122 = vmatprep.subr.bf16.mxu0 0
    %2123 = vmatpush1.bf16.msra.mxu0 0
    %2124 = vmatprep.subr.bf16.mxu0 0
    %2125 = vmatpush1.bf16.msra.mxu0 0
    %2126 = vmatprep.subr.bf16.mxu0 0
    %2127 = vmatpush1.bf16.msra.mxu0 0
    %2128 = vmatprep.subr.bf16.mxu0 0
    %2129 = vmatpush1.bf16.msra.mxu0 0
    %2130 = vmatprep.subr.bf16.mxu0 0
    %2131 = vmatpush1.bf16.msra.mxu0 0
    %2132 = vmatprep.subr.bf16.mxu0 0
    %2133 = vmatpush1.bf16.msra.mxu0 0
    %2134 = vmatprep.subr.bf16.mxu0 0
    %2135 = vmatpush1.bf16.msra.mxu0 0
    %2136 = vmatprep.subr.bf16.mxu0 0
    %2137 = vmatpush1.bf16.msra.mxu0 %v2120
    %2138 = vmatprep.subr.bf16.mxu0 0
    %2139 = vmatpush2.bf16.msra.mxu0 0
    %2140 = vmatprep.subr.bf16.mxu0 0
    %2141 = vmatpush2.bf16.msra.mxu0 0
    %2142 = vmatprep.subr.bf16.mxu0 0
    %2143 = vmatpush2.bf16.msra.mxu0 0
    %2144 = vmatprep.subr.bf16.mxu0 0
    %2145 = vmatpush2.bf16.msra.mxu0 0
    %2146 = vmatprep.subr.bf16.mxu0 0
    %2147 = vmatpush2.bf16.msra.mxu0 0
    %2148 = vmatprep.subr.bf16.mxu0 0
    %2149 = vmatpush2.bf16.msra.mxu0 0
    %2150 = vmatprep.subr.bf16.mxu0 0
    %2151 = vmatpush2.bf16.msra.mxu0 0
    %2152 = vmatprep.subr.bf16.mxu0 0
    %2153 = vmatpush2.bf16.msra.mxu0 0
    %2154 = vmatprep.mubr.bf16.mxu0 0
    %2155 = vmatmul.mubr.bf16.gmra.mxu0 %v2117
    %v2156 = vpop.f32.mrf.mxu0
    %v2157 = vadd.f32 0.0, %v2156
    %v2158 = vpop.f32.mrf.mxu0
    %v2159 = vpop.f32.mrf.mxu0
    %v2160 = vpop.f32.mrf.mxu0
    %2161 = vdwg.mxu0
    %v2162 = vpack.c.bf16 %v1863, %v1814
    %v2163 = vpack.c.bf16 %v1961, %v1912
    %v2164 = vpack.c.bf16 %v2059, %v2010
    %v2165 = vpack.c.bf16 %v2157, %v2108
    %v2166 = vld [vmem:[#allocation2 + $0x6c] sm:$0xf]
    %v2167 = vld [vmem:[#allocation2 + $0x84] sm:$0xf]
    %v2168 = vld [vmem:[#allocation2 + $0x9c] sm:$0xf]
    %v2169 = vld [vmem:[#allocation2 + $0xb4] sm:$0xf]
    %v2174 = vunpack.c.l.b16 %v2166
    %v2175 = vunpack.c.l.b16 %v2167
    %v2176 = vunpack.c.l.b16 %v2168
    %v2177 = vunpack.c.l.b16 %v2169
    %v2178 = vpack.c.b16 %v2175, %v2174
    %v2179 = vpack.c.b16 %v2177, %v2176
    %v2183 = vsel %vm415, %v2162, 0
    %v2186 = vsel %vm415, %v2163, 0
    %v2189 = vsel %vm415, %v2164, 0
    %v2192 = vsel %vm415, %v2165, 0
    %2194 = vmatprep.subr.bf16.mxu0 0
    %2195 = vmatpush1.bf16.msra.mxu0 0
    %2196 = vmatprep.subr.bf16.mxu0 0
    %2197 = vmatpush1.bf16.msra.mxu0 0
    %2198 = vmatprep.subr.bf16.mxu0 0
    %2199 = vmatpush1.bf16.msra.mxu0 0
    %2200 = vmatprep.subr.bf16.mxu0 0
    %2201 = vmatpush1.bf16.msra.mxu0 0
    %2202 = vmatprep.subr.bf16.mxu0 0
    %2203 = vmatpush1.bf16.msra.mxu0 0
    %2204 = vmatprep.subr.bf16.mxu0 0
    %2205 = vmatpush1.bf16.msra.mxu0 0
    %2206 = vmatprep.subr.bf16.mxu0 0
    %2207 = vmatpush1.bf16.msra.mxu0 %v2179
    %2208 = vmatprep.subr.bf16.mxu0 0
    %2209 = vmatpush1.bf16.msra.mxu0 %v2178
    %2210 = vmatprep.subr.bf16.mxu0 0
    %2211 = vmatpush2.bf16.msra.mxu0 0
    %2212 = vmatprep.subr.bf16.mxu0 0
    %2213 = vmatpush2.bf16.msra.mxu0 0
    %2214 = vmatprep.subr.bf16.mxu0 0
    %2215 = vmatpush2.bf16.msra.mxu0 0
    %2216 = vmatprep.subr.bf16.mxu0 0
    %2217 = vmatpush2.bf16.msra.mxu0 0
    %2218 = vmatprep.subr.bf16.mxu0 0
    %2219 = vmatpush2.bf16.msra.mxu0 0
    %2220 = vmatprep.subr.bf16.mxu0 0
    %2221 = vmatpush2.bf16.msra.mxu0 0
    %2222 = vmatprep.subr.bf16.mxu0 0
    %2223 = vmatpush2.bf16.msra.mxu0 0
    %2224 = vmatprep.subr.bf16.mxu0 0
    %2225 = vmatpush2.bf16.msra.mxu0 0
    %2226 = vmatprep.mubr.bf16.mxu0 0
    %2227 = vmatmul.mubr.bf16.gmra.mxu0 %v2183
    %v2228 = vpop.f32.mrf.mxu0
    %v2229 = vadd.f32 0.0, %v2228
    %v2230 = vpop.f32.mrf.mxu0
    %v2231 = vpop.f32.mrf.mxu0
    %v2232 = vadd.f32 0.0, %v2231
    %v2233 = vpop.f32.mrf.mxu0
    %2234 = vmatprep.mubr.bf16.mxu0 0
    %2235 = vmatmul.mubr.bf16.gmra.mxu0 %v2186
    %v2236 = vpop.f32.mrf.mxu0
    %v2237 = vadd.f32 0.0, %v2236
    %v2238 = vpop.f32.mrf.mxu0
    %v2239 = vpop.f32.mrf.mxu0
    %v2240 = vadd.f32 0.0, %v2239
    %v2241 = vpop.f32.mrf.mxu0
    %2242 = vmatprep.mubr.bf16.mxu0 0
    %2243 = vmatmul.mubr.bf16.gmra.mxu0 %v2189
    %v2244 = vpop.f32.mrf.mxu0
    %v2245 = vadd.f32 0.0, %v2244
    %v2246 = vpop.f32.mrf.mxu0
    %v2247 = vpop.f32.mrf.mxu0
    %v2248 = vadd.f32 0.0, %v2247
    %v2249 = vpop.f32.mrf.mxu0
    %2250 = vmatprep.mubr.bf16.mxu0 0
    %2251 = vmatmul.mubr.bf16.gmra.mxu0 %v2192
    %v2252 = vpop.f32.mrf.mxu0
    %v2253 = vadd.f32 0.0, %v2252
    %v2254 = vpop.f32.mrf.mxu0
    %v2255 = vpop.f32.mrf.mxu0
    %v2256 = vadd.f32 0.0, %v2255
    %v2257 = vpop.f32.mrf.mxu0
    %2258 = vdwg.mxu0
    %v2263 = vunpack.c.l.b16 %v1254
    %v2264 = vunpack.c.l.b16 %v1255
    %v2265 = vunpack.c.l.b16 %v1256
    %v2266 = vunpack.c.l.b16 %v1257
    %v2267 = vpack.c.b16 %v2264, %v2263
    %v2268 = vpack.c.b16 %v2266, %v2265
    %v2272 = vsel %vm415, %v1250, 0
    %v2275 = vsel %vm415, %v1251, 0
    %v2278 = vsel %vm415, %v1252, 0
    %v2281 = vsel %vm415, %v1253, 0
    %2283 = vmatprep.subr.bf16.mxu0 0
    %2284 = vmatpush1.bf16.msra.mxu0 0
    %2285 = vmatprep.subr.bf16.mxu0 0
    %2286 = vmatpush1.bf16.msra.mxu0 0
    %2287 = vmatprep.subr.bf16.mxu0 0
    %2288 = vmatpush1.bf16.msra.mxu0 0
    %2289 = vmatprep.subr.bf16.mxu0 0
    %2290 = vmatpush1.bf16.msra.mxu0 0
    %2291 = vmatprep.subr.bf16.mxu0 0
    %2292 = vmatpush1.bf16.msra.mxu0 0
    %2293 = vmatprep.subr.bf16.mxu0 0
    %2294 = vmatpush1.bf16.msra.mxu0 0
    %2295 = vmatprep.subr.bf16.mxu0 0
    %2296 = vmatpush1.bf16.msra.mxu0 %v2268
    %2297 = vmatprep.subr.bf16.mxu0 0
    %2298 = vmatpush1.bf16.msra.mxu0 %v2267
    %2299 = vmatprep.subr.bf16.mxu0 0
    %2300 = vmatpush2.bf16.msra.mxu0 0
    %2301 = vmatprep.subr.bf16.mxu0 0
    %2302 = vmatpush2.bf16.msra.mxu0 0
    %2303 = vmatprep.subr.bf16.mxu0 0
    %2304 = vmatpush2.bf16.msra.mxu0 0
    %2305 = vmatprep.subr.bf16.mxu0 0
    %2306 = vmatpush2.bf16.msra.mxu0 0
    %2307 = vmatprep.subr.bf16.mxu0 0
    %2308 = vmatpush2.bf16.msra.mxu0 0
    %2309 = vmatprep.subr.bf16.mxu0 0
    %2310 = vmatpush2.bf16.msra.mxu0 0
    %2311 = vmatprep.subr.bf16.mxu0 0
    %2312 = vmatpush2.bf16.msra.mxu0 0
    %2313 = vmatprep.subr.bf16.mxu0 0
    %2314 = vmatpush2.bf16.msra.mxu0 0
    %2315 = vmatprep.mubr.bf16.mxu0 0
    %2316 = vmatmul.mubr.bf16.gmra.mxu0 %v2272
    %v2317 = vpop.f32.mrf.mxu0
    %v2318 = vadd.f32 %v2229, %v2317
    %v2319 = vpop.f32.mrf.mxu0
    %v2320 = vpop.f32.mrf.mxu0
    %v2321 = vadd.f32 %v2232, %v2320
    %v2322 = vpop.f32.mrf.mxu0
    %2323 = vmatprep.mubr.bf16.mxu0 0
    %2324 = vmatmul.mubr.bf16.gmra.mxu0 %v2275
    %v2325 = vpop.f32.mrf.mxu0
    %v2326 = vadd.f32 %v2237, %v2325
    %v2327 = vpop.f32.mrf.mxu0
    %v2328 = vpop.f32.mrf.mxu0
    %v2329 = vadd.f32 %v2240, %v2328
    %v2330 = vpop.f32.mrf.mxu0
    %2331 = vmatprep.mubr.bf16.mxu0 0
    %2332 = vmatmul.mubr.bf16.gmra.mxu0 %v2278
    %v2333 = vpop.f32.mrf.mxu0
    %v2334 = vadd.f32 %v2245, %v2333
    %v2335 = vpop.f32.mrf.mxu0
    %v2336 = vpop.f32.mrf.mxu0
    %v2337 = vadd.f32 %v2248, %v2336
    %v2338 = vpop.f32.mrf.mxu0
    %2339 = vmatprep.mubr.bf16.mxu0 0
    %2340 = vmatmul.mubr.bf16.gmra.mxu0 %v2281
    %v2341 = vpop.f32.mrf.mxu0
    %v2342 = vadd.f32 %v2253, %v2341
    %v2343 = vpop.f32.mrf.mxu0
    %v2344 = vpop.f32.mrf.mxu0
    %v2345 = vadd.f32 %v2256, %v2344
    %v2346 = vpop.f32.mrf.mxu0
    %2347 = vdwg.mxu0
    %2348 = vrot.lane.b32.xlu0 %v391, 64
    %v2349 = vpop.permute.xlu0 %2348
    %2350 = vrot.lane.b32.xlu0 %v399, 64
    %v2351 = vpop.permute.xlu0 %2350
    %v2353 = vsel %vm415, %v2349, 0
    %v2356 = vsel %vm415, %v2351, 0
    %2358 = vmatprep.subr.bf16.mxu0 0
    %2359 = vmatpush1.bf16.xpose.msra.mxu0 0
    %2360 = vmatprep.subr.bf16.mxu0 0
    %2361 = vmatpush1.bf16.xpose.msra.mxu0 0
    %2362 = vmatprep.subr.bf16.mxu0 0
    %2363 = vmatpush1.bf16.xpose.msra.mxu0 0
    %2364 = vmatprep.subr.bf16.mxu0 0
    %2365 = vmatpush1.bf16.xpose.msra.mxu0 0
    %2366 = vmatprep.subr.bf16.mxu0 0
    %2367 = vmatpush1.bf16.xpose.msra.mxu0 0
    %2368 = vmatprep.subr.bf16.mxu0 0
    %2369 = vmatpush1.bf16.xpose.msra.mxu0 0
    %2370 = vmatprep.subr.bf16.mxu0 0
    %2371 = vmatpush1.bf16.xpose.msra.mxu0 0
    %2372 = vmatprep.subr.bf16.mxu0 0
    %2373 = vmatpush1.bf16.xpose.msra.mxu0 %v2356
    %2374 = vmatprep.subr.bf16.mxu0 0
    %2375 = vmatpush2.bf16.xpose.msra.mxu0 0
    %2376 = vmatprep.subr.bf16.mxu0 0
    %2377 = vmatpush2.bf16.xpose.msra.mxu0 0
    %2378 = vmatprep.subr.bf16.mxu0 0
    %2379 = vmatpush2.bf16.xpose.msra.mxu0 0
    %2380 = vmatprep.subr.bf16.mxu0 0
    %2381 = vmatpush2.bf16.xpose.msra.mxu0 0
    %2382 = vmatprep.subr.bf16.mxu0 0
    %2383 = vmatpush2.bf16.xpose.msra.mxu0 0
    %2384 = vmatprep.subr.bf16.mxu0 0
    %2385 = vmatpush2.bf16.xpose.msra.mxu0 0
    %2386 = vmatprep.subr.bf16.mxu0 0
    %2387 = vmatpush2.bf16.xpose.msra.mxu0 0
    %2388 = vmatprep.subr.bf16.mxu0 0
    %2389 = vmatpush2.bf16.xpose.msra.mxu0 0
    %2390 = vmatprep.mubr.bf16.mxu0 0
    %2391 = vmatmul.mubr.bf16.gmra.mxu0 %v2353
    %v2392 = vpop.f32.mrf.mxu0
    %v2393 = vadd.f32 %v390, %v2392
    %v2394 = vpop.f32.mrf.mxu0
    %v2395 = vpop.f32.mrf.mxu0
    %v2396 = vpop.f32.mrf.mxu0
    %2397 = vdwg.mxu0
    %2398 = vrot.lane.b32.xlu0 %v392, 64
    %v2399 = vpop.permute.xlu0 %2398
    %2400 = vrot.lane.b32.xlu0 %v400, 64
    %v2401 = vpop.permute.xlu0 %2400
    %v2403 = vsel %vm415, %v2399, 0
    %v2406 = vsel %vm415, %v2401, 0
    %2408 = vmatprep.subr.bf16.mxu0 0
    %2409 = vmatpush1.bf16.xpose.msra.mxu0 0
    %2410 = vmatprep.subr.bf16.mxu0 0
    %2411 = vmatpush1.bf16.xpose.msra.mxu0 0
    %2412 = vmatprep.subr.bf16.mxu0 0
    %2413 = vmatpush1.bf16.xpose.msra.mxu0 0
    %2414 = vmatprep.subr.bf16.mxu0 0
    %2415 = vmatpush1.bf16.xpose.msra.mxu0 0
    %2416 = vmatprep.subr.bf16.mxu0 0
    %2417 = vmatpush1.bf16.xpose.msra.mxu0 0
    %2418 = vmatprep.subr.bf16.mxu0 0
    %2419 = vmatpush1.bf16.xpose.msra.mxu0 0
    %2420 = vmatprep.subr.bf16.mxu0 0
    %2421 = vmatpush1.bf16.xpose.msra.mxu0 0
    %2422 = vmatprep.subr.bf16.mxu0 0
    %2423 = vmatpush1.bf16.xpose.msra.mxu0 %v2406
    %2424 = vmatprep.subr.bf16.mxu0 0
    %2425 = vmatpush2.bf16.xpose.msra.mxu0 0
    %2426 = vmatprep.subr.bf16.mxu0 0
    %2427 = vmatpush2.bf16.xpose.msra.mxu0 0
    %2428 = vmatprep.subr.bf16.mxu0 0
    %2429 = vmatpush2.bf16.xpose.msra.mxu0 0
    %2430 = vmatprep.subr.bf16.mxu0 0
    %2431 = vmatpush2.bf16.xpose.msra.mxu0 0
    %2432 = vmatprep.subr.bf16.mxu0 0
    %2433 = vmatpush2.bf16.xpose.msra.mxu0 0
    %2434 = vmatprep.subr.bf16.mxu0 0
    %2435 = vmatpush2.bf16.xpose.msra.mxu0 0
    %2436 = vmatprep.subr.bf16.mxu0 0
    %2437 = vmatpush2.bf16.xpose.msra.mxu0 0
    %2438 = vmatprep.subr.bf16.mxu0 0
    %2439 = vmatpush2.bf16.xpose.msra.mxu0 0
    %2440 = vmatprep.mubr.bf16.mxu0 0
    %2441 = vmatmul.mubr.bf16.gmra.mxu0 %v2403
    %v2442 = vpop.f32.mrf.mxu0
    %v2443 = vadd.f32 %v390, %v2442
    %v2444 = vpop.f32.mrf.mxu0
    %v2445 = vpop.f32.mrf.mxu0
    %v2446 = vpop.f32.mrf.mxu0
    %2447 = vdwg.mxu0
    %2448 = vrot.lane.b32.xlu0 %v393, 64
    %v2449 = vpop.permute.xlu0 %2448
    %2450 = vrot.lane.b32.xlu0 %v401, 64
    %v2451 = vpop.permute.xlu0 %2450
    %v2453 = vsel %vm415, %v2449, 0
    %v2456 = vsel %vm415, %v2451, 0
    %2458 = vmatprep.subr.bf16.mxu0 0
    %2459 = vmatpush1.bf16.xpose.msra.mxu0 0
    %2460 = vmatprep.subr.bf16.mxu0 0
    %2461 = vmatpush1.bf16.xpose.msra.mxu0 0
    %2462 = vmatprep.subr.bf16.mxu0 0
    %2463 = vmatpush1.bf16.xpose.msra.mxu0 0
    %2464 = vmatprep.subr.bf16.mxu0 0
    %2465 = vmatpush1.bf16.xpose.msra.mxu0 0
    %2466 = vmatprep.subr.bf16.mxu0 0
    %2467 = vmatpush1.bf16.xpose.msra.mxu0 0
    %2468 = vmatprep.subr.bf16.mxu0 0
    %2469 = vmatpush1.bf16.xpose.msra.mxu0 0
    %2470 = vmatprep.subr.bf16.mxu0 0
    %2471 = vmatpush1.bf16.xpose.msra.mxu0 0
    %2472 = vmatprep.subr.bf16.mxu0 0
    %2473 = vmatpush1.bf16.xpose.msra.mxu0 %v2456
    %2474 = vmatprep.subr.bf16.mxu0 0
    %2475 = vmatpush2.bf16.xpose.msra.mxu0 0
    %2476 = vmatprep.subr.bf16.mxu0 0
    %2477 = vmatpush2.bf16.xpose.msra.mxu0 0
    %2478 = vmatprep.subr.bf16.mxu0 0
    %2479 = vmatpush2.bf16.xpose.msra.mxu0 0
    %2480 = vmatprep.subr.bf16.mxu0 0
    %2481 = vmatpush2.bf16.xpose.msra.mxu0 0
    %2482 = vmatprep.subr.bf16.mxu0 0
    %2483 = vmatpush2.bf16.xpose.msra.mxu0 0
    %2484 = vmatprep.subr.bf16.mxu0 0
    %2485 = vmatpush2.bf16.xpose.msra.mxu0 0
    %2486 = vmatprep.subr.bf16.mxu0 0
    %2487 = vmatpush2.bf16.xpose.msra.mxu0 0
    %2488 = vmatprep.subr.bf16.mxu0 0
    %2489 = vmatpush2.bf16.xpose.msra.mxu0 0
    %2490 = vmatprep.mubr.bf16.mxu0 0
    %2491 = vmatmul.mubr.bf16.gmra.mxu0 %v2453
    %v2492 = vpop.f32.mrf.mxu0
    %v2493 = vadd.f32 %v390, %v2492
    %v2494 = vpop.f32.mrf.mxu0
    %v2495 = vpop.f32.mrf.mxu0
    %v2496 = vpop.f32.mrf.mxu0
    %2497 = vdwg.mxu0
    %2498 = vrot.lane.b32.xlu0 %v394, 64
    %v2499 = vpop.permute.xlu0 %2498
    %2500 = vrot.lane.b32.xlu0 %v402, 64
    %v2501 = vpop.permute.xlu0 %2500
    %v2503 = vsel %vm415, %v2499, 0
    %v2506 = vsel %vm415, %v2501, 0
    %2508 = vmatprep.subr.bf16.mxu0 0
    %2509 = vmatpush1.bf16.xpose.msra.mxu0 0
    %2510 = vmatprep.subr.bf16.mxu0 0
    %2511 = vmatpush1.bf16.xpose.msra.mxu0 0
    %2512 = vmatprep.subr.bf16.mxu0 0
    %2513 = vmatpush1.bf16.xpose.msra.mxu0 0
    %2514 = vmatprep.subr.bf16.mxu0 0
    %2515 = vmatpush1.bf16.xpose.msra.mxu0 0
    %2516 = vmatprep.subr.bf16.mxu0 0
    %2517 = vmatpush1.bf16.xpose.msra.mxu0 0
    %2518 = vmatprep.subr.bf16.mxu0 0
    %2519 = vmatpush1.bf16.xpose.msra.mxu0 0
    %2520 = vmatprep.subr.bf16.mxu0 0
    %2521 = vmatpush1.bf16.xpose.msra.mxu0 0
    %2522 = vmatprep.subr.bf16.mxu0 0
    %2523 = vmatpush1.bf16.xpose.msra.mxu0 %v2506
    %2524 = vmatprep.subr.bf16.mxu0 0
    %2525 = vmatpush2.bf16.xpose.msra.mxu0 0
    %2526 = vmatprep.subr.bf16.mxu0 0
    %2527 = vmatpush2.bf16.xpose.msra.mxu0 0
    %2528 = vmatprep.subr.bf16.mxu0 0
    %2529 = vmatpush2.bf16.xpose.msra.mxu0 0
    %2530 = vmatprep.subr.bf16.mxu0 0
    %2531 = vmatpush2.bf16.xpose.msra.mxu0 0
    %2532 = vmatprep.subr.bf16.mxu0 0
    %2533 = vmatpush2.bf16.xpose.msra.mxu0 0
    %2534 = vmatprep.subr.bf16.mxu0 0
    %2535 = vmatpush2.bf16.xpose.msra.mxu0 0
    %2536 = vmatprep.subr.bf16.mxu0 0
    %2537 = vmatpush2.bf16.xpose.msra.mxu0 0
    %2538 = vmatprep.subr.bf16.mxu0 0
    %2539 = vmatpush2.bf16.xpose.msra.mxu0 0
    %2540 = vmatprep.mubr.bf16.mxu0 0
    %2541 = vmatmul.mubr.bf16.gmra.mxu0 %v2503
    %v2542 = vpop.f32.mrf.mxu0
    %v2543 = vadd.f32 %v390, %v2542
    %v2544 = vpop.f32.mrf.mxu0
    %v2545 = vpop.f32.mrf.mxu0
    %v2546 = vpop.f32.mrf.mxu0
    %2547 = vdwg.mxu0
    %2548 = vrot.lane.b32.xlu0 %v395, 64
    %v2549 = vpop.permute.xlu0 %2548
    %2550 = vrot.lane.b32.xlu0 %v403, 64
    %v2551 = vpop.permute.xlu0 %2550
    %v2553 = vsel %vm415, %v2549, 0
    %v2556 = vsel %vm415, %v2551, 0
    %2558 = vmatprep.subr.bf16.mxu0 0
    %2559 = vmatpush1.bf16.xpose.msra.mxu0 0
    %2560 = vmatprep.subr.bf16.mxu0 0
    %2561 = vmatpush1.bf16.xpose.msra.mxu0 0
    %2562 = vmatprep.subr.bf16.mxu0 0
    %2563 = vmatpush1.bf16.xpose.msra.mxu0 0
    %2564 = vmatprep.subr.bf16.mxu0 0
    %2565 = vmatpush1.bf16.xpose.msra.mxu0 0
    %2566 = vmatprep.subr.bf16.mxu0 0
    %2567 = vmatpush1.bf16.xpose.msra.mxu0 0
    %2568 = vmatprep.subr.bf16.mxu0 0
    %2569 = vmatpush1.bf16.xpose.msra.mxu0 0
    %2570 = vmatprep.subr.bf16.mxu0 0
    %2571 = vmatpush1.bf16.xpose.msra.mxu0 0
    %2572 = vmatprep.subr.bf16.mxu0 0
    %2573 = vmatpush1.bf16.xpose.msra.mxu0 %v2556
    %2574 = vmatprep.subr.bf16.mxu0 0
    %2575 = vmatpush2.bf16.xpose.msra.mxu0 0
    %2576 = vmatprep.subr.bf16.mxu0 0
    %2577 = vmatpush2.bf16.xpose.msra.mxu0 0
    %2578 = vmatprep.subr.bf16.mxu0 0
    %2579 = vmatpush2.bf16.xpose.msra.mxu0 0
    %2580 = vmatprep.subr.bf16.mxu0 0
    %2581 = vmatpush2.bf16.xpose.msra.mxu0 0
    %2582 = vmatprep.subr.bf16.mxu0 0
    %2583 = vmatpush2.bf16.xpose.msra.mxu0 0
    %2584 = vmatprep.subr.bf16.mxu0 0
    %2585 = vmatpush2.bf16.xpose.msra.mxu0 0
    %2586 = vmatprep.subr.bf16.mxu0 0
    %2587 = vmatpush2.bf16.xpose.msra.mxu0 0
    %2588 = vmatprep.subr.bf16.mxu0 0
    %2589 = vmatpush2.bf16.xpose.msra.mxu0 0
    %2590 = vmatprep.mubr.bf16.mxu0 0
    %2591 = vmatmul.mubr.bf16.gmra.mxu0 %v2553
    %v2592 = vpop.f32.mrf.mxu0
    %v2593 = vadd.f32 %v390, %v2592
    %v2594 = vpop.f32.mrf.mxu0
    %v2595 = vpop.f32.mrf.mxu0
    %v2596 = vpop.f32.mrf.mxu0
    %2597 = vdwg.mxu0
    %2598 = vrot.lane.b32.xlu0 %v396, 64
    %v2599 = vpop.permute.xlu0 %2598
    %2600 = vrot.lane.b32.xlu0 %v404, 64
    %v2601 = vpop.permute.xlu0 %2600
    %v2603 = vsel %vm415, %v2599, 0
    %v2606 = vsel %vm415, %v2601, 0
    %2608 = vmatprep.subr.bf16.mxu0 0
    %2609 = vmatpush1.bf16.xpose.msra.mxu0 0
    %2610 = vmatprep.subr.bf16.mxu0 0
    %2611 = vmatpush1.bf16.xpose.msra.mxu0 0
    %2612 = vmatprep.subr.bf16.mxu0 0
    %2613 = vmatpush1.bf16.xpose.msra.mxu0 0
    %2614 = vmatprep.subr.bf16.mxu0 0
    %2615 = vmatpush1.bf16.xpose.msra.mxu0 0
    %2616 = vmatprep.subr.bf16.mxu0 0
    %2617 = vmatpush1.bf16.xpose.msra.mxu0 0
    %2618 = vmatprep.subr.bf16.mxu0 0
    %2619 = vmatpush1.bf16.xpose.msra.mxu0 0
    %2620 = vmatprep.subr.bf16.mxu0 0
    %2621 = vmatpush1.bf16.xpose.msra.mxu0 0
    %2622 = vmatprep.subr.bf16.mxu0 0
    %2623 = vmatpush1.bf16.xpose.msra.mxu0 %v2606
    %2624 = vmatprep.subr.bf16.mxu0 0
    %2625 = vmatpush2.bf16.xpose.msra.mxu0 0
    %2626 = vmatprep.subr.bf16.mxu0 0
    %2627 = vmatpush2.bf16.xpose.msra.mxu0 0
    %2628 = vmatprep.subr.bf16.mxu0 0
    %2629 = vmatpush2.bf16.xpose.msra.mxu0 0
    %2630 = vmatprep.subr.bf16.mxu0 0
    %2631 = vmatpush2.bf16.xpose.msra.mxu0 0
    %2632 = vmatprep.subr.bf16.mxu0 0
    %2633 = vmatpush2.bf16.xpose.msra.mxu0 0
    %2634 = vmatprep.subr.bf16.mxu0 0
    %2635 = vmatpush2.bf16.xpose.msra.mxu0 0
    %2636 = vmatprep.subr.bf16.mxu0 0
    %2637 = vmatpush2.bf16.xpose.msra.mxu0 0
    %2638 = vmatprep.subr.bf16.mxu0 0
    %2639 = vmatpush2.bf16.xpose.msra.mxu0 0
    %2640 = vmatprep.mubr.bf16.mxu0 0
    %2641 = vmatmul.mubr.bf16.gmra.mxu0 %v2603
    %v2642 = vpop.f32.mrf.mxu0
    %v2643 = vadd.f32 %v390, %v2642
    %v2644 = vpop.f32.mrf.mxu0
    %v2645 = vpop.f32.mrf.mxu0
    %v2646 = vpop.f32.mrf.mxu0
    %2647 = vdwg.mxu0
    %2648 = vrot.lane.b32.xlu0 %v397, 64
    %v2649 = vpop.permute.xlu0 %2648
    %2650 = vrot.lane.b32.xlu0 %v405, 64
    %v2651 = vpop.permute.xlu0 %2650
    %v2653 = vsel %vm415, %v2649, 0
    %v2656 = vsel %vm415, %v2651, 0
    %2658 = vmatprep.subr.bf16.mxu0 0
    %2659 = vmatpush1.bf16.xpose.msra.mxu0 0
    %2660 = vmatprep.subr.bf16.mxu0 0
    %2661 = vmatpush1.bf16.xpose.msra.mxu0 0
    %2662 = vmatprep.subr.bf16.mxu0 0
    %2663 = vmatpush1.bf16.xpose.msra.mxu0 0
    %2664 = vmatprep.subr.bf16.mxu0 0
    %2665 = vmatpush1.bf16.xpose.msra.mxu0 0
    %2666 = vmatprep.subr.bf16.mxu0 0
    %2667 = vmatpush1.bf16.xpose.msra.mxu0 0
    %2668 = vmatprep.subr.bf16.mxu0 0
    %2669 = vmatpush1.bf16.xpose.msra.mxu0 0
    %2670 = vmatprep.subr.bf16.mxu0 0
    %2671 = vmatpush1.bf16.xpose.msra.mxu0 0
    %2672 = vmatprep.subr.bf16.mxu0 0
    %2673 = vmatpush1.bf16.xpose.msra.mxu0 %v2656
    %2674 = vmatprep.subr.bf16.mxu0 0
    %2675 = vmatpush2.bf16.xpose.msra.mxu0 0
    %2676 = vmatprep.subr.bf16.mxu0 0
    %2677 = vmatpush2.bf16.xpose.msra.mxu0 0
    %2678 = vmatprep.subr.bf16.mxu0 0
    %2679 = vmatpush2.bf16.xpose.msra.mxu0 0
    %2680 = vmatprep.subr.bf16.mxu0 0
    %2681 = vmatpush2.bf16.xpose.msra.mxu0 0
    %2682 = vmatprep.subr.bf16.mxu0 0
    %2683 = vmatpush2.bf16.xpose.msra.mxu0 0
    %2684 = vmatprep.subr.bf16.mxu0 0
    %2685 = vmatpush2.bf16.xpose.msra.mxu0 0
    %2686 = vmatprep.subr.bf16.mxu0 0
    %2687 = vmatpush2.bf16.xpose.msra.mxu0 0
    %2688 = vmatprep.subr.bf16.mxu0 0
    %2689 = vmatpush2.bf16.xpose.msra.mxu0 0
    %2690 = vmatprep.mubr.bf16.mxu0 0
    %2691 = vmatmul.mubr.bf16.gmra.mxu0 %v2653
    %v2692 = vpop.f32.mrf.mxu0
    %v2693 = vadd.f32 %v390, %v2692
    %v2694 = vpop.f32.mrf.mxu0
    %v2695 = vpop.f32.mrf.mxu0
    %v2696 = vpop.f32.mrf.mxu0
    %2697 = vdwg.mxu0
    %2698 = vrot.lane.b32.xlu0 %v398, 64
    %v2699 = vpop.permute.xlu0 %2698
    %2700 = vrot.lane.b32.xlu0 %v406, 64
    %v2701 = vpop.permute.xlu0 %2700
    %v2703 = vsel %vm415, %v2699, 0
    %v2706 = vsel %vm415, %v2701, 0
    %2708 = vmatprep.subr.bf16.mxu0 0
    %2709 = vmatpush1.bf16.xpose.msra.mxu0 0
    %2710 = vmatprep.subr.bf16.mxu0 0
    %2711 = vmatpush1.bf16.xpose.msra.mxu0 0
    %2712 = vmatprep.subr.bf16.mxu0 0
    %2713 = vmatpush1.bf16.xpose.msra.mxu0 0
    %2714 = vmatprep.subr.bf16.mxu0 0
    %2715 = vmatpush1.bf16.xpose.msra.mxu0 0
    %2716 = vmatprep.subr.bf16.mxu0 0
    %2717 = vmatpush1.bf16.xpose.msra.mxu0 0
    %2718 = vmatprep.subr.bf16.mxu0 0
    %2719 = vmatpush1.bf16.xpose.msra.mxu0 0
    %2720 = vmatprep.subr.bf16.mxu0 0
    %2721 = vmatpush1.bf16.xpose.msra.mxu0 0
    %2722 = vmatprep.subr.bf16.mxu0 0
    %2723 = vmatpush1.bf16.xpose.msra.mxu0 %v2706
    %2724 = vmatprep.subr.bf16.mxu0 0
    %2725 = vmatpush2.bf16.xpose.msra.mxu0 0
    %2726 = vmatprep.subr.bf16.mxu0 0
    %2727 = vmatpush2.bf16.xpose.msra.mxu0 0
    %2728 = vmatprep.subr.bf16.mxu0 0
    %2729 = vmatpush2.bf16.xpose.msra.mxu0 0
    %2730 = vmatprep.subr.bf16.mxu0 0
    %2731 = vmatpush2.bf16.xpose.msra.mxu0 0
    %2732 = vmatprep.subr.bf16.mxu0 0
    %2733 = vmatpush2.bf16.xpose.msra.mxu0 0
    %2734 = vmatprep.subr.bf16.mxu0 0
    %2735 = vmatpush2.bf16.xpose.msra.mxu0 0
    %2736 = vmatprep.subr.bf16.mxu0 0
    %2737 = vmatpush2.bf16.xpose.msra.mxu0 0
    %2738 = vmatprep.subr.bf16.mxu0 0
    %2739 = vmatpush2.bf16.xpose.msra.mxu0 0
    %2740 = vmatprep.mubr.bf16.mxu0 0
    %2741 = vmatmul.mubr.bf16.gmra.mxu0 %v2703
    %v2742 = vpop.f32.mrf.mxu0
    %v2743 = vadd.f32 %v390, %v2742
    %v2744 = vpop.f32.mrf.mxu0
    %v2745 = vpop.f32.mrf.mxu0
    %v2746 = vpop.f32.mrf.mxu0
    %2747 = vdwg.mxu0
    %v2748 = vsel %vm784, %v2393, -inf
    %2749 = vmax.xlane.f32.xlu0 %v2748
    %v2750 = vpop.xlane.xlu0 %2749
    %v2751 = vsel %vm784, %v2443, -inf
    %2752 = vmax.xlane.f32.xlu0 %v2751
    %v2753 = vpop.xlane.xlu0 %2752
    %v2754 = vsel %vm784, %v2493, -inf
    %2755 = vmax.xlane.f32.xlu0 %v2754
    %v2756 = vpop.xlane.xlu0 %2755
    %v2757 = vsel %vm784, %v2543, -inf
    %2758 = vmax.xlane.f32.xlu0 %v2757
    %v2759 = vpop.xlane.xlu0 %2758
    %v2760 = vsel %vm784, %v2593, -inf
    %2761 = vmax.xlane.f32.xlu0 %v2760
    %v2762 = vpop.xlane.xlu0 %2761
    %v2763 = vsel %vm784, %v2643, -inf
    %2764 = vmax.xlane.f32.xlu0 %v2763
    %v2765 = vpop.xlane.xlu0 %2764
    %v2766 = vsel %vm784, %v2693, -inf
    %2767 = vmax.xlane.f32.xlu0 %v2766
    %v2768 = vpop.xlane.xlu0 %2767
    %v2769 = vsel %vm784, %v2743, -inf
    %2770 = vmax.xlane.f32.xlu0 %v2769
    %v2771 = vpop.xlane.xlu0 %2770
    %v2772 = vsub.f32 %v2393, %v2750
    %v2773 = vsub.f32 %v2443, %v2753
    %v2774 = vsub.f32 %v2493, %v2756
    %v2775 = vsub.f32 %v2543, %v2759
    %v2776 = vsub.f32 %v2593, %v2762
    %v2777 = vsub.f32 %v2643, %v2765
    %v2778 = vsub.f32 %v2693, %v2768
    %v2779 = vsub.f32 %v2743, %v2771
    %v2780 = vmul.f32 %v2772, 1.442695
    %v2781 = vpow.pop %v2780
    %v2782 = vmul.f32 %v2773, 1.442695
    %v2783 = vpow.pop %v2782
    %v2784 = vmul.f32 %v2774, 1.442695
    %v2785 = vpow.pop %v2784
    %v2786 = vmul.f32 %v2775, 1.442695
    %v2787 = vpow.pop %v2786
    %v2788 = vmul.f32 %v2776, 1.442695
    %v2789 = vpow.pop %v2788
    %v2790 = vmul.f32 %v2777, 1.442695
    %v2791 = vpow.pop %v2790
    %v2792 = vmul.f32 %v2778, 1.442695
    %v2793 = vpow.pop %v2792
    %v2794 = vmul.f32 %v2779, 1.442695
    %v2795 = vpow.pop %v2794
    %v2796 = vsel %vm784, %v2781, 0.0
    %2797 = vadd.xlane.f32.xlu0 %v2796
    %v2798 = vpop.xlane.xlu0 %2797
    %v2799 = vsel %vm784, %v2783, 0.0
    %2800 = vadd.xlane.f32.xlu0 %v2799
    %v2801 = vpop.xlane.xlu0 %2800
    %v2802 = vsel %vm784, %v2785, 0.0
    %2803 = vadd.xlane.f32.xlu0 %v2802
    %v2804 = vpop.xlane.xlu0 %2803
    %v2805 = vsel %vm784, %v2787, 0.0
    %2806 = vadd.xlane.f32.xlu0 %v2805
    %v2807 = vpop.xlane.xlu0 %2806
    %v2808 = vsel %vm784, %v2789, 0.0
    %2809 = vadd.xlane.f32.xlu0 %v2808
    %v2810 = vpop.xlane.xlu0 %2809
    %v2811 = vsel %vm784, %v2791, 0.0
    %2812 = vadd.xlane.f32.xlu0 %v2811
    %v2813 = vpop.xlane.xlu0 %2812
    %v2814 = vsel %vm784, %v2793, 0.0
    %2815 = vadd.xlane.f32.xlu0 %v2814
    %v2816 = vpop.xlane.xlu0 %2815
    %v2817 = vsel %vm784, %v2795, 0.0
    %2818 = vadd.xlane.f32.xlu0 %v2817
    %v2819 = vpop.xlane.xlu0 %2818
    %v2820 = vrcp.pop %v2798
    %v2821 = vrcp.pop %v2801
    %v2822 = vrcp.pop %v2804
    %v2823 = vrcp.pop %v2807
    %v2824 = vrcp.pop %v2810
    %v2825 = vrcp.pop %v2813
    %v2826 = vrcp.pop %v2816
    %v2827 = vrcp.pop %v2819
    %v2828 = vmul.f32 %v2781, %v2820
    %v2829 = vmul.f32 %v2783, %v2821
    %v2830 = vmul.f32 %v2785, %v2822
    %v2831 = vmul.f32 %v2787, %v2823
    %v2832 = vmul.f32 %v2789, %v2824
    %v2833 = vmul.f32 %v2791, %v2825
    %v2834 = vmul.f32 %v2793, %v2826
    %v2835 = vmul.f32 %v2795, %v2827
    %v2836 = vpack.c.bf16 %v2828, %v2828
    %v2837 = vpack.c.bf16 %v2829, %v2829
    %v2838 = vpack.c.bf16 %v2830, %v2830
    %v2839 = vpack.c.bf16 %v2831, %v2831
    %v2840 = vpack.c.bf16 %v2832, %v2832
    %v2841 = vpack.c.bf16 %v2833, %v2833
    %v2842 = vpack.c.bf16 %v2834, %v2834
    %v2843 = vpack.c.bf16 %v2835, %v2835
    %2844 = vrot.lane.b32.xlu0 %v407, 64
    %v2845 = vpop.permute.xlu0 %2844
    %v2847 = vsel %vm784, %v2836, 0
    %v2850 = vsel %vm884, %v2845, 0
    %2852 = vmatprep.subr.bf16.mxu0 0
    %2853 = vmatpush1.bf16.msra.mxu0 0
    %2854 = vmatprep.subr.bf16.mxu0 0
    %2855 = vmatpush1.bf16.msra.mxu0 0
    %2856 = vmatprep.subr.bf16.mxu0 0
    %2857 = vmatpush1.bf16.msra.mxu0 0
    %2858 = vmatprep.subr.bf16.mxu0 0
    %2859 = vmatpush1.bf16.msra.mxu0 0
    %2860 = vmatprep.subr.bf16.mxu0 0
    %2861 = vmatpush1.bf16.msra.mxu0 0
    %2862 = vmatprep.subr.bf16.mxu0 0
    %2863 = vmatpush1.bf16.msra.mxu0 0
    %2864 = vmatprep.subr.bf16.mxu0 0
    %2865 = vmatpush1.bf16.msra.mxu0 0
    %2866 = vmatprep.subr.bf16.mxu0 0
    %2867 = vmatpush1.bf16.msra.mxu0 %v2850
    %2868 = vmatprep.subr.bf16.mxu0 0
    %2869 = vmatpush2.bf16.msra.mxu0 0
    %2870 = vmatprep.subr.bf16.mxu0 0
    %2871 = vmatpush2.bf16.msra.mxu0 0
    %2872 = vmatprep.subr.bf16.mxu0 0
    %2873 = vmatpush2.bf16.msra.mxu0 0
    %2874 = vmatprep.subr.bf16.mxu0 0
    %2875 = vmatpush2.bf16.msra.mxu0 0
    %2876 = vmatprep.subr.bf16.mxu0 0
    %2877 = vmatpush2.bf16.msra.mxu0 0
    %2878 = vmatprep.subr.bf16.mxu0 0
    %2879 = vmatpush2.bf16.msra.mxu0 0
    %2880 = vmatprep.subr.bf16.mxu0 0
    %2881 = vmatpush2.bf16.msra.mxu0 0
    %2882 = vmatprep.subr.bf16.mxu0 0
    %2883 = vmatpush2.bf16.msra.mxu0 0
    %2884 = vmatprep.mubr.bf16.mxu0 0
    %2885 = vmatmul.mubr.bf16.gmra.mxu0 %v2847
    %v2886 = vpop.f32.mrf.mxu0
    %v2887 = vadd.f32 0.0, %v2886
    %v2888 = vpop.f32.mrf.mxu0
    %v2889 = vpop.f32.mrf.mxu0
    %v2890 = vpop.f32.mrf.mxu0
    %2891 = vdwg.mxu0
    %2892 = vrot.lane.b32.xlu0 %v408, 64
    %v2893 = vpop.permute.xlu0 %2892
    %v2895 = vsel %vm784, %v2837, 0
    %v2898 = vsel %vm884, %v2893, 0
    %2900 = vmatprep.subr.bf16.mxu0 0
    %2901 = vmatpush1.bf16.msra.mxu0 0
    %2902 = vmatprep.subr.bf16.mxu0 0
    %2903 = vmatpush1.bf16.msra.mxu0 0
    %2904 = vmatprep.subr.bf16.mxu0 0
    %2905 = vmatpush1.bf16.msra.mxu0 0
    %2906 = vmatprep.subr.bf16.mxu0 0
    %2907 = vmatpush1.bf16.msra.mxu0 0
    %2908 = vmatprep.subr.bf16.mxu0 0
    %2909 = vmatpush1.bf16.msra.mxu0 0
    %2910 = vmatprep.subr.bf16.mxu0 0
    %2911 = vmatpush1.bf16.msra.mxu0 0
    %2912 = vmatprep.subr.bf16.mxu0 0
    %2913 = vmatpush1.bf16.msra.mxu0 0
    %2914 = vmatprep.subr.bf16.mxu0 0
    %2915 = vmatpush1.bf16.msra.mxu0 %v2898
    %2916 = vmatprep.subr.bf16.mxu0 0
    %2917 = vmatpush2.bf16.msra.mxu0 0
    %2918 = vmatprep.subr.bf16.mxu0 0
    %2919 = vmatpush2.bf16.msra.mxu0 0
    %2920 = vmatprep.subr.bf16.mxu0 0
    %2921 = vmatpush2.bf16.msra.mxu0 0
    %2922 = vmatprep.subr.bf16.mxu0 0
    %2923 = vmatpush2.bf16.msra.mxu0 0
    %2924 = vmatprep.subr.bf16.mxu0 0
    %2925 = vmatpush2.bf16.msra.mxu0 0
    %2926 = vmatprep.subr.bf16.mxu0 0
    %2927 = vmatpush2.bf16.msra.mxu0 0
    %2928 = vmatprep.subr.bf16.mxu0 0
    %2929 = vmatpush2.bf16.msra.mxu0 0
    %2930 = vmatprep.subr.bf16.mxu0 0
    %2931 = vmatpush2.bf16.msra.mxu0 0
    %2932 = vmatprep.mubr.bf16.mxu0 0
    %2933 = vmatmul.mubr.bf16.gmra.mxu0 %v2895
    %v2934 = vpop.f32.mrf.mxu0
    %v2935 = vadd.f32 0.0, %v2934
    %v2936 = vpop.f32.mrf.mxu0
    %v2937 = vpop.f32.mrf.mxu0
    %v2938 = vpop.f32.mrf.mxu0
    %2939 = vdwg.mxu0
    %2940 = vrot.lane.b32.xlu0 %v409, 64
    %v2941 = vpop.permute.xlu0 %2940
    %v2943 = vsel %vm784, %v2838, 0
    %v2946 = vsel %vm884, %v2941, 0
    %2948 = vmatprep.subr.bf16.mxu0 0
    %2949 = vmatpush1.bf16.msra.mxu0 0
    %2950 = vmatprep.subr.bf16.mxu0 0
    %2951 = vmatpush1.bf16.msra.mxu0 0
    %2952 = vmatprep.subr.bf16.mxu0 0
    %2953 = vmatpush1.bf16.msra.mxu0 0
    %2954 = vmatprep.subr.bf16.mxu0 0
    %2955 = vmatpush1.bf16.msra.mxu0 0
    %2956 = vmatprep.subr.bf16.mxu0 0
    %2957 = vmatpush1.bf16.msra.mxu0 0
    %2958 = vmatprep.subr.bf16.mxu0 0
    %2959 = vmatpush1.bf16.msra.mxu0 0
    %2960 = vmatprep.subr.bf16.mxu0 0
    %2961 = vmatpush1.bf16.msra.mxu0 0
    %2962 = vmatprep.subr.bf16.mxu0 0
    %2963 = vmatpush1.bf16.msra.mxu0 %v2946
    %2964 = vmatprep.subr.bf16.mxu0 0
    %2965 = vmatpush2.bf16.msra.mxu0 0
    %2966 = vmatprep.subr.bf16.mxu0 0
    %2967 = vmatpush2.bf16.msra.mxu0 0
    %2968 = vmatprep.subr.bf16.mxu0 0
    %2969 = vmatpush2.bf16.msra.mxu0 0
    %2970 = vmatprep.subr.bf16.mxu0 0
    %2971 = vmatpush2.bf16.msra.mxu0 0
    %2972 = vmatprep.subr.bf16.mxu0 0
    %2973 = vmatpush2.bf16.msra.mxu0 0
    %2974 = vmatprep.subr.bf16.mxu0 0
    %2975 = vmatpush2.bf16.msra.mxu0 0
    %2976 = vmatprep.subr.bf16.mxu0 0
    %2977 = vmatpush2.bf16.msra.mxu0 0
    %2978 = vmatprep.subr.bf16.mxu0 0
    %2979 = vmatpush2.bf16.msra.mxu0 0
    %2980 = vmatprep.mubr.bf16.mxu0 0
    %2981 = vmatmul.mubr.bf16.gmra.mxu0 %v2943
    %v2982 = vpop.f32.mrf.mxu0
    %v2983 = vadd.f32 0.0, %v2982
    %v2984 = vpop.f32.mrf.mxu0
    %v2985 = vpop.f32.mrf.mxu0
    %v2986 = vpop.f32.mrf.mxu0
    %2987 = vdwg.mxu0
    %2988 = vrot.lane.b32.xlu0 %v410, 64
    %v2989 = vpop.permute.xlu0 %2988
    %v2991 = vsel %vm784, %v2839, 0
    %v2994 = vsel %vm884, %v2989, 0
    %2996 = vmatprep.subr.bf16.mxu0 0
    %2997 = vmatpush1.bf16.msra.mxu0 0
    %2998 = vmatprep.subr.bf16.mxu0 0
    %2999 = vmatpush1.bf16.msra.mxu0 0
    %3000 = vmatprep.subr.bf16.mxu0 0
    %3001 = vmatpush1.bf16.msra.mxu0 0
    %3002 = vmatprep.subr.bf16.mxu0 0
    %3003 = vmatpush1.bf16.msra.mxu0 0
    %3004 = vmatprep.subr.bf16.mxu0 0
    %3005 = vmatpush1.bf16.msra.mxu0 0
    %3006 = vmatprep.subr.bf16.mxu0 0
    %3007 = vmatpush1.bf16.msra.mxu0 0
    %3008 = vmatprep.subr.bf16.mxu0 0
    %3009 = vmatpush1.bf16.msra.mxu0 0
    %3010 = vmatprep.subr.bf16.mxu0 0
    %3011 = vmatpush1.bf16.msra.mxu0 %v2994
    %3012 = vmatprep.subr.bf16.mxu0 0
    %3013 = vmatpush2.bf16.msra.mxu0 0
    %3014 = vmatprep.subr.bf16.mxu0 0
    %3015 = vmatpush2.bf16.msra.mxu0 0
    %3016 = vmatprep.subr.bf16.mxu0 0
    %3017 = vmatpush2.bf16.msra.mxu0 0
    %3018 = vmatprep.subr.bf16.mxu0 0
    %3019 = vmatpush2.bf16.msra.mxu0 0
    %3020 = vmatprep.subr.bf16.mxu0 0
    %3021 = vmatpush2.bf16.msra.mxu0 0
    %3022 = vmatprep.subr.bf16.mxu0 0
    %3023 = vmatpush2.bf16.msra.mxu0 0
    %3024 = vmatprep.subr.bf16.mxu0 0
    %3025 = vmatpush2.bf16.msra.mxu0 0
    %3026 = vmatprep.subr.bf16.mxu0 0
    %3027 = vmatpush2.bf16.msra.mxu0 0
    %3028 = vmatprep.mubr.bf16.mxu0 0
    %3029 = vmatmul.mubr.bf16.gmra.mxu0 %v2991
    %v3030 = vpop.f32.mrf.mxu0
    %v3031 = vadd.f32 0.0, %v3030
    %v3032 = vpop.f32.mrf.mxu0
    %v3033 = vpop.f32.mrf.mxu0
    %v3034 = vpop.f32.mrf.mxu0
    %3035 = vdwg.mxu0
    %3036 = vrot.lane.b32.xlu0 %v411, 64
    %v3037 = vpop.permute.xlu0 %3036
    %v3039 = vsel %vm784, %v2840, 0
    %v3042 = vsel %vm884, %v3037, 0
    %3044 = vmatprep.subr.bf16.mxu0 0
    %3045 = vmatpush1.bf16.msra.mxu0 0
    %3046 = vmatprep.subr.bf16.mxu0 0
    %3047 = vmatpush1.bf16.msra.mxu0 0
    %3048 = vmatprep.subr.bf16.mxu0 0
    %3049 = vmatpush1.bf16.msra.mxu0 0
    %3050 = vmatprep.subr.bf16.mxu0 0
    %3051 = vmatpush1.bf16.msra.mxu0 0
    %3052 = vmatprep.subr.bf16.mxu0 0
    %3053 = vmatpush1.bf16.msra.mxu0 0
    %3054 = vmatprep.subr.bf16.mxu0 0
    %3055 = vmatpush1.bf16.msra.mxu0 0
    %3056 = vmatprep.subr.bf16.mxu0 0
    %3057 = vmatpush1.bf16.msra.mxu0 0
    %3058 = vmatprep.subr.bf16.mxu0 0
    %3059 = vmatpush1.bf16.msra.mxu0 %v3042
    %3060 = vmatprep.subr.bf16.mxu0 0
    %3061 = vmatpush2.bf16.msra.mxu0 0
    %3062 = vmatprep.subr.bf16.mxu0 0
    %3063 = vmatpush2.bf16.msra.mxu0 0
    %3064 = vmatprep.subr.bf16.mxu0 0
    %3065 = vmatpush2.bf16.msra.mxu0 0
    %3066 = vmatprep.subr.bf16.mxu0 0
    %3067 = vmatpush2.bf16.msra.mxu0 0
    %3068 = vmatprep.subr.bf16.mxu0 0
    %3069 = vmatpush2.bf16.msra.mxu0 0
    %3070 = vmatprep.subr.bf16.mxu0 0
    %3071 = vmatpush2.bf16.msra.mxu0 0
    %3072 = vmatprep.subr.bf16.mxu0 0
    %3073 = vmatpush2.bf16.msra.mxu0 0
    %3074 = vmatprep.subr.bf16.mxu0 0
    %3075 = vmatpush2.bf16.msra.mxu0 0
    %3076 = vmatprep.mubr.bf16.mxu0 0
    %3077 = vmatmul.mubr.bf16.gmra.mxu0 %v3039
    %v3078 = vpop.f32.mrf.mxu0
    %v3079 = vadd.f32 0.0, %v3078
    %v3080 = vpop.f32.mrf.mxu0
    %v3081 = vpop.f32.mrf.mxu0
    %v3082 = vpop.f32.mrf.mxu0
    %3083 = vdwg.mxu0
    %3084 = vrot.lane.b32.xlu0 %v412, 64
    %v3085 = vpop.permute.xlu0 %3084
    %v3087 = vsel %vm784, %v2841, 0
    %v3090 = vsel %vm884, %v3085, 0
    %3092 = vmatprep.subr.bf16.mxu0 0
    %3093 = vmatpush1.bf16.msra.mxu0 0
    %3094 = vmatprep.subr.bf16.mxu0 0
    %3095 = vmatpush1.bf16.msra.mxu0 0
    %3096 = vmatprep.subr.bf16.mxu0 0
    %3097 = vmatpush1.bf16.msra.mxu0 0
    %3098 = vmatprep.subr.bf16.mxu0 0
    %3099 = vmatpush1.bf16.msra.mxu0 0
    %3100 = vmatprep.subr.bf16.mxu0 0
    %3101 = vmatpush1.bf16.msra.mxu0 0
    %3102 = vmatprep.subr.bf16.mxu0 0
    %3103 = vmatpush1.bf16.msra.mxu0 0
    %3104 = vmatprep.subr.bf16.mxu0 0
    %3105 = vmatpush1.bf16.msra.mxu0 0
    %3106 = vmatprep.subr.bf16.mxu0 0
    %3107 = vmatpush1.bf16.msra.mxu0 %v3090
    %3108 = vmatprep.subr.bf16.mxu0 0
    %3109 = vmatpush2.bf16.msra.mxu0 0
    %3110 = vmatprep.subr.bf16.mxu0 0
    %3111 = vmatpush2.bf16.msra.mxu0 0
    %3112 = vmatprep.subr.bf16.mxu0 0
    %3113 = vmatpush2.bf16.msra.mxu0 0
    %3114 = vmatprep.subr.bf16.mxu0 0
    %3115 = vmatpush2.bf16.msra.mxu0 0
    %3116 = vmatprep.subr.bf16.mxu0 0
    %3117 = vmatpush2.bf16.msra.mxu0 0
    %3118 = vmatprep.subr.bf16.mxu0 0
    %3119 = vmatpush2.bf16.msra.mxu0 0
    %3120 = vmatprep.subr.bf16.mxu0 0
    %3121 = vmatpush2.bf16.msra.mxu0 0
    %3122 = vmatprep.subr.bf16.mxu0 0
    %3123 = vmatpush2.bf16.msra.mxu0 0
    %3124 = vmatprep.mubr.bf16.mxu0 0
    %3125 = vmatmul.mubr.bf16.gmra.mxu0 %v3087
    %v3126 = vpop.f32.mrf.mxu0
    %v3127 = vadd.f32 0.0, %v3126
    %v3128 = vpop.f32.mrf.mxu0
    %v3129 = vpop.f32.mrf.mxu0
    %v3130 = vpop.f32.mrf.mxu0
    %3131 = vdwg.mxu0
    %3132 = vrot.lane.b32.xlu0 %v413, 64
    %v3133 = vpop.permute.xlu0 %3132
    %v3135 = vsel %vm784, %v2842, 0
    %v3138 = vsel %vm884, %v3133, 0
    %3140 = vmatprep.subr.bf16.mxu0 0
    %3141 = vmatpush1.bf16.msra.mxu0 0
    %3142 = vmatprep.subr.bf16.mxu0 0
    %3143 = vmatpush1.bf16.msra.mxu0 0
    %3144 = vmatprep.subr.bf16.mxu0 0
    %3145 = vmatpush1.bf16.msra.mxu0 0
    %3146 = vmatprep.subr.bf16.mxu0 0
    %3147 = vmatpush1.bf16.msra.mxu0 0
    %3148 = vmatprep.subr.bf16.mxu0 0
    %3149 = vmatpush1.bf16.msra.mxu0 0
    %3150 = vmatprep.subr.bf16.mxu0 0
    %3151 = vmatpush1.bf16.msra.mxu0 0
    %3152 = vmatprep.subr.bf16.mxu0 0
    %3153 = vmatpush1.bf16.msra.mxu0 0
    %3154 = vmatprep.subr.bf16.mxu0 0
    %3155 = vmatpush1.bf16.msra.mxu0 %v3138
    %3156 = vmatprep.subr.bf16.mxu0 0
    %3157 = vmatpush2.bf16.msra.mxu0 0
    %3158 = vmatprep.subr.bf16.mxu0 0
    %3159 = vmatpush2.bf16.msra.mxu0 0
    %3160 = vmatprep.subr.bf16.mxu0 0
    %3161 = vmatpush2.bf16.msra.mxu0 0
    %3162 = vmatprep.subr.bf16.mxu0 0
    %3163 = vmatpush2.bf16.msra.mxu0 0
    %3164 = vmatprep.subr.bf16.mxu0 0
    %3165 = vmatpush2.bf16.msra.mxu0 0
    %3166 = vmatprep.subr.bf16.mxu0 0
    %3167 = vmatpush2.bf16.msra.mxu0 0
    %3168 = vmatprep.subr.bf16.mxu0 0
    %3169 = vmatpush2.bf16.msra.mxu0 0
    %3170 = vmatprep.subr.bf16.mxu0 0
    %3171 = vmatpush2.bf16.msra.mxu0 0
    %3172 = vmatprep.mubr.bf16.mxu0 0
    %3173 = vmatmul.mubr.bf16.gmra.mxu0 %v3135
    %v3174 = vpop.f32.mrf.mxu0
    %v3175 = vadd.f32 0.0, %v3174
    %v3176 = vpop.f32.mrf.mxu0
    %v3177 = vpop.f32.mrf.mxu0
    %v3178 = vpop.f32.mrf.mxu0
    %3179 = vdwg.mxu0
    %3180 = vrot.lane.b32.xlu0 %v414, 64
    %v3181 = vpop.permute.xlu0 %3180
    %v3183 = vsel %vm784, %v2843, 0
    %v3186 = vsel %vm884, %v3181, 0
    %3188 = vmatprep.subr.bf16.mxu0 0
    %3189 = vmatpush1.bf16.msra.mxu0 0
    %3190 = vmatprep.subr.bf16.mxu0 0
    %3191 = vmatpush1.bf16.msra.mxu0 0
    %3192 = vmatprep.subr.bf16.mxu0 0
    %3193 = vmatpush1.bf16.msra.mxu0 0
    %3194 = vmatprep.subr.bf16.mxu0 0
    %3195 = vmatpush1.bf16.msra.mxu0 0
    %3196 = vmatprep.subr.bf16.mxu0 0
    %3197 = vmatpush1.bf16.msra.mxu0 0
    %3198 = vmatprep.subr.bf16.mxu0 0
    %3199 = vmatpush1.bf16.msra.mxu0 0
    %3200 = vmatprep.subr.bf16.mxu0 0
    %3201 = vmatpush1.bf16.msra.mxu0 0
    %3202 = vmatprep.subr.bf16.mxu0 0
    %3203 = vmatpush1.bf16.msra.mxu0 %v3186
    %3204 = vmatprep.subr.bf16.mxu0 0
    %3205 = vmatpush2.bf16.msra.mxu0 0
    %3206 = vmatprep.subr.bf16.mxu0 0
    %3207 = vmatpush2.bf16.msra.mxu0 0
    %3208 = vmatprep.subr.bf16.mxu0 0
    %3209 = vmatpush2.bf16.msra.mxu0 0
    %3210 = vmatprep.subr.bf16.mxu0 0
    %3211 = vmatpush2.bf16.msra.mxu0 0
    %3212 = vmatprep.subr.bf16.mxu0 0
    %3213 = vmatpush2.bf16.msra.mxu0 0
    %3214 = vmatprep.subr.bf16.mxu0 0
    %3215 = vmatpush2.bf16.msra.mxu0 0
    %3216 = vmatprep.subr.bf16.mxu0 0
    %3217 = vmatpush2.bf16.msra.mxu0 0
    %3218 = vmatprep.subr.bf16.mxu0 0
    %3219 = vmatpush2.bf16.msra.mxu0 0
    %3220 = vmatprep.mubr.bf16.mxu0 0
    %3221 = vmatmul.mubr.bf16.gmra.mxu0 %v3183
    %v3222 = vpop.f32.mrf.mxu0
    %v3223 = vadd.f32 0.0, %v3222
    %v3224 = vpop.f32.mrf.mxu0
    %v3225 = vpop.f32.mrf.mxu0
    %v3226 = vpop.f32.mrf.mxu0
    %3227 = vdwg.mxu0
    %v3228 = vpack.c.bf16 %v2935, %v2887
    %v3229 = vpack.c.bf16 %v3031, %v2983
    %v3230 = vpack.c.bf16 %v3127, %v3079
    %v3231 = vpack.c.bf16 %v3223, %v3175
    %v3232 = vld [vmem:[#allocation2 + $0xcc] sm:$0xf]
    %v3233 = vld [vmem:[#allocation2 + $0xe4] sm:$0xf]
    %v3234 = vld [vmem:[#allocation2 + $0xfc] sm:$0xf]
    %v3235 = vld [vmem:[#allocation2 + $0x114] sm:$0xf]
    %v3240 = vunpack.c.l.b16 %v3232
    %v3241 = vunpack.c.l.b16 %v3233
    %v3242 = vunpack.c.l.b16 %v3234
    %v3243 = vunpack.c.l.b16 %v3235
    %v3244 = vpack.c.b16 %v3241, %v3240
    %v3245 = vpack.c.b16 %v3243, %v3242
    %v3249 = vsel %vm415, %v3228, 0
    %v3252 = vsel %vm415, %v3229, 0
    %v3255 = vsel %vm415, %v3230, 0
    %v3258 = vsel %vm415, %v3231, 0
    %3260 = vmatprep.subr.bf16.mxu0 0
    %3261 = vmatpush1.bf16.msra.mxu0 0
    %3262 = vmatprep.subr.bf16.mxu0 0
    %3263 = vmatpush1.bf16.msra.mxu0 0
    %3264 = vmatprep.subr.bf16.mxu0 0
    %3265 = vmatpush1.bf16.msra.mxu0 0
    %3266 = vmatprep.subr.bf16.mxu0 0
    %3267 = vmatpush1.bf16.msra.mxu0 0
    %3268 = vmatprep.subr.bf16.mxu0 0
    %3269 = vmatpush1.bf16.msra.mxu0 0
    %3270 = vmatprep.subr.bf16.mxu0 0
    %3271 = vmatpush1.bf16.msra.mxu0 0
    %3272 = vmatprep.subr.bf16.mxu0 0
    %3273 = vmatpush1.bf16.msra.mxu0 %v3245
    %3274 = vmatprep.subr.bf16.mxu0 0
    %3275 = vmatpush1.bf16.msra.mxu0 %v3244
    %3276 = vmatprep.subr.bf16.mxu0 0
    %3277 = vmatpush2.bf16.msra.mxu0 0
    %3278 = vmatprep.subr.bf16.mxu0 0
    %3279 = vmatpush2.bf16.msra.mxu0 0
    %3280 = vmatprep.subr.bf16.mxu0 0
    %3281 = vmatpush2.bf16.msra.mxu0 0
    %3282 = vmatprep.subr.bf16.mxu0 0
    %3283 = vmatpush2.bf16.msra.mxu0 0
    %3284 = vmatprep.subr.bf16.mxu0 0
    %3285 = vmatpush2.bf16.msra.mxu0 0
    %3286 = vmatprep.subr.bf16.mxu0 0
    %3287 = vmatpush2.bf16.msra.mxu0 0
    %3288 = vmatprep.subr.bf16.mxu0 0
    %3289 = vmatpush2.bf16.msra.mxu0 0
    %3290 = vmatprep.subr.bf16.mxu0 0
    %3291 = vmatpush2.bf16.msra.mxu0 0
    %3292 = vmatprep.mubr.bf16.mxu0 0
    %3293 = vmatmul.mubr.bf16.gmra.mxu0 %v3249
    %v3294 = vpop.f32.mrf.mxu0
    %v3295 = vadd.f32 0.0, %v3294
    %v3296 = vpop.f32.mrf.mxu0
    %v3297 = vpop.f32.mrf.mxu0
    %v3298 = vadd.f32 0.0, %v3297
    %v3299 = vpop.f32.mrf.mxu0
    %3300 = vmatprep.mubr.bf16.mxu0 0
    %3301 = vmatmul.mubr.bf16.gmra.mxu0 %v3252
    %v3302 = vpop.f32.mrf.mxu0
    %v3303 = vadd.f32 0.0, %v3302
    %v3304 = vpop.f32.mrf.mxu0
    %v3305 = vpop.f32.mrf.mxu0
    %v3306 = vadd.f32 0.0, %v3305
    %v3307 = vpop.f32.mrf.mxu0
    %3308 = vmatprep.mubr.bf16.mxu0 0
    %3309 = vmatmul.mubr.bf16.gmra.mxu0 %v3255
    %v3310 = vpop.f32.mrf.mxu0
    %v3311 = vadd.f32 0.0, %v3310
    %v3312 = vpop.f32.mrf.mxu0
    %v3313 = vpop.f32.mrf.mxu0
    %v3314 = vadd.f32 0.0, %v3313
    %v3315 = vpop.f32.mrf.mxu0
    %3316 = vmatprep.mubr.bf16.mxu0 0
    %3317 = vmatmul.mubr.bf16.gmra.mxu0 %v3258
    %v3318 = vpop.f32.mrf.mxu0
    %v3319 = vadd.f32 0.0, %v3318
    %v3320 = vpop.f32.mrf.mxu0
    %v3321 = vpop.f32.mrf.mxu0
    %v3322 = vadd.f32 0.0, %v3321
    %v3323 = vpop.f32.mrf.mxu0
    %3324 = vdwg.mxu0
    %v3325 = vadd.f32 %v2318, %v3295
    %v3326 = vadd.f32 %v2321, %v3298
    %v3327 = vadd.f32 %v2326, %v3303
    %v3328 = vadd.f32 %v2329, %v3306
    %v3329 = vadd.f32 %v2334, %v3311
    %v3330 = vadd.f32 %v2337, %v3314
    %v3331 = vadd.f32 %v2342, %v3319
    %v3332 = vadd.f32 %v2345, %v3322
    %3333 = vrot.lane.b32.xlu0 %v391, 32
    %v3334 = vpop.permute.xlu0 %3333
    %3335 = vrot.lane.b32.xlu0 %v399, 32
    %v3336 = vpop.permute.xlu0 %3335
    %v3338 = vsel %vm415, %v3334, 0
    %v3341 = vsel %vm415, %v3336, 0
    %3343 = vmatprep.subr.bf16.mxu0 0
    %3344 = vmatpush1.bf16.xpose.msra.mxu0 0
    %3345 = vmatprep.subr.bf16.mxu0 0
    %3346 = vmatpush1.bf16.xpose.msra.mxu0 0
    %3347 = vmatprep.subr.bf16.mxu0 0
    %3348 = vmatpush1.bf16.xpose.msra.mxu0 0
    %3349 = vmatprep.subr.bf16.mxu0 0
    %3350 = vmatpush1.bf16.xpose.msra.mxu0 0
    %3351 = vmatprep.subr.bf16.mxu0 0
    %3352 = vmatpush1.bf16.xpose.msra.mxu0 0
    %3353 = vmatprep.subr.bf16.mxu0 0
    %3354 = vmatpush1.bf16.xpose.msra.mxu0 0
    %3355 = vmatprep.subr.bf16.mxu0 0
    %3356 = vmatpush1.bf16.xpose.msra.mxu0 0
    %3357 = vmatprep.subr.bf16.mxu0 0
    %3358 = vmatpush1.bf16.xpose.msra.mxu0 %v3341
    %3359 = vmatprep.subr.bf16.mxu0 0
    %3360 = vmatpush2.bf16.xpose.msra.mxu0 0
    %3361 = vmatprep.subr.bf16.mxu0 0
    %3362 = vmatpush2.bf16.xpose.msra.mxu0 0
    %3363 = vmatprep.subr.bf16.mxu0 0
    %3364 = vmatpush2.bf16.xpose.msra.mxu0 0
    %3365 = vmatprep.subr.bf16.mxu0 0
    %3366 = vmatpush2.bf16.xpose.msra.mxu0 0
    %3367 = vmatprep.subr.bf16.mxu0 0
    %3368 = vmatpush2.bf16.xpose.msra.mxu0 0
    %3369 = vmatprep.subr.bf16.mxu0 0
    %3370 = vmatpush2.bf16.xpose.msra.mxu0 0
    %3371 = vmatprep.subr.bf16.mxu0 0
    %3372 = vmatpush2.bf16.xpose.msra.mxu0 0
    %3373 = vmatprep.subr.bf16.mxu0 0
    %3374 = vmatpush2.bf16.xpose.msra.mxu0 0
    %3375 = vmatprep.mubr.bf16.mxu0 0
    %3376 = vmatmul.mubr.bf16.gmra.mxu0 %v3338
    %v3377 = vpop.f32.mrf.mxu0
    %v3378 = vadd.f32 %v390, %v3377
    %v3379 = vpop.f32.mrf.mxu0
    %v3380 = vpop.f32.mrf.mxu0
    %v3381 = vpop.f32.mrf.mxu0
    %3382 = vdwg.mxu0
    %3383 = vrot.lane.b32.xlu0 %v392, 32
    %v3384 = vpop.permute.xlu0 %3383
    %3385 = vrot.lane.b32.xlu0 %v400, 32
    %v3386 = vpop.permute.xlu0 %3385
    %v3388 = vsel %vm415, %v3384, 0
    %v3391 = vsel %vm415, %v3386, 0
    %3393 = vmatprep.subr.bf16.mxu0 0
    %3394 = vmatpush1.bf16.xpose.msra.mxu0 0
    %3395 = vmatprep.subr.bf16.mxu0 0
    %3396 = vmatpush1.bf16.xpose.msra.mxu0 0
    %3397 = vmatprep.subr.bf16.mxu0 0
    %3398 = vmatpush1.bf16.xpose.msra.mxu0 0
    %3399 = vmatprep.subr.bf16.mxu0 0
    %3400 = vmatpush1.bf16.xpose.msra.mxu0 0
    %3401 = vmatprep.subr.bf16.mxu0 0
    %3402 = vmatpush1.bf16.xpose.msra.mxu0 0
    %3403 = vmatprep.subr.bf16.mxu0 0
    %3404 = vmatpush1.bf16.xpose.msra.mxu0 0
    %3405 = vmatprep.subr.bf16.mxu0 0
    %3406 = vmatpush1.bf16.xpose.msra.mxu0 0
    %3407 = vmatprep.subr.bf16.mxu0 0
    %3408 = vmatpush1.bf16.xpose.msra.mxu0 %v3391
    %3409 = vmatprep.subr.bf16.mxu0 0
    %3410 = vmatpush2.bf16.xpose.msra.mxu0 0
    %3411 = vmatprep.subr.bf16.mxu0 0
    %3412 = vmatpush2.bf16.xpose.msra.mxu0 0
    %3413 = vmatprep.subr.bf16.mxu0 0
    %3414 = vmatpush2.bf16.xpose.msra.mxu0 0
    %3415 = vmatprep.subr.bf16.mxu0 0
    %3416 = vmatpush2.bf16.xpose.msra.mxu0 0
    %3417 = vmatprep.subr.bf16.mxu0 0
    %3418 = vmatpush2.bf16.xpose.msra.mxu0 0
    %3419 = vmatprep.subr.bf16.mxu0 0
    %3420 = vmatpush2.bf16.xpose.msra.mxu0 0
    %3421 = vmatprep.subr.bf16.mxu0 0
    %3422 = vmatpush2.bf16.xpose.msra.mxu0 0
    %3423 = vmatprep.subr.bf16.mxu0 0
    %3424 = vmatpush2.bf16.xpose.msra.mxu0 0
    %3425 = vmatprep.mubr.bf16.mxu0 0
    %3426 = vmatmul.mubr.bf16.gmra.mxu0 %v3388
    %v3427 = vpop.f32.mrf.mxu0
    %v3428 = vadd.f32 %v390, %v3427
    %v3429 = vpop.f32.mrf.mxu0
    %v3430 = vpop.f32.mrf.mxu0
    %v3431 = vpop.f32.mrf.mxu0
    %3432 = vdwg.mxu0
    %3433 = vrot.lane.b32.xlu0 %v393, 32
    %v3434 = vpop.permute.xlu0 %3433
    %3435 = vrot.lane.b32.xlu0 %v401, 32
    %v3436 = vpop.permute.xlu0 %3435
    %v3438 = vsel %vm415, %v3434, 0
    %v3441 = vsel %vm415, %v3436, 0
    %3443 = vmatprep.subr.bf16.mxu0 0
    %3444 = vmatpush1.bf16.xpose.msra.mxu0 0
    %3445 = vmatprep.subr.bf16.mxu0 0
    %3446 = vmatpush1.bf16.xpose.msra.mxu0 0
    %3447 = vmatprep.subr.bf16.mxu0 0
    %3448 = vmatpush1.bf16.xpose.msra.mxu0 0
    %3449 = vmatprep.subr.bf16.mxu0 0
    %3450 = vmatpush1.bf16.xpose.msra.mxu0 0
    %3451 = vmatprep.subr.bf16.mxu0 0
    %3452 = vmatpush1.bf16.xpose.msra.mxu0 0
    %3453 = vmatprep.subr.bf16.mxu0 0
    %3454 = vmatpush1.bf16.xpose.msra.mxu0 0
    %3455 = vmatprep.subr.bf16.mxu0 0
    %3456 = vmatpush1.bf16.xpose.msra.mxu0 0
    %3457 = vmatprep.subr.bf16.mxu0 0
    %3458 = vmatpush1.bf16.xpose.msra.mxu0 %v3441
    %3459 = vmatprep.subr.bf16.mxu0 0
    %3460 = vmatpush2.bf16.xpose.msra.mxu0 0
    %3461 = vmatprep.subr.bf16.mxu0 0
    %3462 = vmatpush2.bf16.xpose.msra.mxu0 0
    %3463 = vmatprep.subr.bf16.mxu0 0
    %3464 = vmatpush2.bf16.xpose.msra.mxu0 0
    %3465 = vmatprep.subr.bf16.mxu0 0
    %3466 = vmatpush2.bf16.xpose.msra.mxu0 0
    %3467 = vmatprep.subr.bf16.mxu0 0
    %3468 = vmatpush2.bf16.xpose.msra.mxu0 0
    %3469 = vmatprep.subr.bf16.mxu0 0
    %3470 = vmatpush2.bf16.xpose.msra.mxu0 0
    %3471 = vmatprep.subr.bf16.mxu0 0
    %3472 = vmatpush2.bf16.xpose.msra.mxu0 0
    %3473 = vmatprep.subr.bf16.mxu0 0
    %3474 = vmatpush2.bf16.xpose.msra.mxu0 0
    %3475 = vmatprep.mubr.bf16.mxu0 0
    %3476 = vmatmul.mubr.bf16.gmra.mxu0 %v3438
    %v3477 = vpop.f32.mrf.mxu0
    %v3478 = vadd.f32 %v390, %v3477
    %v3479 = vpop.f32.mrf.mxu0
    %v3480 = vpop.f32.mrf.mxu0
    %v3481 = vpop.f32.mrf.mxu0
    %3482 = vdwg.mxu0
    %3483 = vrot.lane.b32.xlu0 %v394, 32
    %v3484 = vpop.permute.xlu0 %3483
    %3485 = vrot.lane.b32.xlu0 %v402, 32
    %v3486 = vpop.permute.xlu0 %3485
    %v3488 = vsel %vm415, %v3484, 0
    %v3491 = vsel %vm415, %v3486, 0
    %3493 = vmatprep.subr.bf16.mxu0 0
    %3494 = vmatpush1.bf16.xpose.msra.mxu0 0
    %3495 = vmatprep.subr.bf16.mxu0 0
    %3496 = vmatpush1.bf16.xpose.msra.mxu0 0
    %3497 = vmatprep.subr.bf16.mxu0 0
    %3498 = vmatpush1.bf16.xpose.msra.mxu0 0
    %3499 = vmatprep.subr.bf16.mxu0 0
    %3500 = vmatpush1.bf16.xpose.msra.mxu0 0
    %3501 = vmatprep.subr.bf16.mxu0 0
    %3502 = vmatpush1.bf16.xpose.msra.mxu0 0
    %3503 = vmatprep.subr.bf16.mxu0 0
    %3504 = vmatpush1.bf16.xpose.msra.mxu0 0
    %3505 = vmatprep.subr.bf16.mxu0 0
    %3506 = vmatpush1.bf16.xpose.msra.mxu0 0
    %3507 = vmatprep.subr.bf16.mxu0 0
    %3508 = vmatpush1.bf16.xpose.msra.mxu0 %v3491
    %3509 = vmatprep.subr.bf16.mxu0 0
    %3510 = vmatpush2.bf16.xpose.msra.mxu0 0
    %3511 = vmatprep.subr.bf16.mxu0 0
    %3512 = vmatpush2.bf16.xpose.msra.mxu0 0
    %3513 = vmatprep.subr.bf16.mxu0 0
    %3514 = vmatpush2.bf16.xpose.msra.mxu0 0
    %3515 = vmatprep.subr.bf16.mxu0 0
    %3516 = vmatpush2.bf16.xpose.msra.mxu0 0
    %3517 = vmatprep.subr.bf16.mxu0 0
    %3518 = vmatpush2.bf16.xpose.msra.mxu0 0
    %3519 = vmatprep.subr.bf16.mxu0 0
    %3520 = vmatpush2.bf16.xpose.msra.mxu0 0
    %3521 = vmatprep.subr.bf16.mxu0 0
    %3522 = vmatpush2.bf16.xpose.msra.mxu0 0
    %3523 = vmatprep.subr.bf16.mxu0 0
    %3524 = vmatpush2.bf16.xpose.msra.mxu0 0
    %3525 = vmatprep.mubr.bf16.mxu0 0
    %3526 = vmatmul.mubr.bf16.gmra.mxu0 %v3488
    %v3527 = vpop.f32.mrf.mxu0
    %v3528 = vadd.f32 %v390, %v3527
    %v3529 = vpop.f32.mrf.mxu0
    %v3530 = vpop.f32.mrf.mxu0
    %v3531 = vpop.f32.mrf.mxu0
    %3532 = vdwg.mxu0
    %3533 = vrot.lane.b32.xlu0 %v395, 32
    %v3534 = vpop.permute.xlu0 %3533
    %3535 = vrot.lane.b32.xlu0 %v403, 32
    %v3536 = vpop.permute.xlu0 %3535
    %v3538 = vsel %vm415, %v3534, 0
    %v3541 = vsel %vm415, %v3536, 0
    %3543 = vmatprep.subr.bf16.mxu0 0
    %3544 = vmatpush1.bf16.xpose.msra.mxu0 0
    %3545 = vmatprep.subr.bf16.mxu0 0
    %3546 = vmatpush1.bf16.xpose.msra.mxu0 0
    %3547 = vmatprep.subr.bf16.mxu0 0
    %3548 = vmatpush1.bf16.xpose.msra.mxu0 0
    %3549 = vmatprep.subr.bf16.mxu0 0
    %3550 = vmatpush1.bf16.xpose.msra.mxu0 0
    %3551 = vmatprep.subr.bf16.mxu0 0
    %3552 = vmatpush1.bf16.xpose.msra.mxu0 0
    %3553 = vmatprep.subr.bf16.mxu0 0
    %3554 = vmatpush1.bf16.xpose.msra.mxu0 0
    %3555 = vmatprep.subr.bf16.mxu0 0
    %3556 = vmatpush1.bf16.xpose.msra.mxu0 0
    %3557 = vmatprep.subr.bf16.mxu0 0
    %3558 = vmatpush1.bf16.xpose.msra.mxu0 %v3541
    %3559 = vmatprep.subr.bf16.mxu0 0
    %3560 = vmatpush2.bf16.xpose.msra.mxu0 0
    %3561 = vmatprep.subr.bf16.mxu0 0
    %3562 = vmatpush2.bf16.xpose.msra.mxu0 0
    %3563 = vmatprep.subr.bf16.mxu0 0
    %3564 = vmatpush2.bf16.xpose.msra.mxu0 0
    %3565 = vmatprep.subr.bf16.mxu0 0
    %3566 = vmatpush2.bf16.xpose.msra.mxu0 0
    %3567 = vmatprep.subr.bf16.mxu0 0
    %3568 = vmatpush2.bf16.xpose.msra.mxu0 0
    %3569 = vmatprep.subr.bf16.mxu0 0
    %3570 = vmatpush2.bf16.xpose.msra.mxu0 0
    %3571 = vmatprep.subr.bf16.mxu0 0
    %3572 = vmatpush2.bf16.xpose.msra.mxu0 0
    %3573 = vmatprep.subr.bf16.mxu0 0
    %3574 = vmatpush2.bf16.xpose.msra.mxu0 0
    %3575 = vmatprep.mubr.bf16.mxu0 0
    %3576 = vmatmul.mubr.bf16.gmra.mxu0 %v3538
    %v3577 = vpop.f32.mrf.mxu0
    %v3578 = vadd.f32 %v390, %v3577
    %v3579 = vpop.f32.mrf.mxu0
    %v3580 = vpop.f32.mrf.mxu0
    %v3581 = vpop.f32.mrf.mxu0
    %3582 = vdwg.mxu0
    %3583 = vrot.lane.b32.xlu0 %v396, 32
    %v3584 = vpop.permute.xlu0 %3583
    %3585 = vrot.lane.b32.xlu0 %v404, 32
    %v3586 = vpop.permute.xlu0 %3585
    %v3588 = vsel %vm415, %v3584, 0
    %v3591 = vsel %vm415, %v3586, 0
    %3593 = vmatprep.subr.bf16.mxu0 0
    %3594 = vmatpush1.bf16.xpose.msra.mxu0 0
    %3595 = vmatprep.subr.bf16.mxu0 0
    %3596 = vmatpush1.bf16.xpose.msra.mxu0 0
    %3597 = vmatprep.subr.bf16.mxu0 0
    %3598 = vmatpush1.bf16.xpose.msra.mxu0 0
    %3599 = vmatprep.subr.bf16.mxu0 0
    %3600 = vmatpush1.bf16.xpose.msra.mxu0 0
    %3601 = vmatprep.subr.bf16.mxu0 0
    %3602 = vmatpush1.bf16.xpose.msra.mxu0 0
    %3603 = vmatprep.subr.bf16.mxu0 0
    %3604 = vmatpush1.bf16.xpose.msra.mxu0 0
    %3605 = vmatprep.subr.bf16.mxu0 0
    %3606 = vmatpush1.bf16.xpose.msra.mxu0 0
    %3607 = vmatprep.subr.bf16.mxu0 0
    %3608 = vmatpush1.bf16.xpose.msra.mxu0 %v3591
    %3609 = vmatprep.subr.bf16.mxu0 0
    %3610 = vmatpush2.bf16.xpose.msra.mxu0 0
    %3611 = vmatprep.subr.bf16.mxu0 0
    %3612 = vmatpush2.bf16.xpose.msra.mxu0 0
    %3613 = vmatprep.subr.bf16.mxu0 0
    %3614 = vmatpush2.bf16.xpose.msra.mxu0 0
    %3615 = vmatprep.subr.bf16.mxu0 0
    %3616 = vmatpush2.bf16.xpose.msra.mxu0 0
    %3617 = vmatprep.subr.bf16.mxu0 0
    %3618 = vmatpush2.bf16.xpose.msra.mxu0 0
    %3619 = vmatprep.subr.bf16.mxu0 0
    %3620 = vmatpush2.bf16.xpose.msra.mxu0 0
    %3621 = vmatprep.subr.bf16.mxu0 0
    %3622 = vmatpush2.bf16.xpose.msra.mxu0 0
    %3623 = vmatprep.subr.bf16.mxu0 0
    %3624 = vmatpush2.bf16.xpose.msra.mxu0 0
    %3625 = vmatprep.mubr.bf16.mxu0 0
    %3626 = vmatmul.mubr.bf16.gmra.mxu0 %v3588
    %v3627 = vpop.f32.mrf.mxu0
    %v3628 = vadd.f32 %v390, %v3627
    %v3629 = vpop.f32.mrf.mxu0
    %v3630 = vpop.f32.mrf.mxu0
    %v3631 = vpop.f32.mrf.mxu0
    %3632 = vdwg.mxu0
    %3633 = vrot.lane.b32.xlu0 %v397, 32
    %v3634 = vpop.permute.xlu0 %3633
    %3635 = vrot.lane.b32.xlu0 %v405, 32
    %v3636 = vpop.permute.xlu0 %3635
    %v3638 = vsel %vm415, %v3634, 0
    %v3641 = vsel %vm415, %v3636, 0
    %3643 = vmatprep.subr.bf16.mxu0 0
    %3644 = vmatpush1.bf16.xpose.msra.mxu0 0
    %3645 = vmatprep.subr.bf16.mxu0 0
    %3646 = vmatpush1.bf16.xpose.msra.mxu0 0
    %3647 = vmatprep.subr.bf16.mxu0 0
    %3648 = vmatpush1.bf16.xpose.msra.mxu0 0
    %3649 = vmatprep.subr.bf16.mxu0 0
    %3650 = vmatpush1.bf16.xpose.msra.mxu0 0
    %3651 = vmatprep.subr.bf16.mxu0 0
    %3652 = vmatpush1.bf16.xpose.msra.mxu0 0
    %3653 = vmatprep.subr.bf16.mxu0 0
    %3654 = vmatpush1.bf16.xpose.msra.mxu0 0
    %3655 = vmatprep.subr.bf16.mxu0 0
    %3656 = vmatpush1.bf16.xpose.msra.mxu0 0
    %3657 = vmatprep.subr.bf16.mxu0 0
    %3658 = vmatpush1.bf16.xpose.msra.mxu0 %v3641
    %3659 = vmatprep.subr.bf16.mxu0 0
    %3660 = vmatpush2.bf16.xpose.msra.mxu0 0
    %3661 = vmatprep.subr.bf16.mxu0 0
    %3662 = vmatpush2.bf16.xpose.msra.mxu0 0
    %3663 = vmatprep.subr.bf16.mxu0 0
    %3664 = vmatpush2.bf16.xpose.msra.mxu0 0
    %3665 = vmatprep.subr.bf16.mxu0 0
    %3666 = vmatpush2.bf16.xpose.msra.mxu0 0
    %3667 = vmatprep.subr.bf16.mxu0 0
    %3668 = vmatpush2.bf16.xpose.msra.mxu0 0
    %3669 = vmatprep.subr.bf16.mxu0 0
    %3670 = vmatpush2.bf16.xpose.msra.mxu0 0
    %3671 = vmatprep.subr.bf16.mxu0 0
    %3672 = vmatpush2.bf16.xpose.msra.mxu0 0
    %3673 = vmatprep.subr.bf16.mxu0 0
    %3674 = vmatpush2.bf16.xpose.msra.mxu0 0
    %3675 = vmatprep.mubr.bf16.mxu0 0
    %3676 = vmatmul.mubr.bf16.gmra.mxu0 %v3638
    %v3677 = vpop.f32.mrf.mxu0
    %v3678 = vadd.f32 %v390, %v3677
    %v3679 = vpop.f32.mrf.mxu0
    %v3680 = vpop.f32.mrf.mxu0
    %v3681 = vpop.f32.mrf.mxu0
    %3682 = vdwg.mxu0
    %3683 = vrot.lane.b32.xlu0 %v398, 32
    %v3684 = vpop.permute.xlu0 %3683
    %3685 = vrot.lane.b32.xlu0 %v406, 32
    %v3686 = vpop.permute.xlu0 %3685
    %v3688 = vsel %vm415, %v3684, 0
    %v3691 = vsel %vm415, %v3686, 0
    %3693 = vmatprep.subr.bf16.mxu0 0
    %3694 = vmatpush1.bf16.xpose.msra.mxu0 0
    %3695 = vmatprep.subr.bf16.mxu0 0
    %3696 = vmatpush1.bf16.xpose.msra.mxu0 0
    %3697 = vmatprep.subr.bf16.mxu0 0
    %3698 = vmatpush1.bf16.xpose.msra.mxu0 0
    %3699 = vmatprep.subr.bf16.mxu0 0
    %3700 = vmatpush1.bf16.xpose.msra.mxu0 0
    %3701 = vmatprep.subr.bf16.mxu0 0
    %3702 = vmatpush1.bf16.xpose.msra.mxu0 0
    %3703 = vmatprep.subr.bf16.mxu0 0
    %3704 = vmatpush1.bf16.xpose.msra.mxu0 0
    %3705 = vmatprep.subr.bf16.mxu0 0
    %3706 = vmatpush1.bf16.xpose.msra.mxu0 0
    %3707 = vmatprep.subr.bf16.mxu0 0
    %3708 = vmatpush1.bf16.xpose.msra.mxu0 %v3691
    %3709 = vmatprep.subr.bf16.mxu0 0
    %3710 = vmatpush2.bf16.xpose.msra.mxu0 0
    %3711 = vmatprep.subr.bf16.mxu0 0
    %3712 = vmatpush2.bf16.xpose.msra.mxu0 0
    %3713 = vmatprep.subr.bf16.mxu0 0
    %3714 = vmatpush2.bf16.xpose.msra.mxu0 0
    %3715 = vmatprep.subr.bf16.mxu0 0
    %3716 = vmatpush2.bf16.xpose.msra.mxu0 0
    %3717 = vmatprep.subr.bf16.mxu0 0
    %3718 = vmatpush2.bf16.xpose.msra.mxu0 0
    %3719 = vmatprep.subr.bf16.mxu0 0
    %3720 = vmatpush2.bf16.xpose.msra.mxu0 0
    %3721 = vmatprep.subr.bf16.mxu0 0
    %3722 = vmatpush2.bf16.xpose.msra.mxu0 0
    %3723 = vmatprep.subr.bf16.mxu0 0
    %3724 = vmatpush2.bf16.xpose.msra.mxu0 0
    %3725 = vmatprep.mubr.bf16.mxu0 0
    %3726 = vmatmul.mubr.bf16.gmra.mxu0 %v3688
    %v3727 = vpop.f32.mrf.mxu0
    %v3728 = vadd.f32 %v390, %v3727
    %v3729 = vpop.f32.mrf.mxu0
    %v3730 = vpop.f32.mrf.mxu0
    %v3731 = vpop.f32.mrf.mxu0
    %3732 = vdwg.mxu0
    %v3733 = vsel %vm784, %v3378, -inf
    %3734 = vmax.xlane.f32.xlu0 %v3733
    %v3735 = vpop.xlane.xlu0 %3734
    %v3736 = vsel %vm784, %v3428, -inf
    %3737 = vmax.xlane.f32.xlu0 %v3736
    %v3738 = vpop.xlane.xlu0 %3737
    %v3739 = vsel %vm784, %v3478, -inf
    %3740 = vmax.xlane.f32.xlu0 %v3739
    %v3741 = vpop.xlane.xlu0 %3740
    %v3742 = vsel %vm784, %v3528, -inf
    %3743 = vmax.xlane.f32.xlu0 %v3742
    %v3744 = vpop.xlane.xlu0 %3743
    %v3745 = vsel %vm784, %v3578, -inf
    %3746 = vmax.xlane.f32.xlu0 %v3745
    %v3747 = vpop.xlane.xlu0 %3746
    %v3748 = vsel %vm784, %v3628, -inf
    %3749 = vmax.xlane.f32.xlu0 %v3748
    %v3750 = vpop.xlane.xlu0 %3749
    %v3751 = vsel %vm784, %v3678, -inf
    %3752 = vmax.xlane.f32.xlu0 %v3751
    %v3753 = vpop.xlane.xlu0 %3752
    %v3754 = vsel %vm784, %v3728, -inf
    %3755 = vmax.xlane.f32.xlu0 %v3754
    %v3756 = vpop.xlane.xlu0 %3755
    %v3757 = vsub.f32 %v3378, %v3735
    %v3758 = vsub.f32 %v3428, %v3738
    %v3759 = vsub.f32 %v3478, %v3741
    %v3760 = vsub.f32 %v3528, %v3744
    %v3761 = vsub.f32 %v3578, %v3747
    %v3762 = vsub.f32 %v3628, %v3750
    %v3763 = vsub.f32 %v3678, %v3753
    %v3764 = vsub.f32 %v3728, %v3756
    %v3765 = vmul.f32 %v3757, 1.442695
    %v3766 = vpow.pop %v3765
    %v3767 = vmul.f32 %v3758, 1.442695
    %v3768 = vpow.pop %v3767
    %v3769 = vmul.f32 %v3759, 1.442695
    %v3770 = vpow.pop %v3769
    %v3771 = vmul.f32 %v3760, 1.442695
    %v3772 = vpow.pop %v3771
    %v3773 = vmul.f32 %v3761, 1.442695
    %v3774 = vpow.pop %v3773
    %v3775 = vmul.f32 %v3762, 1.442695
    %v3776 = vpow.pop %v3775
    %v3777 = vmul.f32 %v3763, 1.442695
    %v3778 = vpow.pop %v3777
    %v3779 = vmul.f32 %v3764, 1.442695
    %v3780 = vpow.pop %v3779
    %v3781 = vsel %vm784, %v3766, 0.0
    %3782 = vadd.xlane.f32.xlu0 %v3781
    %v3783 = vpop.xlane.xlu0 %3782
    %v3784 = vsel %vm784, %v3768, 0.0
    %3785 = vadd.xlane.f32.xlu0 %v3784
    %v3786 = vpop.xlane.xlu0 %3785
    %v3787 = vsel %vm784, %v3770, 0.0
    %3788 = vadd.xlane.f32.xlu0 %v3787
    %v3789 = vpop.xlane.xlu0 %3788
    %v3790 = vsel %vm784, %v3772, 0.0
    %3791 = vadd.xlane.f32.xlu0 %v3790
    %v3792 = vpop.xlane.xlu0 %3791
    %v3793 = vsel %vm784, %v3774, 0.0
    %3794 = vadd.xlane.f32.xlu0 %v3793
    %v3795 = vpop.xlane.xlu0 %3794
    %v3796 = vsel %vm784, %v3776, 0.0
    %3797 = vadd.xlane.f32.xlu0 %v3796
    %v3798 = vpop.xlane.xlu0 %3797
    %v3799 = vsel %vm784, %v3778, 0.0
    %3800 = vadd.xlane.f32.xlu0 %v3799
    %v3801 = vpop.xlane.xlu0 %3800
    %v3802 = vsel %vm784, %v3780, 0.0
    %3803 = vadd.xlane.f32.xlu0 %v3802
    %v3804 = vpop.xlane.xlu0 %3803
    %v3805 = vrcp.pop %v3783
    %v3806 = vrcp.pop %v3786
    %v3807 = vrcp.pop %v3789
    %v3808 = vrcp.pop %v3792
    %v3809 = vrcp.pop %v3795
    %v3810 = vrcp.pop %v3798
    %v3811 = vrcp.pop %v3801
    %v3812 = vrcp.pop %v3804
    %v3813 = vmul.f32 %v3766, %v3805
    %v3814 = vmul.f32 %v3768, %v3806
    %v3815 = vmul.f32 %v3770, %v3807
    %v3816 = vmul.f32 %v3772, %v3808
    %v3817 = vmul.f32 %v3774, %v3809
    %v3818 = vmul.f32 %v3776, %v3810
    %v3819 = vmul.f32 %v3778, %v3811
    %v3820 = vmul.f32 %v3780, %v3812
    %v3821 = vpack.c.bf16 %v3813, %v3813
    %v3822 = vpack.c.bf16 %v3814, %v3814
    %v3823 = vpack.c.bf16 %v3815, %v3815
    %v3824 = vpack.c.bf16 %v3816, %v3816
    %v3825 = vpack.c.bf16 %v3817, %v3817
    %v3826 = vpack.c.bf16 %v3818, %v3818
    %v3827 = vpack.c.bf16 %v3819, %v3819
    %v3828 = vpack.c.bf16 %v3820, %v3820
    %3829 = vrot.lane.b32.xlu0 %v407, 32
    %v3830 = vpop.permute.xlu0 %3829
    %v3832 = vsel %vm784, %v3821, 0
    %v3835 = vsel %vm884, %v3830, 0
    %3837 = vmatprep.subr.bf16.mxu0 0
    %3838 = vmatpush1.bf16.msra.mxu0 0
    %3839 = vmatprep.subr.bf16.mxu0 0
    %3840 = vmatpush1.bf16.msra.mxu0 0
    %3841 = vmatprep.subr.bf16.mxu0 0
    %3842 = vmatpush1.bf16.msra.mxu0 0
    %3843 = vmatprep.subr.bf16.mxu0 0
    %3844 = vmatpush1.bf16.msra.mxu0 0
    %3845 = vmatprep.subr.bf16.mxu0 0
    %3846 = vmatpush1.bf16.msra.mxu0 0
    %3847 = vmatprep.subr.bf16.mxu0 0
    %3848 = vmatpush1.bf16.msra.mxu0 0
    %3849 = vmatprep.subr.bf16.mxu0 0
    %3850 = vmatpush1.bf16.msra.mxu0 0
    %3851 = vmatprep.subr.bf16.mxu0 0
    %3852 = vmatpush1.bf16.msra.mxu0 %v3835
    %3853 = vmatprep.subr.bf16.mxu0 0
    %3854 = vmatpush2.bf16.msra.mxu0 0
    %3855 = vmatprep.subr.bf16.mxu0 0
    %3856 = vmatpush2.bf16.msra.mxu0 0
    %3857 = vmatprep.subr.bf16.mxu0 0
    %3858 = vmatpush2.bf16.msra.mxu0 0
    %3859 = vmatprep.subr.bf16.mxu0 0
    %3860 = vmatpush2.bf16.msra.mxu0 0
    %3861 = vmatprep.subr.bf16.mxu0 0
    %3862 = vmatpush2.bf16.msra.mxu0 0
    %3863 = vmatprep.subr.bf16.mxu0 0
    %3864 = vmatpush2.bf16.msra.mxu0 0
    %3865 = vmatprep.subr.bf16.mxu0 0
    %3866 = vmatpush2.bf16.msra.mxu0 0
    %3867 = vmatprep.subr.bf16.mxu0 0
    %3868 = vmatpush2.bf16.msra.mxu0 0
    %3869 = vmatprep.mubr.bf16.mxu0 0
    %3870 = vmatmul.mubr.bf16.gmra.mxu0 %v3832
    %v3871 = vpop.f32.mrf.mxu0
    %v3872 = vadd.f32 0.0, %v3871
    %v3873 = vpop.f32.mrf.mxu0
    %v3874 = vpop.f32.mrf.mxu0
    %v3875 = vpop.f32.mrf.mxu0
    %3876 = vdwg.mxu0
    %3877 = vrot.lane.b32.xlu0 %v408, 32
    %v3878 = vpop.permute.xlu0 %3877
    %v3880 = vsel %vm784, %v3822, 0
    %v3883 = vsel %vm884, %v3878, 0
    %3885 = vmatprep.subr.bf16.mxu0 0
    %3886 = vmatpush1.bf16.msra.mxu0 0
    %3887 = vmatprep.subr.bf16.mxu0 0
    %3888 = vmatpush1.bf16.msra.mxu0 0
    %3889 = vmatprep.subr.bf16.mxu0 0
    %3890 = vmatpush1.bf16.msra.mxu0 0
    %3891 = vmatprep.subr.bf16.mxu0 0
    %3892 = vmatpush1.bf16.msra.mxu0 0
    %3893 = vmatprep.subr.bf16.mxu0 0
    %3894 = vmatpush1.bf16.msra.mxu0 0
    %3895 = vmatprep.subr.bf16.mxu0 0
    %3896 = vmatpush1.bf16.msra.mxu0 0
    %3897 = vmatprep.subr.bf16.mxu0 0
    %3898 = vmatpush1.bf16.msra.mxu0 0
    %3899 = vmatprep.subr.bf16.mxu0 0
    %3900 = vmatpush1.bf16.msra.mxu0 %v3883
    %3901 = vmatprep.subr.bf16.mxu0 0
    %3902 = vmatpush2.bf16.msra.mxu0 0
    %3903 = vmatprep.subr.bf16.mxu0 0
    %3904 = vmatpush2.bf16.msra.mxu0 0
    %3905 = vmatprep.subr.bf16.mxu0 0
    %3906 = vmatpush2.bf16.msra.mxu0 0
    %3907 = vmatprep.subr.bf16.mxu0 0
    %3908 = vmatpush2.bf16.msra.mxu0 0
    %3909 = vmatprep.subr.bf16.mxu0 0
    %3910 = vmatpush2.bf16.msra.mxu0 0
    %3911 = vmatprep.subr.bf16.mxu0 0
    %3912 = vmatpush2.bf16.msra.mxu0 0
    %3913 = vmatprep.subr.bf16.mxu0 0
    %3914 = vmatpush2.bf16.msra.mxu0 0
    %3915 = vmatprep.subr.bf16.mxu0 0
    %3916 = vmatpush2.bf16.msra.mxu0 0
    %3917 = vmatprep.mubr.bf16.mxu0 0
    %3918 = vmatmul.mubr.bf16.gmra.mxu0 %v3880
    %v3919 = vpop.f32.mrf.mxu0
    %v3920 = vadd.f32 0.0, %v3919
    %v3921 = vpop.f32.mrf.mxu0
    %v3922 = vpop.f32.mrf.mxu0
    %v3923 = vpop.f32.mrf.mxu0
    %3924 = vdwg.mxu0
    %3925 = vrot.lane.b32.xlu0 %v409, 32
    %v3926 = vpop.permute.xlu0 %3925
    %v3928 = vsel %vm784, %v3823, 0
    %v3931 = vsel %vm884, %v3926, 0
    %3933 = vmatprep.subr.bf16.mxu0 0
    %3934 = vmatpush1.bf16.msra.mxu0 0
    %3935 = vmatprep.subr.bf16.mxu0 0
    %3936 = vmatpush1.bf16.msra.mxu0 0
    %3937 = vmatprep.subr.bf16.mxu0 0
    %3938 = vmatpush1.bf16.msra.mxu0 0
    %3939 = vmatprep.subr.bf16.mxu0 0
    %3940 = vmatpush1.bf16.msra.mxu0 0
    %3941 = vmatprep.subr.bf16.mxu0 0
    %3942 = vmatpush1.bf16.msra.mxu0 0
    %3943 = vmatprep.subr.bf16.mxu0 0
    %3944 = vmatpush1.bf16.msra.mxu0 0
    %3945 = vmatprep.subr.bf16.mxu0 0
    %3946 = vmatpush1.bf16.msra.mxu0 0
    %3947 = vmatprep.subr.bf16.mxu0 0
    %3948 = vmatpush1.bf16.msra.mxu0 %v3931
    %3949 = vmatprep.subr.bf16.mxu0 0
    %3950 = vmatpush2.bf16.msra.mxu0 0
    %3951 = vmatprep.subr.bf16.mxu0 0
    %3952 = vmatpush2.bf16.msra.mxu0 0
    %3953 = vmatprep.subr.bf16.mxu0 0
    %3954 = vmatpush2.bf16.msra.mxu0 0
    %3955 = vmatprep.subr.bf16.mxu0 0
    %3956 = vmatpush2.bf16.msra.mxu0 0
    %3957 = vmatprep.subr.bf16.mxu0 0
    %3958 = vmatpush2.bf16.msra.mxu0 0
    %3959 = vmatprep.subr.bf16.mxu0 0
    %3960 = vmatpush2.bf16.msra.mxu0 0
    %3961 = vmatprep.subr.bf16.mxu0 0
    %3962 = vmatpush2.bf16.msra.mxu0 0
    %3963 = vmatprep.subr.bf16.mxu0 0
    %3964 = vmatpush2.bf16.msra.mxu0 0
    %3965 = vmatprep.mubr.bf16.mxu0 0
    %3966 = vmatmul.mubr.bf16.gmra.mxu0 %v3928
    %v3967 = vpop.f32.mrf.mxu0
    %v3968 = vadd.f32 0.0, %v3967
    %v3969 = vpop.f32.mrf.mxu0
    %v3970 = vpop.f32.mrf.mxu0
    %v3971 = vpop.f32.mrf.mxu0
    %3972 = vdwg.mxu0
    %3973 = vrot.lane.b32.xlu0 %v410, 32
    %v3974 = vpop.permute.xlu0 %3973
    %v3976 = vsel %vm784, %v3824, 0
    %v3979 = vsel %vm884, %v3974, 0
    %3981 = vmatprep.subr.bf16.mxu0 0
    %3982 = vmatpush1.bf16.msra.mxu0 0
    %3983 = vmatprep.subr.bf16.mxu0 0
    %3984 = vmatpush1.bf16.msra.mxu0 0
    %3985 = vmatprep.subr.bf16.mxu0 0
    %3986 = vmatpush1.bf16.msra.mxu0 0
    %3987 = vmatprep.subr.bf16.mxu0 0
    %3988 = vmatpush1.bf16.msra.mxu0 0
    %3989 = vmatprep.subr.bf16.mxu0 0
    %3990 = vmatpush1.bf16.msra.mxu0 0
    %3991 = vmatprep.subr.bf16.mxu0 0
    %3992 = vmatpush1.bf16.msra.mxu0 0
    %3993 = vmatprep.subr.bf16.mxu0 0
    %3994 = vmatpush1.bf16.msra.mxu0 0
    %3995 = vmatprep.subr.bf16.mxu0 0
    %3996 = vmatpush1.bf16.msra.mxu0 %v3979
    %3997 = vmatprep.subr.bf16.mxu0 0
    %3998 = vmatpush2.bf16.msra.mxu0 0
    %3999 = vmatprep.subr.bf16.mxu0 0
    %4000 = vmatpush2.bf16.msra.mxu0 0
    %4001 = vmatprep.subr.bf16.mxu0 0
    %4002 = vmatpush2.bf16.msra.mxu0 0
    %4003 = vmatprep.subr.bf16.mxu0 0
    %4004 = vmatpush2.bf16.msra.mxu0 0
    %4005 = vmatprep.subr.bf16.mxu0 0
    %4006 = vmatpush2.bf16.msra.mxu0 0
    %4007 = vmatprep.subr.bf16.mxu0 0
    %4008 = vmatpush2.bf16.msra.mxu0 0
    %4009 = vmatprep.subr.bf16.mxu0 0
    %4010 = vmatpush2.bf16.msra.mxu0 0
    %4011 = vmatprep.subr.bf16.mxu0 0
    %4012 = vmatpush2.bf16.msra.mxu0 0
    %4013 = vmatprep.mubr.bf16.mxu0 0
    %4014 = vmatmul.mubr.bf16.gmra.mxu0 %v3976
    %v4015 = vpop.f32.mrf.mxu0
    %v4016 = vadd.f32 0.0, %v4015
    %v4017 = vpop.f32.mrf.mxu0
    %v4018 = vpop.f32.mrf.mxu0
    %v4019 = vpop.f32.mrf.mxu0
    %4020 = vdwg.mxu0
    %4021 = vrot.lane.b32.xlu0 %v411, 32
    %v4022 = vpop.permute.xlu0 %4021
    %v4024 = vsel %vm784, %v3825, 0
    %v4027 = vsel %vm884, %v4022, 0
    %4029 = vmatprep.subr.bf16.mxu0 0
    %4030 = vmatpush1.bf16.msra.mxu0 0
    %4031 = vmatprep.subr.bf16.mxu0 0
    %4032 = vmatpush1.bf16.msra.mxu0 0
    %4033 = vmatprep.subr.bf16.mxu0 0
    %4034 = vmatpush1.bf16.msra.mxu0 0
    %4035 = vmatprep.subr.bf16.mxu0 0
    %4036 = vmatpush1.bf16.msra.mxu0 0
    %4037 = vmatprep.subr.bf16.mxu0 0
    %4038 = vmatpush1.bf16.msra.mxu0 0
    %4039 = vmatprep.subr.bf16.mxu0 0
    %4040 = vmatpush1.bf16.msra.mxu0 0
    %4041 = vmatprep.subr.bf16.mxu0 0
    %4042 = vmatpush1.bf16.msra.mxu0 0
    %4043 = vmatprep.subr.bf16.mxu0 0
    %4044 = vmatpush1.bf16.msra.mxu0 %v4027
    %4045 = vmatprep.subr.bf16.mxu0 0
    %4046 = vmatpush2.bf16.msra.mxu0 0
    %4047 = vmatprep.subr.bf16.mxu0 0
    %4048 = vmatpush2.bf16.msra.mxu0 0
    %4049 = vmatprep.subr.bf16.mxu0 0
    %4050 = vmatpush2.bf16.msra.mxu0 0
    %4051 = vmatprep.subr.bf16.mxu0 0
    %4052 = vmatpush2.bf16.msra.mxu0 0
    %4053 = vmatprep.subr.bf16.mxu0 0
    %4054 = vmatpush2.bf16.msra.mxu0 0
    %4055 = vmatprep.subr.bf16.mxu0 0
    %4056 = vmatpush2.bf16.msra.mxu0 0
    %4057 = vmatprep.subr.bf16.mxu0 0
    %4058 = vmatpush2.bf16.msra.mxu0 0
    %4059 = vmatprep.subr.bf16.mxu0 0
    %4060 = vmatpush2.bf16.msra.mxu0 0
    %4061 = vmatprep.mubr.bf16.mxu0 0
    %4062 = vmatmul.mubr.bf16.gmra.mxu0 %v4024
    %v4063 = vpop.f32.mrf.mxu0
    %v4064 = vadd.f32 0.0, %v4063
    %v4065 = vpop.f32.mrf.mxu0
    %v4066 = vpop.f32.mrf.mxu0
    %v4067 = vpop.f32.mrf.mxu0
    %4068 = vdwg.mxu0
    %4069 = vrot.lane.b32.xlu0 %v412, 32
    %v4070 = vpop.permute.xlu0 %4069
    %v4072 = vsel %vm784, %v3826, 0
    %v4075 = vsel %vm884, %v4070, 0
    %4077 = vmatprep.subr.bf16.mxu0 0
    %4078 = vmatpush1.bf16.msra.mxu0 0
    %4079 = vmatprep.subr.bf16.mxu0 0
    %4080 = vmatpush1.bf16.msra.mxu0 0
    %4081 = vmatprep.subr.bf16.mxu0 0
    %4082 = vmatpush1.bf16.msra.mxu0 0
    %4083 = vmatprep.subr.bf16.mxu0 0
    %4084 = vmatpush1.bf16.msra.mxu0 0
    %4085 = vmatprep.subr.bf16.mxu0 0
    %4086 = vmatpush1.bf16.msra.mxu0 0
    %4087 = vmatprep.subr.bf16.mxu0 0
    %4088 = vmatpush1.bf16.msra.mxu0 0
    %4089 = vmatprep.subr.bf16.mxu0 0
    %4090 = vmatpush1.bf16.msra.mxu0 0
    %4091 = vmatprep.subr.bf16.mxu0 0
    %4092 = vmatpush1.bf16.msra.mxu0 %v4075
    %4093 = vmatprep.subr.bf16.mxu0 0
    %4094 = vmatpush2.bf16.msra.mxu0 0
    %4095 = vmatprep.subr.bf16.mxu0 0
    %4096 = vmatpush2.bf16.msra.mxu0 0
    %4097 = vmatprep.subr.bf16.mxu0 0
    %4098 = vmatpush2.bf16.msra.mxu0 0
    %4099 = vmatprep.subr.bf16.mxu0 0
    %4100 = vmatpush2.bf16.msra.mxu0 0
    %4101 = vmatprep.subr.bf16.mxu0 0
    %4102 = vmatpush2.bf16.msra.mxu0 0
    %4103 = vmatprep.subr.bf16.mxu0 0
    %4104 = vmatpush2.bf16.msra.mxu0 0
    %4105 = vmatprep.subr.bf16.mxu0 0
    %4106 = vmatpush2.bf16.msra.mxu0 0
    %4107 = vmatprep.subr.bf16.mxu0 0
    %4108 = vmatpush2.bf16.msra.mxu0 0
    %4109 = vmatprep.mubr.bf16.mxu0 0
    %4110 = vmatmul.mubr.bf16.gmra.mxu0 %v4072
    %v4111 = vpop.f32.mrf.mxu0
    %v4112 = vadd.f32 0.0, %v4111
    %v4113 = vpop.f32.mrf.mxu0
    %v4114 = vpop.f32.mrf.mxu0
    %v4115 = vpop.f32.mrf.mxu0
    %4116 = vdwg.mxu0
    %4117 = vrot.lane.b32.xlu0 %v413, 32
    %v4118 = vpop.permute.xlu0 %4117
    %v4120 = vsel %vm784, %v3827, 0
    %v4123 = vsel %vm884, %v4118, 0
    %4125 = vmatprep.subr.bf16.mxu0 0
    %4126 = vmatpush1.bf16.msra.mxu0 0
    %4127 = vmatprep.subr.bf16.mxu0 0
    %4128 = vmatpush1.bf16.msra.mxu0 0
    %4129 = vmatprep.subr.bf16.mxu0 0
    %4130 = vmatpush1.bf16.msra.mxu0 0
    %4131 = vmatprep.subr.bf16.mxu0 0
    %4132 = vmatpush1.bf16.msra.mxu0 0
    %4133 = vmatprep.subr.bf16.mxu0 0
    %4134 = vmatpush1.bf16.msra.mxu0 0
    %4135 = vmatprep.subr.bf16.mxu0 0
    %4136 = vmatpush1.bf16.msra.mxu0 0
    %4137 = vmatprep.subr.bf16.mxu0 0
    %4138 = vmatpush1.bf16.msra.mxu0 0
    %4139 = vmatprep.subr.bf16.mxu0 0
    %4140 = vmatpush1.bf16.msra.mxu0 %v4123
    %4141 = vmatprep.subr.bf16.mxu0 0
    %4142 = vmatpush2.bf16.msra.mxu0 0
    %4143 = vmatprep.subr.bf16.mxu0 0
    %4144 = vmatpush2.bf16.msra.mxu0 0
    %4145 = vmatprep.subr.bf16.mxu0 0
    %4146 = vmatpush2.bf16.msra.mxu0 0
    %4147 = vmatprep.subr.bf16.mxu0 0
    %4148 = vmatpush2.bf16.msra.mxu0 0
    %4149 = vmatprep.subr.bf16.mxu0 0
    %4150 = vmatpush2.bf16.msra.mxu0 0
    %4151 = vmatprep.subr.bf16.mxu0 0
    %4152 = vmatpush2.bf16.msra.mxu0 0
    %4153 = vmatprep.subr.bf16.mxu0 0
    %4154 = vmatpush2.bf16.msra.mxu0 0
    %4155 = vmatprep.subr.bf16.mxu0 0
    %4156 = vmatpush2.bf16.msra.mxu0 0
    %4157 = vmatprep.mubr.bf16.mxu0 0
    %4158 = vmatmul.mubr.bf16.gmra.mxu0 %v4120
    %v4159 = vpop.f32.mrf.mxu0
    %v4160 = vadd.f32 0.0, %v4159
    %v4161 = vpop.f32.mrf.mxu0
    %v4162 = vpop.f32.mrf.mxu0
    %v4163 = vpop.f32.mrf.mxu0
    %4164 = vdwg.mxu0
    %4165 = vrot.lane.b32.xlu0 %v414, 32
    %v4166 = vpop.permute.xlu0 %4165
    %v4168 = vsel %vm784, %v3828, 0
    %v4171 = vsel %vm884, %v4166, 0
    %4173 = vmatprep.subr.bf16.mxu0 0
    %4174 = vmatpush1.bf16.msra.mxu0 0
    %4175 = vmatprep.subr.bf16.mxu0 0
    %4176 = vmatpush1.bf16.msra.mxu0 0
    %4177 = vmatprep.subr.bf16.mxu0 0
    %4178 = vmatpush1.bf16.msra.mxu0 0
    %4179 = vmatprep.subr.bf16.mxu0 0
    %4180 = vmatpush1.bf16.msra.mxu0 0
    %4181 = vmatprep.subr.bf16.mxu0 0
    %4182 = vmatpush1.bf16.msra.mxu0 0
    %4183 = vmatprep.subr.bf16.mxu0 0
    %4184 = vmatpush1.bf16.msra.mxu0 0
    %4185 = vmatprep.subr.bf16.mxu0 0
    %4186 = vmatpush1.bf16.msra.mxu0 0
    %4187 = vmatprep.subr.bf16.mxu0 0
    %4188 = vmatpush1.bf16.msra.mxu0 %v4171
    %4189 = vmatprep.subr.bf16.mxu0 0
    %4190 = vmatpush2.bf16.msra.mxu0 0
    %4191 = vmatprep.subr.bf16.mxu0 0
    %4192 = vmatpush2.bf16.msra.mxu0 0
    %4193 = vmatprep.subr.bf16.mxu0 0
    %4194 = vmatpush2.bf16.msra.mxu0 0
    %4195 = vmatprep.subr.bf16.mxu0 0
    %4196 = vmatpush2.bf16.msra.mxu0 0
    %4197 = vmatprep.subr.bf16.mxu0 0
    %4198 = vmatpush2.bf16.msra.mxu0 0
    %4199 = vmatprep.subr.bf16.mxu0 0
    %4200 = vmatpush2.bf16.msra.mxu0 0
    %4201 = vmatprep.subr.bf16.mxu0 0
    %4202 = vmatpush2.bf16.msra.mxu0 0
    %4203 = vmatprep.subr.bf16.mxu0 0
    %4204 = vmatpush2.bf16.msra.mxu0 0
    %4205 = vmatprep.mubr.bf16.mxu0 0
    %4206 = vmatmul.mubr.bf16.gmra.mxu0 %v4168
    %v4207 = vpop.f32.mrf.mxu0
    %v4208 = vadd.f32 0.0, %v4207
    %v4209 = vpop.f32.mrf.mxu0
    %v4210 = vpop.f32.mrf.mxu0
    %v4211 = vpop.f32.mrf.mxu0
    %4212 = vdwg.mxu0
    %v4213 = vpack.c.bf16 %v3920, %v3872
    %v4214 = vpack.c.bf16 %v4016, %v3968
    %v4215 = vpack.c.bf16 %v4112, %v4064
    %v4216 = vpack.c.bf16 %v4208, %v4160
    %v4217 = vld [vmem:[#allocation2 + $0x12c] sm:$0xf]
    %v4218 = vld [vmem:[#allocation2 + $0x144] sm:$0xf]
    %v4219 = vld [vmem:[#allocation2 + $0x15c] sm:$0xf]
    %v4220 = vld [vmem:[#allocation2 + $0x174] sm:$0xf]
    %v4225 = vunpack.c.l.b16 %v4217
    %v4226 = vunpack.c.l.b16 %v4218
    %v4227 = vunpack.c.l.b16 %v4219
    %v4228 = vunpack.c.l.b16 %v4220
    %v4229 = vpack.c.b16 %v4226, %v4225
    %v4230 = vpack.c.b16 %v4228, %v4227
    %v4234 = vsel %vm415, %v4213, 0
    %v4237 = vsel %vm415, %v4214, 0
    %v4240 = vsel %vm415, %v4215, 0
    %v4243 = vsel %vm415, %v4216, 0
    %4245 = vmatprep.subr.bf16.mxu0 0
    %4246 = vmatpush1.bf16.msra.mxu0 0
    %4247 = vmatprep.subr.bf16.mxu0 0
    %4248 = vmatpush1.bf16.msra.mxu0 0
    %4249 = vmatprep.subr.bf16.mxu0 0
    %4250 = vmatpush1.bf16.msra.mxu0 0
    %4251 = vmatprep.subr.bf16.mxu0 0
    %4252 = vmatpush1.bf16.msra.mxu0 0
    %4253 = vmatprep.subr.bf16.mxu0 0
    %4254 = vmatpush1.bf16.msra.mxu0 0
    %4255 = vmatprep.subr.bf16.mxu0 0
    %4256 = vmatpush1.bf16.msra.mxu0 0
    %4257 = vmatprep.subr.bf16.mxu0 0
    %4258 = vmatpush1.bf16.msra.mxu0 %v4230
    %4259 = vmatprep.subr.bf16.mxu0 0
    %4260 = vmatpush1.bf16.msra.mxu0 %v4229
    %4261 = vmatprep.subr.bf16.mxu0 0
    %4262 = vmatpush2.bf16.msra.mxu0 0
    %4263 = vmatprep.subr.bf16.mxu0 0
    %4264 = vmatpush2.bf16.msra.mxu0 0
    %4265 = vmatprep.subr.bf16.mxu0 0
    %4266 = vmatpush2.bf16.msra.mxu0 0
    %4267 = vmatprep.subr.bf16.mxu0 0
    %4268 = vmatpush2.bf16.msra.mxu0 0
    %4269 = vmatprep.subr.bf16.mxu0 0
    %4270 = vmatpush2.bf16.msra.mxu0 0
    %4271 = vmatprep.subr.bf16.mxu0 0
    %4272 = vmatpush2.bf16.msra.mxu0 0
    %4273 = vmatprep.subr.bf16.mxu0 0
    %4274 = vmatpush2.bf16.msra.mxu0 0
    %4275 = vmatprep.subr.bf16.mxu0 0
    %4276 = vmatpush2.bf16.msra.mxu0 0
    %4277 = vmatprep.mubr.bf16.mxu0 0
    %4278 = vmatmul.mubr.bf16.gmra.mxu0 %v4234
    %v4279 = vpop.f32.mrf.mxu0
    %v4280 = vadd.f32 0.0, %v4279
    %v4281 = vpop.f32.mrf.mxu0
    %v4282 = vpop.f32.mrf.mxu0
    %v4283 = vadd.f32 0.0, %v4282
    %v4284 = vpop.f32.mrf.mxu0
    %4285 = vmatprep.mubr.bf16.mxu0 0
    %4286 = vmatmul.mubr.bf16.gmra.mxu0 %v4237
    %v4287 = vpop.f32.mrf.mxu0
    %v4288 = vadd.f32 0.0, %v4287
    %v4289 = vpop.f32.mrf.mxu0
    %v4290 = vpop.f32.mrf.mxu0
    %v4291 = vadd.f32 0.0, %v4290
    %v4292 = vpop.f32.mrf.mxu0
    %4293 = vmatprep.mubr.bf16.mxu0 0
    %4294 = vmatmul.mubr.bf16.gmra.mxu0 %v4240
    %v4295 = vpop.f32.mrf.mxu0
    %v4296 = vadd.f32 0.0, %v4295
    %v4297 = vpop.f32.mrf.mxu0
    %v4298 = vpop.f32.mrf.mxu0
    %v4299 = vadd.f32 0.0, %v4298
    %v4300 = vpop.f32.mrf.mxu0
    %4301 = vmatprep.mubr.bf16.mxu0 0
    %4302 = vmatmul.mubr.bf16.gmra.mxu0 %v4243
    %v4303 = vpop.f32.mrf.mxu0
    %v4304 = vadd.f32 0.0, %v4303
    %v4305 = vpop.f32.mrf.mxu0
    %v4306 = vpop.f32.mrf.mxu0
    %v4307 = vadd.f32 0.0, %v4306
    %v4308 = vpop.f32.mrf.mxu0
    %4309 = vdwg.mxu0
    %v4310 = vadd.f32 %v3325, %v4280
    %v4311 = vadd.f32 %v3326, %v4283
    %v4312 = vadd.f32 %v3327, %v4288
    %v4313 = vadd.f32 %v3328, %v4291
    %v4314 = vadd.f32 %v3329, %v4296
    %v4315 = vadd.f32 %v3330, %v4299
    %v4316 = vadd.f32 %v3331, %v4304
    %v4317 = vadd.f32 %v3332, %v4307
    %v4318 = vld [vmem:[#allocation6 + $0x5] sm:$0x1]
    %v4320 = vlaneseq
    %v4321 = vshrl.u32 %v4320, 7
    %v4322 = vsub.s32 0, %v4321
    %v4323 = vrot.slane %v4318, %v4322
    %v4325 = vadd.f32 %v4310, %v4323
    %v4326 = vadd.f32 %v4311, %v4323
    %v4327 = vadd.f32 %v4312, %v4323
    %v4328 = vadd.f32 %v4313, %v4323
    %v4329 = vadd.f32 %v4314, %v4323
    %v4330 = vadd.f32 %v4315, %v4323
    %v4331 = vadd.f32 %v4316, %v4323
    %v4332 = vadd.f32 %v4317, %v4323
    %v4333 = vadd.f32 %v60, %v4325
    %v4334 = vadd.f32 %v61, %v4326
    %v4335 = vadd.f32 %v62, %v4327
    %v4336 = vadd.f32 %v63, %v4328
    %v4337 = vadd.f32 %v64, %v4329
    %v4338 = vadd.f32 %v65, %v4330
    %v4339 = vadd.f32 %v66, %v4331
    %v4340 = vadd.f32 %v67, %v4332
    %v4341 = vld [vmem:[#allocation6 + $0x6] sm:$0x1]
    %v4342 = vld [vmem:[#allocation6 + $0x7] sm:$0x1]
    %4343 = vadd.xlane.f32.xlu0 %v4333
    %v4344 = vpop.xlane.xlu0 %4343
    %4345 = vadd.xlane.f32.xlu0 %v4334
    %v4346 = vpop.xlane.xlu0 %4345
    %4347 = vadd.xlane.f32.xlu0 %v4335
    %v4348 = vpop.xlane.xlu0 %4347
    %4349 = vadd.xlane.f32.xlu0 %v4336
    %v4350 = vpop.xlane.xlu0 %4349
    %4351 = vadd.xlane.f32.xlu0 %v4337
    %v4352 = vpop.xlane.xlu0 %4351
    %4353 = vadd.xlane.f32.xlu0 %v4338
    %v4354 = vpop.xlane.xlu0 %4353
    %4355 = vadd.xlane.f32.xlu0 %v4339
    %v4356 = vpop.xlane.xlu0 %4355
    %4357 = vadd.xlane.f32.xlu0 %v4340
    %v4358 = vpop.xlane.xlu0 %4357
    %v4359 = vrcp.pop 128.0
    %v4360 = vmul.f32 %v4344, %v4359
    %v4361 = vmul.f32 %v4346, %v4359
    %v4362 = vmul.f32 %v4348, %v4359
    %v4363 = vmul.f32 %v4350, %v4359
    %v4364 = vmul.f32 %v4352, %v4359
    %v4365 = vmul.f32 %v4354, %v4359
    %v4366 = vmul.f32 %v4356, %v4359
    %v4367 = vmul.f32 %v4358, %v4359
    %v4368 = vsub.f32 %v4333, %v4360
    %v4369 = vsub.f32 %v4334, %v4361
    %v4370 = vsub.f32 %v4335, %v4362
    %v4371 = vsub.f32 %v4336, %v4363
    %v4372 = vsub.f32 %v4337, %v4364
    %v4373 = vsub.f32 %v4338, %v4365
    %v4374 = vsub.f32 %v4339, %v4366
    %v4375 = vsub.f32 %v4340, %v4367
    %v4376 = vmul.f32 %v4368, %v4368
    %v4377 = vmul.f32 %v4369, %v4369
    %v4378 = vmul.f32 %v4370, %v4370
    %v4379 = vmul.f32 %v4371, %v4371
    %v4380 = vmul.f32 %v4372, %v4372
    %v4381 = vmul.f32 %v4373, %v4373
    %v4382 = vmul.f32 %v4374, %v4374
    %v4383 = vmul.f32 %v4375, %v4375
    %4384 = vadd.xlane.f32.xlu0 %v4376
    %v4385 = vpop.xlane.xlu0 %4384
    %4386 = vadd.xlane.f32.xlu0 %v4377
    %v4387 = vpop.xlane.xlu0 %4386
    %4388 = vadd.xlane.f32.xlu0 %v4378
    %v4389 = vpop.xlane.xlu0 %4388
    %4390 = vadd.xlane.f32.xlu0 %v4379
    %v4391 = vpop.xlane.xlu0 %4390
    %4392 = vadd.xlane.f32.xlu0 %v4380
    %v4393 = vpop.xlane.xlu0 %4392
    %4394 = vadd.xlane.f32.xlu0 %v4381
    %v4395 = vpop.xlane.xlu0 %4394
    %4396 = vadd.xlane.f32.xlu0 %v4382
    %v4397 = vpop.xlane.xlu0 %4396
    %4398 = vadd.xlane.f32.xlu0 %v4383
    %v4399 = vpop.xlane.xlu0 %4398
    %v4400 = vmul.f32 %v4385, %v4359
    %v4401 = vmul.f32 %v4387, %v4359
    %v4402 = vmul.f32 %v4389, %v4359
    %v4403 = vmul.f32 %v4391, %v4359
    %v4404 = vmul.f32 %v4393, %v4359
    %v4405 = vmul.f32 %v4395, %v4359
    %v4406 = vmul.f32 %v4397, %v4359
    %v4407 = vmul.f32 %v4399, %v4359
    %v4408 = vadd.f32 %v4400, 1e-05
    %v4409 = vadd.f32 %v4401, 1e-05
    %v4410 = vadd.f32 %v4402, 1e-05
    %v4411 = vadd.f32 %v4403, 1e-05
    %v4412 = vadd.f32 %v4404, 1e-05
    %v4413 = vadd.f32 %v4405, 1e-05
    %v4414 = vadd.f32 %v4406, 1e-05
    %v4415 = vadd.f32 %v4407, 1e-05
    %v4416 = vrsqrt.pop %v4408
    %v4417 = vrsqrt.pop %v4409
    %v4418 = vrsqrt.pop %v4410
    %v4419 = vrsqrt.pop %v4411
    %v4420 = vrsqrt.pop %v4412
    %v4421 = vrsqrt.pop %v4413
    %v4422 = vrsqrt.pop %v4414
    %v4423 = vrsqrt.pop %v4415
    %v4424 = vmul.f32 %v4368, %v4416
    %v4425 = vmul.f32 %v4369, %v4417
    %v4426 = vmul.f32 %v4370, %v4418
    %v4427 = vmul.f32 %v4371, %v4419
    %v4428 = vmul.f32 %v4372, %v4420
    %v4429 = vmul.f32 %v4373, %v4421
    %v4430 = vmul.f32 %v4374, %v4422
    %v4431 = vmul.f32 %v4375, %v4423
    %v4433 = vlaneseq
    %v4434 = vshrl.u32 %v4433, 7
    %v4435 = vsub.s32 0, %v4434
    %v4436 = vrot.slane %v4341, %v4435
    %v4438 = vmul.f32 %v4424, %v4436
    %v4439 = vmul.f32 %v4425, %v4436
    %v4440 = vmul.f32 %v4426, %v4436
    %v4441 = vmul.f32 %v4427, %v4436
    %v4442 = vmul.f32 %v4428, %v4436
    %v4443 = vmul.f32 %v4429, %v4436
    %v4444 = vmul.f32 %v4430, %v4436
    %v4445 = vmul.f32 %v4431, %v4436
    %v4447 = vlaneseq
    %v4448 = vshrl.u32 %v4447, 7
    %v4449 = vsub.s32 0, %v4448
    %v4450 = vrot.slane %v4342, %v4449
    %v4452 = vadd.f32 %v4438, %v4450
    %v4453 = vadd.f32 %v4439, %v4450
    %v4454 = vadd.f32 %v4440, %v4450
    %v4455 = vadd.f32 %v4441, %v4450
    %v4456 = vadd.f32 %v4442, %v4450
    %v4457 = vadd.f32 %v4443, %v4450
    %v4458 = vadd.f32 %v4444, %v4450
    %v4459 = vadd.f32 %v4445, %v4450
    %v4460 = vpack.c.bf16 %v4453, %v4452
    %v4461 = vpack.c.bf16 %v4455, %v4454
    %v4462 = vpack.c.bf16 %v4457, %v4456
    %v4463 = vpack.c.bf16 %v4459, %v4458
    %v4464 = vld [vmem:[#allocation2 + $0x10] sm:$0xff]
    %v4465 = vld [vmem:[#allocation2 + $0x28] sm:$0xff]
    %v4466 = vld [vmem:[#allocation2 + $0x40] sm:$0xff]
    %v4467 = vld [vmem:[#allocation2 + $0x58] sm:$0xff]
    %v4468 = vld [vmem:[#allocation2 + $0x70] sm:$0xff]
    %v4469 = vld [vmem:[#allocation2 + $0x88] sm:$0xff]
    %v4470 = vld [vmem:[#allocation2 + $0xa0] sm:$0xff]
    %v4471 = vld [vmem:[#allocation2 + $0xb8] sm:$0xff]
    %v4472 = vld [vmem:[#allocation2 + $0xd0] sm:$0xff]
    %v4473 = vld [vmem:[#allocation2 + $0xe8] sm:$0xff]
    %v4474 = vld [vmem:[#allocation2 + $0x100] sm:$0xff]
    %v4475 = vld [vmem:[#allocation2 + $0x118] sm:$0xff]
    %v4476 = vld [vmem:[#allocation2 + $0x130] sm:$0xff]
    %v4477 = vld [vmem:[#allocation2 + $0x148] sm:$0xff]
    %v4478 = vld [vmem:[#allocation2 + $0x160] sm:$0xff]
    %v4479 = vld [vmem:[#allocation2 + $0x178] sm:$0xff]
    %v4480 = vld [vmem:[#allocation6 + $0x3] sm:$0x3]
    %v4482 = vlaneseq
    %v4483 = vshrl.u32 %v4482, 7
    %v4484 = vsub.s32 0, %v4483
    %v4485 = vrot.slane %v4480, %v4484
    %v4486 = vlaneseq
    %v4487 = vshrl.u32 %v4486, 7
    %v4488 = vsub.s32 1, %v4487
    %v4489 = vrot.slane %v4480, %v4488
    %v4508 = vunpack.c.l.b16 %v4464
    %v4509 = vunpack.c.h.b16 %v4464
    %v4510 = vunpack.c.l.b16 %v4465
    %v4511 = vunpack.c.h.b16 %v4465
    %v4512 = vunpack.c.l.b16 %v4466
    %v4513 = vunpack.c.h.b16 %v4466
    %v4514 = vunpack.c.l.b16 %v4467
    %v4515 = vunpack.c.h.b16 %v4467
    %v4516 = vunpack.c.l.b16 %v4468
    %v4517 = vunpack.c.h.b16 %v4468
    %v4518 = vunpack.c.l.b16 %v4469
    %v4519 = vunpack.c.h.b16 %v4469
    %v4520 = vunpack.c.l.b16 %v4470
    %v4521 = vunpack.c.h.b16 %v4470
    %v4522 = vunpack.c.l.b16 %v4471
    %v4523 = vunpack.c.h.b16 %v4471
    %v4524 = vunpack.c.l.b16 %v4472
    %v4525 = vunpack.c.h.b16 %v4472
    %v4526 = vunpack.c.l.b16 %v4473
    %v4527 = vunpack.c.h.b16 %v4473
    %v4528 = vunpack.c.l.b16 %v4474
    %v4529 = vunpack.c.h.b16 %v4474
    %v4530 = vunpack.c.l.b16 %v4475
    %v4531 = vunpack.c.h.b16 %v4475
    %v4532 = vunpack.c.l.b16 %v4476
    %v4533 = vunpack.c.h.b16 %v4476
    %v4534 = vunpack.c.l.b16 %v4477
    %v4535 = vunpack.c.h.b16 %v4477
    %v4536 = vunpack.c.l.b16 %v4478
    %v4537 = vunpack.c.h.b16 %v4478
    %v4538 = vunpack.c.l.b16 %v4479
    %v4539 = vunpack.c.h.b16 %v4479
    %v4540 = vpack.c.b16 %v4510, %v4508
    %v4541 = vpack.c.b16 %v4511, %v4509
    %v4542 = vpack.c.b16 %v4514, %v4512
    %v4543 = vpack.c.b16 %v4515, %v4513
    %v4544 = vpack.c.b16 %v4518, %v4516
    %v4545 = vpack.c.b16 %v4519, %v4517
    %v4546 = vpack.c.b16 %v4522, %v4520
    %v4547 = vpack.c.b16 %v4523, %v4521
    %v4548 = vpack.c.b16 %v4526, %v4524
    %v4549 = vpack.c.b16 %v4527, %v4525
    %v4550 = vpack.c.b16 %v4530, %v4528
    %v4551 = vpack.c.b16 %v4531, %v4529
    %v4552 = vpack.c.b16 %v4534, %v4532
    %v4553 = vpack.c.b16 %v4535, %v4533
    %v4554 = vpack.c.b16 %v4538, %v4536
    %v4555 = vpack.c.b16 %v4539, %v4537
    %4572 = vmatprep.subr.bf16.mxu0 %v4555
    %4573 = vmatpush1.bf16.msra.mxu0 %v4554
    %4574 = vmatprep.subr.bf16.mxu0 %v4553
    %4575 = vmatpush1.bf16.msra.mxu0 %v4552
    %4576 = vmatprep.subr.bf16.mxu0 %v4551
    %4577 = vmatpush1.bf16.msra.mxu0 %v4550
    %4578 = vmatprep.subr.bf16.mxu0 %v4549
    %4579 = vmatpush1.bf16.msra.mxu0 %v4548
    %4580 = vmatprep.subr.bf16.mxu0 %v4547
    %4581 = vmatpush1.bf16.msra.mxu0 %v4546
    %4582 = vmatprep.subr.bf16.mxu0 %v4545
    %4583 = vmatpush1.bf16.msra.mxu0 %v4544
    %4584 = vmatprep.subr.bf16.mxu0 %v4543
    %4585 = vmatpush1.bf16.msra.mxu0 %v4542
    %4586 = vmatprep.subr.bf16.mxu0 %v4541
    %4587 = vmatpush1.bf16.msra.mxu0 %v4540
    %4588 = vmatprep.subr.bf16.mxu0 0
    %4589 = vmatpush2.bf16.msra.mxu0 0
    %4590 = vmatprep.subr.bf16.mxu0 0
    %4591 = vmatpush2.bf16.msra.mxu0 0
    %4592 = vmatprep.subr.bf16.mxu0 0
    %4593 = vmatpush2.bf16.msra.mxu0 0
    %4594 = vmatprep.subr.bf16.mxu0 0
    %4595 = vmatpush2.bf16.msra.mxu0 0
    %4596 = vmatprep.subr.bf16.mxu0 0
    %4597 = vmatpush2.bf16.msra.mxu0 0
    %4598 = vmatprep.subr.bf16.mxu0 0
    %4599 = vmatpush2.bf16.msra.mxu0 0
    %4600 = vmatprep.subr.bf16.mxu0 0
    %4601 = vmatpush2.bf16.msra.mxu0 0
    %4602 = vmatprep.subr.bf16.mxu0 0
    %4603 = vmatpush2.bf16.msra.mxu0 0
    %4604 = vmatprep.mubr.bf16.mxu0 0
    %4605 = vmatmul.mubr.bf16.gmra.mxu0 %v4460
    %v4606 = vpop.f32.mrf.mxu0
    %v4607 = vadd.f32 %v4485, %v4606
    %v4608 = vpop.f32.mrf.mxu0
    %v4609 = vadd.f32 %v4489, %v4608
    %v4610 = vpop.f32.mrf.mxu0
    %v4611 = vadd.f32 %v4485, %v4610
    %v4612 = vpop.f32.mrf.mxu0
    %v4613 = vadd.f32 %v4489, %v4612
    %4614 = vmatprep.mubr.bf16.mxu0 0
    %4615 = vmatmul.mubr.bf16.gmra.mxu0 %v4461
    %v4616 = vpop.f32.mrf.mxu0
    %v4617 = vadd.f32 %v4485, %v4616
    %v4618 = vpop.f32.mrf.mxu0
    %v4619 = vadd.f32 %v4489, %v4618
    %v4620 = vpop.f32.mrf.mxu0
    %v4621 = vadd.f32 %v4485, %v4620
    %v4622 = vpop.f32.mrf.mxu0
    %v4623 = vadd.f32 %v4489, %v4622
    %4624 = vmatprep.mubr.bf16.mxu0 0
    %4625 = vmatmul.mubr.bf16.gmra.mxu0 %v4462
    %v4626 = vpop.f32.mrf.mxu0
    %v4627 = vadd.f32 %v4485, %v4626
    %v4628 = vpop.f32.mrf.mxu0
    %v4629 = vadd.f32 %v4489, %v4628
    %v4630 = vpop.f32.mrf.mxu0
    %v4631 = vadd.f32 %v4485, %v4630
    %v4632 = vpop.f32.mrf.mxu0
    %v4633 = vadd.f32 %v4489, %v4632
    %4634 = vmatprep.mubr.bf16.mxu0 0
    %4635 = vmatmul.mubr.bf16.gmra.mxu0 %v4463
    %v4636 = vpop.f32.mrf.mxu0
    %v4637 = vadd.f32 %v4485, %v4636
    %v4638 = vpop.f32.mrf.mxu0
    %v4639 = vadd.f32 %v4489, %v4638
    %v4640 = vpop.f32.mrf.mxu0
    %v4641 = vadd.f32 %v4485, %v4640
    %v4642 = vpop.f32.mrf.mxu0
    %v4643 = vadd.f32 %v4489, %v4642
    %4644 = vdwg.mxu0
    %v4645 = vmax.f32 %v4607, 0.0
    %v4646 = vmax.f32 %v4609, 0.0
    %v4647 = vmax.f32 %v4611, 0.0
    %v4648 = vmax.f32 %v4613, 0.0
    %v4649 = vmax.f32 %v4617, 0.0
    %v4650 = vmax.f32 %v4619, 0.0
    %v4651 = vmax.f32 %v4621, 0.0
    %v4652 = vmax.f32 %v4623, 0.0
    %v4653 = vmax.f32 %v4627, 0.0
    %v4654 = vmax.f32 %v4629, 0.0
    %v4655 = vmax.f32 %v4631, 0.0
    %v4656 = vmax.f32 %v4633, 0.0
    %v4657 = vmax.f32 %v4637, 0.0
    %v4658 = vmax.f32 %v4639, 0.0
    %v4659 = vmax.f32 %v4641, 0.0
    %v4660 = vmax.f32 %v4643, 0.0
    %v4661 = vpack.c.bf16 %v4647, %v4645
    %v4662 = vpack.c.bf16 %v4648, %v4646
    %v4663 = vpack.c.bf16 %v4651, %v4649
    %v4664 = vpack.c.bf16 %v4652, %v4650
    %v4665 = vpack.c.bf16 %v4655, %v4653
    %v4666 = vpack.c.bf16 %v4656, %v4654
    %v4667 = vpack.c.bf16 %v4659, %v4657
    %v4668 = vpack.c.bf16 %v4660, %v4658
    %v4669 = vld [vmem:[#allocation4] sm:$0xf]
    %v4670 = vld [vmem:[#allocation4 + $0x4] sm:$0xf]
    %v4671 = vld [vmem:[#allocation4 + $0x8] sm:$0xf]
    %v4672 = vld [vmem:[#allocation4 + $0xc] sm:$0xf]
    %v4673 = vld [vmem:[#allocation4 + $0x10] sm:$0xf]
    %v4674 = vld [vmem:[#allocation4 + $0x14] sm:$0xf]
    %v4675 = vld [vmem:[#allocation4 + $0x18] sm:$0xf]
    %v4676 = vld [vmem:[#allocation4 + $0x1c] sm:$0xf]
    %v4677 = vld [vmem:[#allocation4 + $0x20] sm:$0xf]
    %v4678 = vld [vmem:[#allocation4 + $0x24] sm:$0xf]
    %v4679 = vld [vmem:[#allocation4 + $0x28] sm:$0xf]
    %v4680 = vld [vmem:[#allocation4 + $0x2c] sm:$0xf]
    %v4681 = vld [vmem:[#allocation4 + $0x30] sm:$0xf]
    %v4682 = vld [vmem:[#allocation4 + $0x34] sm:$0xf]
    %v4683 = vld [vmem:[#allocation4 + $0x38] sm:$0xf]
    %v4684 = vld [vmem:[#allocation4 + $0x3c] sm:$0xf]
    %v4685 = vld [vmem:[#allocation4 + $0x40] sm:$0xf]
    %v4686 = vld [vmem:[#allocation4 + $0x44] sm:$0xf]
    %v4687 = vld [vmem:[#allocation4 + $0x48] sm:$0xf]
    %v4688 = vld [vmem:[#allocation4 + $0x4c] sm:$0xf]
    %v4689 = vld [vmem:[#allocation4 + $0x50] sm:$0xf]
    %v4690 = vld [vmem:[#allocation4 + $0x54] sm:$0xf]
    %v4691 = vld [vmem:[#allocation4 + $0x58] sm:$0xf]
    %v4692 = vld [vmem:[#allocation4 + $0x5c] sm:$0xf]
    %v4693 = vld [vmem:[#allocation4 + $0x60] sm:$0xf]
    %v4694 = vld [vmem:[#allocation4 + $0x64] sm:$0xf]
    %v4695 = vld [vmem:[#allocation4 + $0x68] sm:$0xf]
    %v4696 = vld [vmem:[#allocation4 + $0x6c] sm:$0xf]
    %v4697 = vld [vmem:[#allocation4 + $0x70] sm:$0xf]
    %v4698 = vld [vmem:[#allocation4 + $0x74] sm:$0xf]
    %v4699 = vld [vmem:[#allocation4 + $0x78] sm:$0xf]
    %v4700 = vld [vmem:[#allocation4 + $0x7c] sm:$0xf]
    %v4701 = vld [vmem:[#allocation6 + $0x8] sm:$0x1]
    %v4703 = vlaneseq
    %v4704 = vshrl.u32 %v4703, 7
    %v4705 = vsub.s32 0, %v4704
    %v4706 = vrot.slane %v4701, %v4705
    %v4740 = vunpack.c.l.b16 %v4669
    %v4741 = vunpack.c.l.b16 %v4670
    %v4742 = vunpack.c.l.b16 %v4671
    %v4743 = vunpack.c.l.b16 %v4672
    %v4744 = vunpack.c.l.b16 %v4673
    %v4745 = vunpack.c.l.b16 %v4674
    %v4746 = vunpack.c.l.b16 %v4675
    %v4747 = vunpack.c.l.b16 %v4676
    %v4748 = vunpack.c.l.b16 %v4677
    %v4749 = vunpack.c.l.b16 %v4678
    %v4750 = vunpack.c.l.b16 %v4679
    %v4751 = vunpack.c.l.b16 %v4680
    %v4752 = vunpack.c.l.b16 %v4681
    %v4753 = vunpack.c.l.b16 %v4682
    %v4754 = vunpack.c.l.b16 %v4683
    %v4755 = vunpack.c.l.b16 %v4684
    %v4756 = vunpack.c.l.b16 %v4685
    %v4757 = vunpack.c.l.b16 %v4686
    %v4758 = vunpack.c.l.b16 %v4687
    %v4759 = vunpack.c.l.b16 %v4688
    %v4760 = vunpack.c.l.b16 %v4689
    %v4761 = vunpack.c.l.b16 %v4690
    %v4762 = vunpack.c.l.b16 %v4691
    %v4763 = vunpack.c.l.b16 %v4692
    %v4764 = vunpack.c.l.b16 %v4693
    %v4765 = vunpack.c.l.b16 %v4694
    %v4766 = vunpack.c.l.b16 %v4695
    %v4767 = vunpack.c.l.b16 %v4696
    %v4768 = vunpack.c.l.b16 %v4697
    %v4769 = vunpack.c.l.b16 %v4698
    %v4770 = vunpack.c.l.b16 %v4699
    %v4771 = vunpack.c.l.b16 %v4700
    %v4772 = vpack.c.b16 %v4741, %v4740
    %v4773 = vpack.c.b16 %v4743, %v4742
    %v4774 = vpack.c.b16 %v4745, %v4744
    %v4775 = vpack.c.b16 %v4747, %v4746
    %v4776 = vpack.c.b16 %v4749, %v4748
    %v4777 = vpack.c.b16 %v4751, %v4750
    %v4778 = vpack.c.b16 %v4753, %v4752
    %v4779 = vpack.c.b16 %v4755, %v4754
    %v4780 = vpack.c.b16 %v4757, %v4756
    %v4781 = vpack.c.b16 %v4759, %v4758
    %v4782 = vpack.c.b16 %v4761, %v4760
    %v4783 = vpack.c.b16 %v4763, %v4762
    %v4784 = vpack.c.b16 %v4765, %v4764
    %v4785 = vpack.c.b16 %v4767, %v4766
    %v4786 = vpack.c.b16 %v4769, %v4768
    %v4787 = vpack.c.b16 %v4771, %v4770
    %4804 = vmatprep.subr.bf16.mxu0 0
    %4805 = vmatpush1.bf16.msra.mxu0 %v4779
    %4806 = vmatprep.subr.bf16.mxu0 0
    %4807 = vmatpush1.bf16.msra.mxu0 %v4778
    %4808 = vmatprep.subr.bf16.mxu0 0
    %4809 = vmatpush1.bf16.msra.mxu0 %v4777
    %4810 = vmatprep.subr.bf16.mxu0 0
    %4811 = vmatpush1.bf16.msra.mxu0 %v4776
    %4812 = vmatprep.subr.bf16.mxu0 0
    %4813 = vmatpush1.bf16.msra.mxu0 %v4775
    %4814 = vmatprep.subr.bf16.mxu0 0
    %4815 = vmatpush1.bf16.msra.mxu0 %v4774
    %4816 = vmatprep.subr.bf16.mxu0 0
    %4817 = vmatpush1.bf16.msra.mxu0 %v4773
    %4818 = vmatprep.subr.bf16.mxu0 0
    %4819 = vmatpush1.bf16.msra.mxu0 %v4772
    %4820 = vmatprep.subr.bf16.mxu0 0
    %4821 = vmatpush2.bf16.msra.mxu0 %v4787
    %4822 = vmatprep.subr.bf16.mxu0 0
    %4823 = vmatpush2.bf16.msra.mxu0 %v4786
    %4824 = vmatprep.subr.bf16.mxu0 0
    %4825 = vmatpush2.bf16.msra.mxu0 %v4785
    %4826 = vmatprep.subr.bf16.mxu0 0
    %4827 = vmatpush2.bf16.msra.mxu0 %v4784
    %4828 = vmatprep.subr.bf16.mxu0 0
    %4829 = vmatpush2.bf16.msra.mxu0 %v4783
    %4830 = vmatprep.subr.bf16.mxu0 0
    %4831 = vmatpush2.bf16.msra.mxu0 %v4782
    %4832 = vmatprep.subr.bf16.mxu0 0
    %4833 = vmatpush2.bf16.msra.mxu0 %v4781
    %4834 = vmatprep.subr.bf16.mxu0 0
    %4835 = vmatpush2.bf16.msra.mxu0 %v4780
    %4836 = vmatprep.mubr.bf16.mxu0 %v4662
    %4837 = vmatmul.mubr.bf16.gmra.mxu0 %v4661
    %v4838 = vpop.f32.mrf.mxu0
    %v4839 = vadd.f32 %v4706, %v4838
    %v4840 = vpop.f32.mrf.mxu0
    %v4841 = vpop.f32.mrf.mxu0
    %v4842 = vadd.f32 %v4706, %v4841
    %v4843 = vpop.f32.mrf.mxu0
    %4844 = vmatprep.mubr.bf16.mxu0 %v4664
    %4845 = vmatmul.mubr.bf16.gmra.mxu0 %v4663
    %v4846 = vpop.f32.mrf.mxu0
    %v4847 = vadd.f32 %v4706, %v4846
    %v4848 = vpop.f32.mrf.mxu0
    %v4849 = vpop.f32.mrf.mxu0
    %v4850 = vadd.f32 %v4706, %v4849
    %v4851 = vpop.f32.mrf.mxu0
    %4852 = vmatprep.mubr.bf16.mxu0 %v4666
    %4853 = vmatmul.mubr.bf16.gmra.mxu0 %v4665
    %v4854 = vpop.f32.mrf.mxu0
    %v4855 = vadd.f32 %v4706, %v4854
    %v4856 = vpop.f32.mrf.mxu0
    %v4857 = vpop.f32.mrf.mxu0
    %v4858 = vadd.f32 %v4706, %v4857
    %v4859 = vpop.f32.mrf.mxu0
    %4860 = vmatprep.mubr.bf16.mxu0 %v4668
    %4861 = vmatmul.mubr.bf16.gmra.mxu0 %v4667
    %v4862 = vpop.f32.mrf.mxu0
    %v4863 = vadd.f32 %v4706, %v4862
    %v4864 = vpop.f32.mrf.mxu0
    %v4865 = vpop.f32.mrf.mxu0
    %v4866 = vadd.f32 %v4706, %v4865
    %v4867 = vpop.f32.mrf.mxu0
    %4868 = vdwg.mxu0
    %v4869 = vadd.f32 %v4452, %v4839
    %v4870 = vadd.f32 %v4453, %v4842
    %v4871 = vadd.f32 %v4454, %v4847
    %v4872 = vadd.f32 %v4455, %v4850
    %v4873 = vadd.f32 %v4456, %v4855
    %v4874 = vadd.f32 %v4457, %v4858
    %v4875 = vadd.f32 %v4458, %v4863
    %v4876 = vadd.f32 %v4459, %v4866
    %v4877 = vld [vmem:[#allocation6 + $0x9] sm:$0x1]
    %v4878 = vld [vmem:[#allocation6 + $0xa] sm:$0x1]
    %4879 = vadd.xlane.f32.xlu0 %v4869
    %v4880 = vpop.xlane.xlu0 %4879
    %4881 = vadd.xlane.f32.xlu0 %v4870
    %v4882 = vpop.xlane.xlu0 %4881
    %4883 = vadd.xlane.f32.xlu0 %v4871
    %v4884 = vpop.xlane.xlu0 %4883
    %4885 = vadd.xlane.f32.xlu0 %v4872
    %v4886 = vpop.xlane.xlu0 %4885
    %4887 = vadd.xlane.f32.xlu0 %v4873
    %v4888 = vpop.xlane.xlu0 %4887
    %4889 = vadd.xlane.f32.xlu0 %v4874
    %v4890 = vpop.xlane.xlu0 %4889
    %4891 = vadd.xlane.f32.xlu0 %v4875
    %v4892 = vpop.xlane.xlu0 %4891
    %4893 = vadd.xlane.f32.xlu0 %v4876
    %v4894 = vpop.xlane.xlu0 %4893
    %v4895 = vmul.f32 %v4880, %v4359
    %v4896 = vmul.f32 %v4882, %v4359
    %v4897 = vmul.f32 %v4884, %v4359
    %v4898 = vmul.f32 %v4886, %v4359
    %v4899 = vmul.f32 %v4888, %v4359
    %v4900 = vmul.f32 %v4890, %v4359
    %v4901 = vmul.f32 %v4892, %v4359
    %v4902 = vmul.f32 %v4894, %v4359
    %v4903 = vsub.f32 %v4869, %v4895
    %v4904 = vsub.f32 %v4870, %v4896
    %v4905 = vsub.f32 %v4871, %v4897
    %v4906 = vsub.f32 %v4872, %v4898
    %v4907 = vsub.f32 %v4873, %v4899
    %v4908 = vsub.f32 %v4874, %v4900
    %v4909 = vsub.f32 %v4875, %v4901
    %v4910 = vsub.f32 %v4876, %v4902
    %v4911 = vmul.f32 %v4903, %v4903
    %v4912 = vmul.f32 %v4904, %v4904
    %v4913 = vmul.f32 %v4905, %v4905
    %v4914 = vmul.f32 %v4906, %v4906
    %v4915 = vmul.f32 %v4907, %v4907
    %v4916 = vmul.f32 %v4908, %v4908
    %v4917 = vmul.f32 %v4909, %v4909
    %v4918 = vmul.f32 %v4910, %v4910
    %4919 = vadd.xlane.f32.xlu0 %v4911
    %v4920 = vpop.xlane.xlu0 %4919
    %4921 = vadd.xlane.f32.xlu0 %v4912
    %v4922 = vpop.xlane.xlu0 %4921
    %4923 = vadd.xlane.f32.xlu0 %v4913
    %v4924 = vpop.xlane.xlu0 %4923
    %4925 = vadd.xlane.f32.xlu0 %v4914
    %v4926 = vpop.xlane.xlu0 %4925
    %4927 = vadd.xlane.f32.xlu0 %v4915
    %v4928 = vpop.xlane.xlu0 %4927
    %4929 = vadd.xlane.f32.xlu0 %v4916
    %v4930 = vpop.xlane.xlu0 %4929
    %4931 = vadd.xlane.f32.xlu0 %v4917
    %v4932 = vpop.xlane.xlu0 %4931
    %4933 = vadd.xlane.f32.xlu0 %v4918
    %v4934 = vpop.xlane.xlu0 %4933
    %v4935 = vmul.f32 %v4920, %v4359
    %v4936 = vmul.f32 %v4922, %v4359
    %v4937 = vmul.f32 %v4924, %v4359
    %v4938 = vmul.f32 %v4926, %v4359
    %v4939 = vmul.f32 %v4928, %v4359
    %v4940 = vmul.f32 %v4930, %v4359
    %v4941 = vmul.f32 %v4932, %v4359
    %v4942 = vmul.f32 %v4934, %v4359
    %v4943 = vadd.f32 %v4935, 1e-05
    %v4944 = vadd.f32 %v4936, 1e-05
    %v4945 = vadd.f32 %v4937, 1e-05
    %v4946 = vadd.f32 %v4938, 1e-05
    %v4947 = vadd.f32 %v4939, 1e-05
    %v4948 = vadd.f32 %v4940, 1e-05
    %v4949 = vadd.f32 %v4941, 1e-05
    %v4950 = vadd.f32 %v4942, 1e-05
    %v4951 = vrsqrt.pop %v4943
    %v4952 = vrsqrt.pop %v4944
    %v4953 = vrsqrt.pop %v4945
    %v4954 = vrsqrt.pop %v4946
    %v4955 = vrsqrt.pop %v4947
    %v4956 = vrsqrt.pop %v4948
    %v4957 = vrsqrt.pop %v4949
    %v4958 = vrsqrt.pop %v4950
    %v4959 = vmul.f32 %v4903, %v4951
    %v4960 = vmul.f32 %v4904, %v4952
    %v4961 = vmul.f32 %v4905, %v4953
    %v4962 = vmul.f32 %v4906, %v4954
    %v4963 = vmul.f32 %v4907, %v4955
    %v4964 = vmul.f32 %v4908, %v4956
    %v4965 = vmul.f32 %v4909, %v4957
    %v4966 = vmul.f32 %v4910, %v4958
    %v4968 = vlaneseq
    %v4969 = vshrl.u32 %v4968, 7
    %v4970 = vsub.s32 0, %v4969
    %v4971 = vrot.slane %v4877, %v4970
    %v4973 = vmul.f32 %v4959, %v4971
    %v4974 = vmul.f32 %v4960, %v4971
    %v4975 = vmul.f32 %v4961, %v4971
    %v4976 = vmul.f32 %v4962, %v4971
    %v4977 = vmul.f32 %v4963, %v4971
    %v4978 = vmul.f32 %v4964, %v4971
    %v4979 = vmul.f32 %v4965, %v4971
    %v4980 = vmul.f32 %v4966, %v4971
    %v4982 = vlaneseq
    %v4983 = vshrl.u32 %v4982, 7
    %v4984 = vsub.s32 0, %v4983
    %v4985 = vrot.slane %v4878, %v4984
    %v4987 = vadd.f32 %v4973, %v4985
    %v4988 = vadd.f32 %v4974, %v4985
    %v4989 = vadd.f32 %v4975, %v4985
    %v4990 = vadd.f32 %v4976, %v4985
    %v4991 = vadd.f32 %v4977, %v4985
    %v4992 = vadd.f32 %v4978, %v4985
    %v4993 = vadd.f32 %v4979, %v4985
    %v4994 = vadd.f32 %v4980, %v4985
    %v4995 = vld [vmem:[#allocation6 + $0xb] sm:$0x1]
    %v4997 = vlaneseq
    %v4998 = vshrl.u32 %v4997, 7
    %v4999 = vsub.s32 0, %v4998
    %v5000 = vrot.slane %v4995, %v4999
    %v5002 = vmul.f32 %v4987, %v5000
    %v5003 = vmul.f32 %v4988, %v5000
    %v5004 = vmul.f32 %v4989, %v5000
    %v5005 = vmul.f32 %v4990, %v5000
    %v5006 = vmul.f32 %v4991, %v5000
    %v5007 = vmul.f32 %v4992, %v5000
    %v5008 = vmul.f32 %v4993, %v5000
    %v5009 = vmul.f32 %v4994, %v5000
    %5010 = vadd.xlane.f32.xlu0 %v5002
    %v5011 = vpop.xlane.xlu0 %5010
    %5012 = vadd.xlane.f32.xlu0 %v5003
    %v5013 = vpop.xlane.xlu0 %5012
    %5014 = vadd.xlane.f32.xlu0 %v5004
    %v5015 = vpop.xlane.xlu0 %5014
    %5016 = vadd.xlane.f32.xlu0 %v5005
    %v5017 = vpop.xlane.xlu0 %5016
    %5018 = vadd.xlane.f32.xlu0 %v5006
    %v5019 = vpop.xlane.xlu0 %5018
    %5020 = vadd.xlane.f32.xlu0 %v5007
    %v5021 = vpop.xlane.xlu0 %5020
    %5022 = vadd.xlane.f32.xlu0 %v5008
    %v5023 = vpop.xlane.xlu0 %5022
    %5024 = vadd.xlane.f32.xlu0 %v5009
    %v5025 = vpop.xlane.xlu0 %5024
    %v5026 = vld [vmem:[%s1] sm:$0x1]
    %v5027 = vld [vmem:[%s1 + $0x1] sm:$0x1]
    %v5028 = vld [vmem:[%s1 + $0x2] sm:$0x1]
    %v5029 = vld [vmem:[%s1 + $0x3] sm:$0x1]
    %v5030 = vld [vmem:[%s1 + $0x4] sm:$0x1]
    %v5031 = vld [vmem:[%s1 + $0x5] sm:$0x1]
    %v5032 = vld [vmem:[%s1 + $0x6] sm:$0x1]
    %v5033 = vld [vmem:[%s1 + $0x7] sm:$0x1]
    %v5042 = vlaneseq
    %v5043 = vshrl.u32 %v5042, 7
    %v5044 = vsub.s32 0, %v5043
    %v5045 = vrot.slane %v5026, %v5044
    %v5046 = vlaneseq
    %v5047 = vshrl.u32 %v5046, 7
    %v5048 = vsub.s32 0, %v5047
    %v5049 = vrot.slane %v5027, %v5048
    %v5050 = vlaneseq
    %v5051 = vshrl.u32 %v5050, 7
    %v5052 = vsub.s32 0, %v5051
    %v5053 = vrot.slane %v5028, %v5052
    %v5054 = vlaneseq
    %v5055 = vshrl.u32 %v5054, 7
    %v5056 = vsub.s32 0, %v5055
    %v5057 = vrot.slane %v5029, %v5056
    %v5058 = vlaneseq
    %v5059 = vshrl.u32 %v5058, 7
    %v5060 = vsub.s32 0, %v5059
    %v5061 = vrot.slane %v5030, %v5060
    %v5062 = vlaneseq
    %v5063 = vshrl.u32 %v5062, 7
    %v5064 = vsub.s32 0, %v5063
    %v5065 = vrot.slane %v5031, %v5064
    %v5066 = vlaneseq
    %v5067 = vshrl.u32 %v5066, 7
    %v5068 = vsub.s32 0, %v5067
    %v5069 = vrot.slane %v5032, %v5068
    %v5070 = vlaneseq
    %v5071 = vshrl.u32 %v5070, 7
    %v5072 = vsub.s32 0, %v5071
    %v5073 = vrot.slane %v5033, %v5072
    %v5082 = vmul.f32 %v5011, %v5045
    %v5083 = vmul.f32 %v5013, %v5049
    %v5084 = vmul.f32 %v5015, %v5053
    %v5085 = vmul.f32 %v5017, %v5057
    %v5086 = vmul.f32 %v5019, %v5061
    %v5087 = vmul.f32 %v5021, %v5065
    %v5088 = vmul.f32 %v5023, %v5069
    %v5089 = vmul.f32 %v5025, %v5073
    %vm5090 = vcmask 7168
    %v5091 = vsel %vm5090, %v5082, 0.0
    %v5092 = vsel %vm5090, %v5083, 0.0
    %v5093 = vadd.f32 %v5091, %v5092
    %v5094 = vsel %vm5090, %v5084, 0.0
    %v5095 = vadd.f32 %v5093, %v5094
    %v5096 = vsel %vm5090, %v5085, 0.0
    %v5097 = vadd.f32 %v5095, %v5096
    %v5098 = vsel %vm5090, %v5086, 0.0
    %v5099 = vadd.f32 %v5097, %v5098
    %v5100 = vsel %vm5090, %v5087, 0.0
    %v5101 = vadd.f32 %v5099, %v5100
    %v5102 = vsel %vm5090, %v5088, 0.0
    %v5103 = vadd.f32 %v5101, %v5102
    %v5104 = vsel %vm5090, %v5089, 0.0
    %v5105 = vadd.f32 %v5103, %v5104
    %5106 = vst.msk [vmem:[%s5] sm:$0xff] %vm5090, %v5105
    // Predicated region
    $region34: #{mat_att_encoder_forward.1} parent=1 // pred_check
      _
    $region35: #{mat_att_encoder_forward.1} parent=1 // pred_check_branch
      %5108 = sbr.rel (0) target = $region37
    $region36: #{mat_att_encoder_forward.1} parent=1 // pred_region
      _
    $region37: #{mat_att_encoder_forward.1} parent=1 // pred_fallthru
      _
    // Predicated region
    $region38: #{mat_att_encoder_forward.1} parent=1 // pred_check
      _
    $region39: #{mat_att_encoder_forward.1} parent=1 // pred_check_branch
      %5110 = sbr.rel (0) target = $region41
    $region40: #{mat_att_encoder_forward.1} parent=1 // pred_region
      _
    $region41: #{mat_att_encoder_forward.1} parent=1 // pred_fallthru
      _
    %5111 = vsyncpa [#allocation3], 1
    %5112 = vsyncpa [#allocation5], 1

</llo_original>
